<compile_context>
chip_gen: v7x
topology: tpu7x:2x2x1
jax: 0.10.0
libtpu: 0.0.40
codegen_flags: <defaults>
</compile_context>

<pallas_src>
import math

import jax
import jax.numpy as jnp
from jax import lax
from jax.experimental import pallas as pl
from jax.experimental.pallas import tpu as pltpu


# ----------------------------- model hyper-parameters -----------------------------
EMBEDDING_DIM = 32      # embedding_dim
ATTN_DIM = 32           # attn_dim
NUM_HEADS = 2           # num_heads
HEAD_DIM = ATTN_DIM // NUM_HEADS
N_LAYERS = 2            # n_layers
NUM_EMBEDDINGS = 64     # num_embeddings (vocab of out_proj)
SEM_ID_DIM = 4          # sem_id_dim
MAX_POS = 64            # max_pos (small for the synthetic test)
FF_DIM = 4 * ATTN_DIM   # MLP expansion

B = 2                   # batch
N = 8                   # sequence length

# ------------------ fused embedding table (wpe | sem | tte) row layout ------------------
SEM_OFFSET = MAX_POS
TTE_OFFSET = MAX_POS + NUM_EMBEDDINGS * SEM_ID_DIM
TABLE_ROWS = TTE_OFFSET + SEM_ID_DIM            # 324
TABLE_PAD = 384                                  # 3 * 128: lane-dense 3-hot matmul K dim

# ------------------------------- weight-slab row layout -------------------------------
SLAB_COLS = 128
_QKV = 0                                         # 6 blocks (q0,q1,k0,k1,v0,v1), ATTN_DIM rows each
_WO = _QKV + 3 * NUM_HEADS * ATTN_DIM            # 192
_W1 = _WO + ATTN_DIM                             # 224
_W2 = _W1 + ATTN_DIM                             # 256
_VEC = _W2 + FF_DIM                              # 384
_V_LN1W, _V_LN1B, _V_LN2W, _V_LN2B, _V_BO, _V_B2, _V_B1 = range(7)
_V_BQKV = 7                                      # 6 rows: bq0,bq1,bk0,bk1,bv0,bv1
_VEC_ROWS = 16
LAYER_ROWS = _VEC + _VEC_ROWS                    # 400
SLAB_WOUT = N_LAYERS * LAYER_ROWS                # 800
SLAB_LNF = SLAB_WOUT + ATTN_DIM                  # 832
SLAB_ROWS = ((SLAB_LNF + 2 + 7) // 8) * 8        # 840


def _layer_norm(x, w, b, eps=1e-5):
    mu = jnp.mean(x, axis=-1, keepdims=True)
    var = jnp.mean((x - mu) ** 2, axis=-1, keepdims=True)
    return (x - mu) * lax.rsqrt(var + eps) * w + b


def _decoder_kernel(idx_ref, last_ref, table_ref, slab_ref, logits_ref, h_scr, hl_scr):
    """Single-program forward; every weight is a static slice of one packed VMEM slab."""
    f32 = jnp.float32
    bn = B * N
    scale = 1.0 / math.sqrt(HEAD_DIM)

    idx3 = idx_ref[...]                               # (B, N, 4) int32
    idxf = idx3.reshape(bn, 4)                        # free leading-dim merge

    # --- fused wpe+sem+tte lookup, sum and in_proj: one 3-hot MXU matmul ---
    lane = lax.broadcasted_iota(jnp.int32, (bn, TABLE_PAD), 1)
    hot = ((lane == idxf[:, 0:1]) | (lane == idxf[:, 1:2]) | (lane == idxf[:, 2:3]))
    h = jnp.dot(hot.astype(f32), table_ref[...], preferred_element_type=f32)   # (BN, Da)

    # --- causal AND key-padding mask, shared across layers/heads ---
    key_mask = idx3[:, :, 3] > 0                      # (B, N)
    ri = lax.broadcasted_iota(jnp.int32, (N, N), 0)
    ci = lax.broadcasted_iota(jnp.int32, (N, N), 1)
    allowed = jnp.logical_and((ci <= ri)[None, :, :], key_mask[:, None, :])    # (B, N, N)

    for l in range(N_LAYERS):
        base = l * LAYER_ROWS
        vec = base + _VEC

        def vrow(i, w=ATTN_DIM):
            return slab_ref[vec + i: vec + i + 1, 0:w]          # (1, w) static slice

        a = _layer_norm(h, vrow(_V_LN1W), vrow(_V_LN1B))

        # head-major QKV: each head's q/k/v from its own (Da, hd) matmul -> no lane slices
        pv_heads = []
        for hi in range(NUM_HEADS):
            def wblk(j):
                r = base + (j * NUM_HEADS + hi) * ATTN_DIM
                return slab_ref[r: r + ATTN_DIM, 0:HEAD_DIM]    # (Da, hd)

            q = (jnp.dot(a, wblk(0), preferred_element_type=f32)
                 + vrow(_V_BQKV + 0 * NUM_HEADS + hi, HEAD_DIM)).reshape(B, N, HEAD_DIM)
            k = (jnp.dot(a, wblk(1), preferred_element_type=f32)
                 + vrow(_V_BQKV + 1 * NUM_HEADS + hi, HEAD_DIM)).reshape(B, N, HEAD_DIM)
            v = (jnp.dot(a, wblk(2), preferred_element_type=f32)
                 + vrow(_V_BQKV + 2 * NUM_HEADS + hi, HEAD_DIM)).reshape(B, N, HEAD_DIM)

            s = jnp.einsum('bqd,bkd->bqk', q, k, preferred_element_type=f32) * scale
            s = jnp.where(allowed, s, -1e9)
            m = jnp.max(s, axis=-1, keepdims=True)
            e = jnp.exp(s - m)
            # approx reciprocal uses the EUP slot; switch to exact division for tight parity.
            p = e * pl.reciprocal(jnp.sum(e, axis=-1, keepdims=True), approx=True)
            pv_heads.append(jnp.einsum('bqk,bkd->bqd', p, v, preferred_element_type=f32))

        # one lane concat + one Wo matmul (cheaper than per-head matmul + VPU accumulate)
        attn = jnp.concatenate(pv_heads, axis=-1).reshape(bn, ATTN_DIM)
        wo = slab_ref[base + _WO: base + _WO + ATTN_DIM, 0:ATTN_DIM]
        h = h + jnp.dot(attn, wo, preferred_element_type=f32) + vrow(_V_BO)

        f = _layer_norm(h, vrow(_V_LN2W), vrow(_V_LN2B))
        w1 = slab_ref[base + _W1: base + _W1 + ATTN_DIM, 0:FF_DIM]
        w2 = slab_ref[base + _W2: base + _W2 + FF_DIM, 0:ATTN_DIM]
        f = jnp.dot(f, w1, preferred_element_type=f32) + vrow(_V_B1, FF_DIM)
        # TODO(synk): PyTorch nn.GELU default is the erf form; tanh approximation used here.
        f = jax.nn.gelu(f, approximate=True)
        f = jnp.dot(f, w2, preferred_element_type=f32) + vrow(_V_B2)
        h = h + f

    # --- last-valid-token gather via SMEM scalar indices (no one-hot / sublane reduce) ---
    h_scr[...] = h
    for bi in range(B):
        pos = last_ref[bi]                            # flat row index = b*N + (len_b - 1)
        hl_scr[bi:bi + 1, :] = h_scr[pl.ds(pos, 1), :]

    hl = _layer_norm(hl_scr[...],
                     slab_ref[SLAB_LNF: SLAB_LNF + 1, 0:ATTN_DIM],
                     slab_ref[SLAB_LNF + 1: SLAB_LNF + 2, 0:ATTN_DIM])
    w_out = slab_ref[SLAB_WOUT: SLAB_WOUT + ATTN_DIM, 0:NUM_EMBEDDINGS]
    logits_ref[...] = jnp.dot(hl, w_out, preferred_element_type=f32)


# --------------------------------- parameter packing ---------------------------------
def _pad_cols(a):
    a = jnp.asarray(a, jnp.float32)
    return jnp.pad(a, ((0, 0), (0, SLAB_COLS - a.shape[1])))


def _rowvec(v):
    return _pad_cols(jnp.asarray(v, jnp.float32).reshape(1, -1))


def init_params(key):
    """Random weights in the PyTorch module's shapes, packed ONCE into kernel-ready slabs."""
    ks = jax.random.split(key, 9)
    s = 0.02
    De, Da, L, FF = EMBEDDING_DIM, ATTN_DIM, N_LAYERS, FF_DIM

    sem_table = s * jax.random.normal(ks[0], (NUM_EMBEDDINGS * SEM_ID_DIM, De), jnp.float32)
    wpe = s * jax.random.normal(ks[1], (MAX_POS, De), jnp.float32)
    tte = s * jax.random.normal(ks[2], (SEM_ID_DIM, De), jnp.float32)
    w_in = s * jax.random.normal(ks[3], (De, Da), jnp.float32)
    wqkv = s * jax.random.normal(ks[4], (L, Da, 3 * Da), jnp.float32)
    bqkv = jnp.zeros((L, 3 * Da), jnp.float32)
    wo = s * jax.random.normal(ks[5], (L, Da, Da), jnp.float32)
    bo = jnp.zeros((L, Da), jnp.float32)
    w1 = s * jax.random.normal(ks[6], (L, Da, FF), jnp.float32)
    b1 = jnp.zeros((L, FF), jnp.float32)
    w2 = s * jax.random.normal(ks[7], (L, FF, Da), jnp.float32)
    b2 = jnp.zeros((L, Da), jnp.float32)
    w_out = s * jax.random.normal(ks[8], (Da, NUM_EMBEDDINGS), jnp.float32)
    ones, zeros = jnp.ones((Da,), jnp.float32), jnp.zeros((Da,), jnp.float32)

    # Embedding lookup + sum + in_proj fused into ONE table: (wpe | sem | tte | 0) @ w_in.
    table = jnp.concatenate(
        [wpe, sem_table, tte, jnp.zeros((TABLE_PAD - TABLE_ROWS, De), jnp.float32)], axis=0)
    table_in = jnp.dot(table, w_in)                                   # (TABLE_PAD, Da)

    # One flat (SLAB_ROWS, 128) weight slab -> a single input DMA for all decoder weights.
    blocks = []
    for l in range(L):
        for j in range(3):                        # q, k, v (head-major blocks, lane-aligned)
            for hi in range(NUM_HEADS):
                col = j * Da + hi * HEAD_DIM
                blocks.append(_pad_cols(wqkv[l][:, col: col + HEAD_DIM]))
        blocks.append(_pad_cols(wo[l]))
        blocks.append(_pad_cols(w1[l]))
        blocks.append(_pad_cols(w2[l]))
        blocks += [_rowvec(ones), _rowvec(zeros),      # ln1 w, b
                   _rowvec(ones), _rowvec(zeros),      # ln2 w, b
                   _rowvec(bo[l]), _rowvec(b2[l]), _rowvec(b1[l])]
        for j in range(3):
            for hi in range(NUM_HEADS):
                col = j * Da + hi * HEAD_DIM
                blocks.append(_rowvec(bqkv[l][col: col + HEAD_DIM]))
        blocks.append(jnp.zeros((_VEC_ROWS - 13, SLAB_COLS), jnp.float32))
    blocks.append(_pad_cols(w_out))
    blocks += [_rowvec(ones), _rowvec(zeros)]          # final LayerNorm w, b
    blocks.append(jnp.zeros((SLAB_ROWS - (SLAB_LNF + 2), SLAB_COLS), jnp.float32))
    wslab = jnp.concatenate(blocks, axis=0)
    assert wslab.shape == (SLAB_ROWS, SLAB_COLS)

    return {"table_in": table_in, "wslab": wslab}


def _cost_estimate():
    bn = B * N
    flops = 2 * bn * TABLE_PAD * ATTN_DIM                        # fused embed + in_proj
    per_layer = (3 * NUM_HEADS * 2 * bn * ATTN_DIM * HEAD_DIM    # head-major QKV
                 + NUM_HEADS * 2 * 2 * B * N * N * HEAD_DIM      # scores + pv
                 + 2 * bn * ATTN_DIM * ATTN_DIM                  # Wo
                 + 2 * 2 * bn * ATTN_DIM * FF_DIM)               # MLP
    flops += N_LAYERS * per_layer + 2 * B * ATTN_DIM * NUM_EMBEDDINGS
    transcendentals = N_LAYERS * (NUM_HEADS * B * N * N + bn * FF_DIM) + 64
    bytes_accessed = 4 * (B * N * 4 + B + TABLE_PAD * ATTN_DIM
                          + SLAB_ROWS * SLAB_COLS + B * NUM_EMBEDDINGS)
    return pl.CostEstimate(flops=flops, transcendentals=transcendentals,
                           bytes_accessed=bytes_accessed)


_COST = _cost_estimate()


@jax.jit
def decoder_retrieval_forward(params, sem_ids, token_type_ids, seq_mask, user_ids):
    """Returns (loss=None, logits[B, num_embeddings]) for eval mode."""
    del user_ids   # user_id_embedder output is never used in the reference forward
    b, n = sem_ids.shape

    # Int-only glue (a single tiny XLA fusion); all gathers/embeddings happen in-kernel.
    pos = jnp.broadcast_to(jnp.arange(n, dtype=jnp.int32)[None, :], (b, n))  # + seq_lengths(=0)
    sem_idx = SEM_OFFSET + sem_ids + NUM_EMBEDDINGS * token_type_ids
    tte_idx = TTE_OFFSET + token_type_ids
    idx = jnp.stack([pos, sem_idx.astype(jnp.int32), tte_idx.astype(jnp.int32),
                     seq_mask.astype(jnp.int32)], axis=-1)                   # (B, N, 4)
    last = (jnp.arange(b, dtype=jnp.int32) * n
            + jnp.sum(seq_mask, axis=-1).astype(jnp.int32) - 1)              # (B,) flat rows

    vmem = pl.BlockSpec(memory_space=pltpu.MemorySpace.VMEM)
    smem = pl.BlockSpec(memory_space=pltpu.MemorySpace.SMEM)

    # Single program: whole batch + packed weights resident in VMEM (~0.5 MiB total).
    logits = pl.pallas_call(
        _decoder_kernel,
        out_shape=jax.ShapeDtypeStruct((b, NUM_EMBEDDINGS), jnp.float32),
        in_specs=[vmem, smem, vmem, vmem],
        out_specs=vmem,
        scratch_shapes=[pltpu.VMEM((b * n, ATTN_DIM), jnp.float32),
                        pltpu.VMEM((b, ATTN_DIM), jnp.float32)],
        cost_estimate=_COST,
    )(idx, last, params["table_in"], params["wslab"])

    return None, logits   # ModelOutput(loss=None, logits)


if __name__ == "__main__":
    key = jax.random.PRNGKey(0)
    pkey, k1, k2 = jax.random.split(key, 3)
    params = init_params(pkey)

    # synthetic TokenizedSeqBatch-like inputs
    sem_ids = jax.random.randint(k1, (B, N), 0, NUM_EMBEDDINGS, dtype=jnp.int32)
    token_type_ids = jnp.broadcast_to(jnp.arange(N, dtype=jnp.int32) % SEM_ID_DIM, (B, N))
    lengths = jnp.array([N, 5], dtype=jnp.int32)
    seq_mask = jnp.arange(N)[None, :] < lengths[:, None]                     # (B, N) bool
    user_ids = jax.random.randint(k2, (B,), 0, 2000, dtype=jnp.int32)

    loss, logits = decoder_retrieval_forward(params, sem_ids, token_type_ids, seq_mask, user_ids)
    jax.block_until_ready(logits)

    assert logits.shape == (B, NUM_EMBEDDINGS)
    assert loss is None
    assert bool(jnp.all(jnp.isfinite(logits)))
    print("KERNEL_OK")
</pallas_src>

<mosaic_0001>
module attributes {stable_mosaic.version = 11 : i64} {
  func.func @_decoder_kernel(%arg0: memref<2x8x4xi32, #tpu.memory_space<vmem>>, %arg1: memref<2xi32, #tpu.memory_space<smem>>, %arg2: memref<384x32xf32, #tpu.memory_space<vmem>>, %arg3: memref<840x128xf32, #tpu.memory_space<vmem>>, %arg4: memref<2x64xf32, #tpu.memory_space<vmem>>, %arg5: memref<16x32xf32, #tpu.memory_space<vmem>>, %arg6: memref<2x32xf32, #tpu.memory_space<vmem>>) attributes {dimension_semantics = [], scalar_prefetch = 0 : i64, scratch_operands = 2 : i64, tpu.core_type = #tpu.core_type<tc>} {
    %c0 = arith.constant 0 : index
    %c0_0 = arith.constant 0 : index
    %c0_1 = arith.constant 0 : index
    %0 = vector.load %arg0[%c0, %c0_0, %c0_1] : memref<2x8x4xi32, #tpu.memory_space<vmem>>, vector<2x8x4xi32>
    %1 = vector.shape_cast %0 : vector<2x8x4xi32> to vector<16x4xi32>
    %2 = tpu.iota {dimensions = array<i32: 1>} : vector<16x384xi32>
    %3 = vector.extract_strided_slice %1 {offsets = [0, 0], sizes = [16, 1], strides = [1, 1]} : vector<16x4xi32> to vector<16x1xi32>
    %4 = vector.broadcast %3 : vector<16x1xi32> to vector<16x384xi32>
    %5 = arith.cmpi eq, %2, %4 : vector<16x384xi32>
    %6 = vector.extract_strided_slice %1 {offsets = [0, 1], sizes = [16, 1], strides = [1, 1]} : vector<16x4xi32> to vector<16x1xi32>
    %7 = vector.broadcast %6 : vector<16x1xi32> to vector<16x384xi32>
    %8 = arith.cmpi eq, %2, %7 : vector<16x384xi32>
    %9 = arith.ori %5, %8 : vector<16x384xi1>
    %10 = vector.extract_strided_slice %1 {offsets = [0, 2], sizes = [16, 1], strides = [1, 1]} : vector<16x4xi32> to vector<16x1xi32>
    %11 = vector.broadcast %10 : vector<16x1xi32> to vector<16x384xi32>
    %12 = arith.cmpi eq, %2, %11 : vector<16x384xi32>
    %13 = arith.ori %9, %12 : vector<16x384xi1>
    %14 = arith.extui %13 : vector<16x384xi1> to vector<16x384xi32>
    %15 = arith.sitofp %14 : vector<16x384xi32> to vector<16x384xf32>
    %c0_2 = arith.constant 0 : index
    %c0_3 = arith.constant 0 : index
    %16 = vector.load %arg2[%c0_2, %c0_3] : memref<384x32xf32, #tpu.memory_space<vmem>>, vector<384x32xf32>
    %cst = arith.constant dense<0.000000e+00> : vector<16x32xf32>
    %17 = tpu.matmul %15, %16, %cst {dimension_numbers = #tpu.dot_dimension_numbers<[1], [0], [0], [1], [0, 0, 1, 1], [], []>} : vector<16x384xf32>, vector<384x32xf32>, vector<16x32xf32> -> vector<16x32xf32>
    %18 = vector.extract_strided_slice %0 {offsets = [0, 0, 3], sizes = [2, 8, 1], strides = [1, 1, 1]} : vector<2x8x4xi32> to vector<2x8x1xi32>
    %19 = vector.shape_cast %18 : vector<2x8x1xi32> to vector<2x8xi32>
    %c0_i32 = arith.constant 0 : i32
    %20 = vector.broadcast %c0_i32 : i32 to vector<2x8xi32>
    %21 = arith.cmpi sgt, %19, %20 : vector<2x8xi32>
    %22 = tpu.iota {dimensions = array<i32: 0>} : vector<8x8xi32>
    %23 = tpu.iota {dimensions = array<i32: 1>} : vector<8x8xi32>
    %24 = arith.cmpi sle, %23, %22 : vector<8x8xi32>
    %25 = vector.shape_cast %24 : vector<8x8xi1> to vector<1x8x8xi1>
    %26 = vector.shape_cast %21 : vector<2x8xi1> to vector<2x1x8xi1>
    %27 = vector.broadcast %25 : vector<1x8x8xi1> to vector<2x8x8xi1>
    %28 = vector.broadcast %26 : vector<2x1x8xi1> to vector<2x8x8xi1>
    %29 = arith.andi %27, %28 : vector<2x8x8xi1>
    %c384 = arith.constant 384 : index
    %c0_4 = arith.constant 0 : index
    %30 = vector.load %arg3[%c384, %c0_4] : memref<840x128xf32, #tpu.memory_space<vmem>>, vector<1x32xf32>
    %c385 = arith.constant 385 : index
    %c0_5 = arith.constant 0 : index
    %31 = vector.load %arg3[%c385, %c0_5] : memref<840x128xf32, #tpu.memory_space<vmem>>, vector<1x32xf32>
    %cst_6 = arith.constant dense<0.000000e+00> : vector<16xf32>
    %32 = vector.multi_reduction <add>, %17, %cst_6 [1] : vector<16x32xf32> to vector<16xf32>
    %33 = vector.shape_cast %32 : vector<16xf32> to vector<16x1xf32>
    %cst_7 = arith.constant 3.200000e+01 : f32
    %34 = vector.broadcast %cst_7 : f32 to vector<16x1xf32>
    %35 = arith.divf %33, %34 : vector<16x1xf32>
    %36 = vector.broadcast %35 : vector<16x1xf32> to vector<16x32xf32>
    %37 = arith.subf %17, %36 : vector<16x32xf32>
    %38 = arith.mulf %37, %37 : vector<16x32xf32>
    %cst_8 = arith.constant dense<0.000000e+00> : vector<16xf32>
    %39 = vector.multi_reduction <add>, %38, %cst_8 [1] : vector<16x32xf32> to vector<16xf32>
    %40 = vector.shape_cast %39 : vector<16xf32> to vector<16x1xf32>
    %cst_9 = arith.constant 3.200000e+01 : f32
    %41 = vector.broadcast %cst_9 : f32 to vector<16x1xf32>
    %42 = arith.divf %40, %41 : vector<16x1xf32>
    %43 = vector.broadcast %35 : vector<16x1xf32> to vector<16x32xf32>
    %44 = arith.subf %17, %43 : vector<16x32xf32>
    %cst_10 = arith.constant 9.99999974E-6 : f32
    %45 = vector.broadcast %cst_10 : f32 to vector<16x1xf32>
    %46 = arith.addf %42, %45 : vector<16x1xf32>
    %47 = math.rsqrt %46 : vector<16x1xf32>
    %48 = vector.broadcast %47 : vector<16x1xf32> to vector<16x32xf32>
    %49 = arith.mulf %44, %48 : vector<16x32xf32>
    %50 = vector.broadcast %30 : vector<1x32xf32> to vector<16x32xf32>
    %51 = arith.mulf %49, %50 : vector<16x32xf32>
    %52 = vector.broadcast %31 : vector<1x32xf32> to vector<16x32xf32>
    %53 = arith.addf %51, %52 : vector<16x32xf32>
    %c0_11 = arith.constant 0 : index
    %c0_12 = arith.constant 0 : index
    %54 = vector.load %arg3[%c0_11, %c0_12] : memref<840x128xf32, #tpu.memory_space<vmem>>, vector<32x16xf32>
    %cst_13 = arith.constant dense<0.000000e+00> : vector<16x16xf32>
    %55 = tpu.matmul %53, %54, %cst_13 {dimension_numbers = #tpu.dot_dimension_numbers<[1], [0], [0], [1], [0, 0, 1, 1], [], []>} : vector<16x32xf32>, vector<32x16xf32>, vector<16x16xf32> -> vector<16x16xf32>
    %c391 = arith.constant 391 : index
    %c0_14 = arith.constant 0 : index
    %56 = vector.load %arg3[%c391, %c0_14] : memref<840x128xf32, #tpu.memory_space<vmem>>, vector<1x16xf32>
    %57 = vector.broadcast %56 : vector<1x16xf32> to vector<16x16xf32>
    %58 = arith.addf %55, %57 : vector<16x16xf32>
    %59 = vector.shape_cast %58 : vector<16x16xf32> to vector<2x8x16xf32>
    %c64 = arith.constant 64 : index
    %c0_15 = arith.constant 0 : index
    %60 = vector.load %arg3[%c64, %c0_15] : memref<840x128xf32, #tpu.memory_space<vmem>>, vector<32x16xf32>
    %cst_16 = arith.constant dense<0.000000e+00> : vector<16x16xf32>
    %61 = tpu.matmul %53, %60, %cst_16 {dimension_numbers = #tpu.dot_dimension_numbers<[1], [0], [0], [1], [0, 0, 1, 1], [], []>} : vector<16x32xf32>, vector<32x16xf32>, vector<16x16xf32> -> vector<16x16xf32>
    %c393 = arith.constant 393 : index
    %c0_17 = arith.constant 0 : index
    %62 = vector.load %arg3[%c393, %c0_17] : memref<840x128xf32, #tpu.memory_space<vmem>>, vector<1x16xf32>
    %63 = vector.broadcast %62 : vector<1x16xf32> to vector<16x16xf32>
    %64 = arith.addf %61, %63 : vector<16x16xf32>
    %65 = vector.shape_cast %64 : vector<16x16xf32> to vector<2x8x16xf32>
    %c128 = arith.constant 128 : index
    %c0_18 = arith.constant 0 : index
    %66 = vector.load %arg3[%c128, %c0_18] : memref<840x128xf32, #tpu.memory_space<vmem>>, vector<32x16xf32>
    %cst_19 = arith.constant dense<0.000000e+00> : vector<16x16xf32>
    %67 = tpu.matmul %53, %66, %cst_19 {dimension_numbers = #tpu.dot_dimension_numbers<[1], [0], [0], [1], [0, 0, 1, 1], [], []>} : vector<16x32xf32>, vector<32x16xf32>, vector<16x16xf32> -> vector<16x16xf32>
    %c395 = arith.constant 395 : index
    %c0_20 = arith.constant 0 : index
    %68 = vector.load %arg3[%c395, %c0_20] : memref<840x128xf32, #tpu.memory_space<vmem>>, vector<1x16xf32>
    %69 = vector.broadcast %68 : vector<1x16xf32> to vector<16x16xf32>
    %70 = arith.addf %67, %69 : vector<16x16xf32>
    %71 = vector.shape_cast %70 : vector<16x16xf32> to vector<2x8x16xf32>
    "tpu.trace_start"() <{level = 10 : i32, message = "bqd,bkd->bqk"}> : () -> ()
    %cst_21 = arith.constant dense<0.000000e+00> : vector<2x8x8xf32>
    %72 = tpu.matmul %59, %65, %cst_21 {dimension_numbers = #tpu.dot_dimension_numbers<[2], [2], [1], [1], [0, 0, 0, 1, 1, 1], [0], [0]>} : vector<2x8x16xf32>, vector<2x8x16xf32>, vector<2x8x8xf32> -> vector<2x8x8xf32>
    "tpu.trace_stop"() : () -> ()
    %cst_22 = arith.constant 2.500000e-01 : f32
    %73 = vector.broadcast %cst_22 : f32 to vector<2x8x8xf32>
    %74 = arith.mulf %72, %73 : vector<2x8x8xf32>
    %cst_23 = arith.constant -1.000000e+09 : f32
    %75 = vector.broadcast %cst_23 : f32 to vector<2x8x8xf32>
    %76 = arith.select %29, %74, %75 : vector<2x8x8xi1>, vector<2x8x8xf32>
    %cst_24 = arith.constant dense<0xFF800000> : vector<2x8xf32>
    %77 = vector.multi_reduction <maximumf>, %76, %cst_24 [2] : vector<2x8x8xf32> to vector<2x8xf32>
    %78 = vector.shape_cast %77 : vector<2x8xf32> to vector<2x8x1xf32>
    %79 = vector.broadcast %78 : vector<2x8x1xf32> to vector<2x8x8xf32>
    %80 = arith.subf %76, %79 : vector<2x8x8xf32>
    %81 = math.exp %80 : vector<2x8x8xf32>
    %cst_25 = arith.constant dense<0.000000e+00> : vector<2x8xf32>
    %82 = vector.multi_reduction <add>, %81, %cst_25 [2] : vector<2x8x8xf32> to vector<2x8xf32>
    %83 = vector.shape_cast %82 : vector<2x8xf32> to vector<2x8x1xf32>
    %84 = tpu.reciprocal %83 {approx = true} : vector<2x8x1xf32> -> vector<2x8x1xf32>
    %85 = vector.broadcast %84 : vector<2x8x1xf32> to vector<2x8x8xf32>
    %86 = arith.mulf %81, %85 : vector<2x8x8xf32>
    "tpu.trace_start"() <{level = 10 : i32, message = "bqk,bkd->bqd"}> : () -> ()
    %cst_26 = arith.constant dense<0.000000e+00> : vector<2x8x16xf32>
    %87 = tpu.matmul %86, %71, %cst_26 {dimension_numbers = #tpu.dot_dimension_numbers<[2], [1], [1], [2], [0, 0, 0, 1, 1, 2], [0], [0]>} : vector<2x8x8xf32>, vector<2x8x16xf32>, vector<2x8x16xf32> -> vector<2x8x16xf32>
    "tpu.trace_stop"() : () -> ()
    %c32 = arith.constant 32 : index
    %c0_27 = arith.constant 0 : index
    %88 = vector.load %arg3[%c32, %c0_27] : memref<840x128xf32, #tpu.memory_space<vmem>>, vector<32x16xf32>
    %cst_28 = arith.constant dense<0.000000e+00> : vector<16x16xf32>
    %89 = tpu.matmul %53, %88, %cst_28 {dimension_numbers = #tpu.dot_dimension_numbers<[1], [0], [0], [1], [0, 0, 1, 1], [], []>} : vector<16x32xf32>, vector<32x16xf32>, vector<16x16xf32> -> vector<16x16xf32>
    %c392 = arith.constant 392 : index
    %c0_29 = arith.constant 0 : index
    %90 = vector.load %arg3[%c392, %c0_29] : memref<840x128xf32, #tpu.memory_space<vmem>>, vector<1x16xf32>
    %91 = vector.broadcast %90 : vector<1x16xf32> to vector<16x16xf32>
    %92 = arith.addf %89, %91 : vector<16x16xf32>
    %93 = vector.shape_cast %92 : vector<16x16xf32> to vector<2x8x16xf32>
    %c96 = arith.constant 96 : index
    %c0_30 = arith.constant 0 : index
    %94 = vector.load %arg3[%c96, %c0_30] : memref<840x128xf32, #tpu.memory_space<vmem>>, vector<32x16xf32>
    %cst_31 = arith.constant dense<0.000000e+00> : vector<16x16xf32>
    %95 = tpu.matmul %53, %94, %cst_31 {dimension_numbers = #tpu.dot_dimension_numbers<[1], [0], [0], [1], [0, 0, 1, 1], [], []>} : vector<16x32xf32>, vector<32x16xf32>, vector<16x16xf32> -> vector<16x16xf32>
    %c394 = arith.constant 394 : index
    %c0_32 = arith.constant 0 : index
    %96 = vector.load %arg3[%c394, %c0_32] : memref<840x128xf32, #tpu.memory_space<vmem>>, vector<1x16xf32>
    %97 = vector.broadcast %96 : vector<1x16xf32> to vector<16x16xf32>
    %98 = arith.addf %95, %97 : vector<16x16xf32>
    %99 = vector.shape_cast %98 : vector<16x16xf32> to vector<2x8x16xf32>
    %c160 = arith.constant 160 : index
    %c0_33 = arith.constant 0 : index
    %100 = vector.load %arg3[%c160, %c0_33] : memref<840x128xf32, #tpu.memory_space<vmem>>, vector<32x16xf32>
    %cst_34 = arith.constant dense<0.000000e+00> : vector<16x16xf32>
    %101 = tpu.matmul %53, %100, %cst_34 {dimension_numbers = #tpu.dot_dimension_numbers<[1], [0], [0], [1], [0, 0, 1, 1], [], []>} : vector<16x32xf32>, vector<32x16xf32>, vector<16x16xf32> -> vector<16x16xf32>
    %c396 = arith.constant 396 : index
    %c0_35 = arith.constant 0 : index
    %102 = vector.load %arg3[%c396, %c0_35] : memref<840x128xf32, #tpu.memory_space<vmem>>, vector<1x16xf32>
    %103 = vector.broadcast %102 : vector<1x16xf32> to vector<16x16xf32>
    %104 = arith.addf %101, %103 : vector<16x16xf32>
    %105 = vector.shape_cast %104 : vector<16x16xf32> to vector<2x8x16xf32>
    "tpu.trace_start"() <{level = 10 : i32, message = "bqd,bkd->bqk"}> : () -> ()
    %cst_36 = arith.constant dense<0.000000e+00> : vector<2x8x8xf32>
    %106 = tpu.matmul %93, %99, %cst_36 {dimension_numbers = #tpu.dot_dimension_numbers<[2], [2], [1], [1], [0, 0, 0, 1, 1, 1], [0], [0]>} : vector<2x8x16xf32>, vector<2x8x16xf32>, vector<2x8x8xf32> -> vector<2x8x8xf32>
    "tpu.trace_stop"() : () -> ()
    %cst_37 = arith.constant 2.500000e-01 : f32
    %107 = vector.broadcast %cst_37 : f32 to vector<2x8x8xf32>
    %108 = arith.mulf %106, %107 : vector<2x8x8xf32>
    %cst_38 = arith.constant -1.000000e+09 : f32
    %109 = vector.broadcast %cst_38 : f32 to vector<2x8x8xf32>
    %110 = arith.select %29, %108, %109 : vector<2x8x8xi1>, vector<2x8x8xf32>
    %cst_39 = arith.constant dense<0xFF800000> : vector<2x8xf32>
    %111 = vector.multi_reduction <maximumf>, %110, %cst_39 [2] : vector<2x8x8xf32> to vector<2x8xf32>
    %112 = vector.shape_cast %111 : vector<2x8xf32> to vector<2x8x1xf32>
    %113 = vector.broadcast %112 : vector<2x8x1xf32> to vector<2x8x8xf32>
    %114 = arith.subf %110, %113 : vector<2x8x8xf32>
    %115 = math.exp %114 : vector<2x8x8xf32>
    %cst_40 = arith.constant dense<0.000000e+00> : vector<2x8xf32>
    %116 = vector.multi_reduction <add>, %115, %cst_40 [2] : vector<2x8x8xf32> to vector<2x8xf32>
    %117 = vector.shape_cast %116 : vector<2x8xf32> to vector<2x8x1xf32>
    %118 = tpu.reciprocal %117 {approx = true} : vector<2x8x1xf32> -> vector<2x8x1xf32>
    %119 = vector.broadcast %118 : vector<2x8x1xf32> to vector<2x8x8xf32>
    %120 = arith.mulf %115, %119 : vector<2x8x8xf32>
    "tpu.trace_start"() <{level = 10 : i32, message = "bqk,bkd->bqd"}> : () -> ()
    %cst_41 = arith.constant dense<0.000000e+00> : vector<2x8x16xf32>
    %121 = tpu.matmul %120, %105, %cst_41 {dimension_numbers = #tpu.dot_dimension_numbers<[2], [1], [1], [2], [0, 0, 0, 1, 1, 2], [0], [0]>} : vector<2x8x8xf32>, vector<2x8x16xf32>, vector<2x8x16xf32> -> vector<2x8x16xf32>
    "tpu.trace_stop"() : () -> ()
    %122 = tpu.concatenate %87, %121 in 2 : vector<2x8x16xf32>, vector<2x8x16xf32> -> vector<2x8x32xf32>
    %123 = vector.shape_cast %122 : vector<2x8x32xf32> to vector<16x32xf32>
    %c192 = arith.constant 192 : index
    %c0_42 = arith.constant 0 : index
    %124 = vector.load %arg3[%c192, %c0_42] : memref<840x128xf32, #tpu.memory_space<vmem>>, vector<32x32xf32>
    %cst_43 = arith.constant dense<0.000000e+00> : vector<16x32xf32>
    %125 = tpu.matmul %123, %124, %cst_43 {dimension_numbers = #tpu.dot_dimension_numbers<[1], [0], [0], [1], [0, 0, 1, 1], [], []>} : vector<16x32xf32>, vector<32x32xf32>, vector<16x32xf32> -> vector<16x32xf32>
    %126 = arith.addf %17, %125 : vector<16x32xf32>
    %c388 = arith.constant 388 : index
    %c0_44 = arith.constant 0 : index
    %127 = vector.load %arg3[%c388, %c0_44] : memref<840x128xf32, #tpu.memory_space<vmem>>, vector<1x32xf32>
    %128 = vector.broadcast %127 : vector<1x32xf32> to vector<16x32xf32>
    %129 = arith.addf %126, %128 : vector<16x32xf32>
    %c386 = arith.constant 386 : index
    %c0_45 = arith.constant 0 : index
    %130 = vector.load %arg3[%c386, %c0_45] : memref<840x128xf32, #tpu.memory_space<vmem>>, vector<1x32xf32>
    %c387 = arith.constant 387 : index
    %c0_46 = arith.constant 0 : index
    %131 = vector.load %arg3[%c387, %c0_46] : memref<840x128xf32, #tpu.memory_space<vmem>>, vector<1x32xf32>
    %cst_47 = arith.constant dense<0.000000e+00> : vector<16xf32>
    %132 = vector.multi_reduction <add>, %129, %cst_47 [1] : vector<16x32xf32> to vector<16xf32>
    %133 = vector.shape_cast %132 : vector<16xf32> to vector<16x1xf32>
    %cst_48 = arith.constant 3.200000e+01 : f32
    %134 = vector.broadcast %cst_48 : f32 to vector<16x1xf32>
    %135 = arith.divf %133, %134 : vector<16x1xf32>
    %136 = vector.broadcast %135 : vector<16x1xf32> to vector<16x32xf32>
    %137 = arith.subf %129, %136 : vector<16x32xf32>
    %138 = arith.mulf %137, %137 : vector<16x32xf32>
    %cst_49 = arith.constant dense<0.000000e+00> : vector<16xf32>
    %139 = vector.multi_reduction <add>, %138, %cst_49 [1] : vector<16x32xf32> to vector<16xf32>
    %140 = vector.shape_cast %139 : vector<16xf32> to vector<16x1xf32>
    %cst_50 = arith.constant 3.200000e+01 : f32
    %141 = vector.broadcast %cst_50 : f32 to vector<16x1xf32>
    %142 = arith.divf %140, %141 : vector<16x1xf32>
    %143 = vector.broadcast %135 : vector<16x1xf32> to vector<16x32xf32>
    %144 = arith.subf %129, %143 : vector<16x32xf32>
    %cst_51 = arith.constant 9.99999974E-6 : f32
    %145 = vector.broadcast %cst_51 : f32 to vector<16x1xf32>
    %146 = arith.addf %142, %145 : vector<16x1xf32>
    %147 = math.rsqrt %146 : vector<16x1xf32>
    %148 = vector.broadcast %147 : vector<16x1xf32> to vector<16x32xf32>
    %149 = arith.mulf %144, %148 : vector<16x32xf32>
    %150 = vector.broadcast %130 : vector<1x32xf32> to vector<16x32xf32>
    %151 = arith.mulf %149, %150 : vector<16x32xf32>
    %152 = vector.broadcast %131 : vector<1x32xf32> to vector<16x32xf32>
    %153 = arith.addf %151, %152 : vector<16x32xf32>
    %c224 = arith.constant 224 : index
    %c0_52 = arith.constant 0 : index
    %154 = vector.load %arg3[%c224, %c0_52] : memref<840x128xf32, #tpu.memory_space<vmem>>, vector<32x128xf32>
    %c256 = arith.constant 256 : index
    %c0_53 = arith.constant 0 : index
    %155 = vector.load %arg3[%c256, %c0_53] : memref<840x128xf32, #tpu.memory_space<vmem>>, vector<128x32xf32>
    %cst_54 = arith.constant dense<0.000000e+00> : vector<16x128xf32>
    %156 = tpu.matmul %153, %154, %cst_54 {dimension_numbers = #tpu.dot_dimension_numbers<[1], [0], [0], [1], [0, 0, 1, 1], [], []>} : vector<16x32xf32>, vector<32x128xf32>, vector<16x128xf32> -> vector<16x128xf32>
    %c390 = arith.constant 390 : index
    %c0_55 = arith.constant 0 : index
    %157 = vector.load %arg3[%c390, %c0_55] : memref<840x128xf32, #tpu.memory_space<vmem>>, vector<1x128xf32>
    %158 = vector.broadcast %157 : vector<1x128xf32> to vector<16x128xf32>
    %159 = arith.addf %156, %158 : vector<16x128xf32>
    %160 = arith.mulf %159, %159 : vector<16x128xf32>
    %161 = arith.mulf %159, %160 : vector<16x128xf32>
    %cst_56 = arith.constant 4.471500e-02 : f32
    %162 = vector.broadcast %cst_56 : f32 to vector<16x128xf32>
    %163 = arith.mulf %162, %161 : vector<16x128xf32>
    %164 = arith.addf %159, %163 : vector<16x128xf32>
    %cst_57 = arith.constant 0.797884583 : f32
    %165 = vector.broadcast %cst_57 : f32 to vector<16x128xf32>
    %166 = arith.mulf %165, %164 : vector<16x128xf32>
    %167 = math.tanh %166 : vector<16x128xf32>
    %cst_58 = arith.constant 1.000000e+00 : f32
    %168 = vector.broadcast %cst_58 : f32 to vector<16x128xf32>
    %169 = arith.addf %168, %167 : vector<16x128xf32>
    %cst_59 = arith.constant 5.000000e-01 : f32
    %170 = vector.broadcast %cst_59 : f32 to vector<16x128xf32>
    %171 = arith.mulf %170, %169 : vector<16x128xf32>
    %172 = arith.mulf %159, %171 : vector<16x128xf32>
    %cst_60 = arith.constant dense<0.000000e+00> : vector<16x32xf32>
    %173 = tpu.matmul %172, %155, %cst_60 {dimension_numbers = #tpu.dot_dimension_numbers<[1], [0], [0], [1], [0, 0, 1, 1], [], []>} : vector<16x128xf32>, vector<128x32xf32>, vector<16x32xf32> -> vector<16x32xf32>
    %c389 = arith.constant 389 : index
    %c0_61 = arith.constant 0 : index
    %174 = vector.load %arg3[%c389, %c0_61] : memref<840x128xf32, #tpu.memory_space<vmem>>, vector<1x32xf32>
    %175 = vector.broadcast %174 : vector<1x32xf32> to vector<16x32xf32>
    %176 = arith.addf %173, %175 : vector<16x32xf32>
    %177 = arith.addf %129, %176 : vector<16x32xf32>
    %c784 = arith.constant 784 : index
    %c0_62 = arith.constant 0 : index
    %178 = vector.load %arg3[%c784, %c0_62] : memref<840x128xf32, #tpu.memory_space<vmem>>, vector<1x32xf32>
    %c785 = arith.constant 785 : index
    %c0_63 = arith.constant 0 : index
    %179 = vector.load %arg3[%c785, %c0_63] : memref<840x128xf32, #tpu.memory_space<vmem>>, vector<1x32xf32>
    %cst_64 = arith.constant dense<0.000000e+00> : vector<16xf32>
    %180 = vector.multi_reduction <add>, %177, %cst_64 [1] : vector<16x32xf32> to vector<16xf32>
    %181 = vector.shape_cast %180 : vector<16xf32> to vector<16x1xf32>
    %cst_65 = arith.constant 3.200000e+01 : f32
    %182 = vector.broadcast %cst_65 : f32 to vector<16x1xf32>
    %183 = arith.divf %181, %182 : vector<16x1xf32>
    %184 = vector.broadcast %183 : vector<16x1xf32> to vector<16x32xf32>
    %185 = arith.subf %177, %184 : vector<16x32xf32>
    %186 = arith.mulf %185, %185 : vector<16x32xf32>
    %cst_66 = arith.constant dense<0.000000e+00> : vector<16xf32>
    %187 = vector.multi_reduction <add>, %186, %cst_66 [1] : vector<16x32xf32> to vector<16xf32>
    %188 = vector.shape_cast %187 : vector<16xf32> to vector<16x1xf32>
    %cst_67 = arith.constant 3.200000e+01 : f32
    %189 = vector.broadcast %cst_67 : f32 to vector<16x1xf32>
    %190 = arith.divf %188, %189 : vector<16x1xf32>
    %191 = vector.broadcast %183 : vector<16x1xf32> to vector<16x32xf32>
    %192 = arith.subf %177, %191 : vector<16x32xf32>
    %cst_68 = arith.constant 9.99999974E-6 : f32
    %193 = vector.broadcast %cst_68 : f32 to vector<16x1xf32>
    %194 = arith.addf %190, %193 : vector<16x1xf32>
    %195 = math.rsqrt %194 : vector<16x1xf32>
    %196 = vector.broadcast %195 : vector<16x1xf32> to vector<16x32xf32>
    %197 = arith.mulf %192, %196 : vector<16x32xf32>
    %198 = vector.broadcast %178 : vector<1x32xf32> to vector<16x32xf32>
    %199 = arith.mulf %197, %198 : vector<16x32xf32>
    %200 = vector.broadcast %179 : vector<1x32xf32> to vector<16x32xf32>
    %201 = arith.addf %199, %200 : vector<16x32xf32>
    %c400 = arith.constant 400 : index
    %c0_69 = arith.constant 0 : index
    %202 = vector.load %arg3[%c400, %c0_69] : memref<840x128xf32, #tpu.memory_space<vmem>>, vector<32x16xf32>
    %cst_70 = arith.constant dense<0.000000e+00> : vector<16x16xf32>
    %203 = tpu.matmul %201, %202, %cst_70 {dimension_numbers = #tpu.dot_dimension_numbers<[1], [0], [0], [1], [0, 0, 1, 1], [], []>} : vector<16x32xf32>, vector<32x16xf32>, vector<16x16xf32> -> vector<16x16xf32>
    %c791 = arith.constant 791 : index
    %c0_71 = arith.constant 0 : index
    %204 = vector.load %arg3[%c791, %c0_71] : memref<840x128xf32, #tpu.memory_space<vmem>>, vector<1x16xf32>
    %205 = vector.broadcast %204 : vector<1x16xf32> to vector<16x16xf32>
    %206 = arith.addf %203, %205 : vector<16x16xf32>
    %207 = vector.shape_cast %206 : vector<16x16xf32> to vector<2x8x16xf32>
    %c464 = arith.constant 464 : index
    %c0_72 = arith.constant 0 : index
    %208 = vector.load %arg3[%c464, %c0_72] : memref<840x128xf32, #tpu.memory_space<vmem>>, vector<32x16xf32>
    %cst_73 = arith.constant dense<0.000000e+00> : vector<16x16xf32>
    %209 = tpu.matmul %201, %208, %cst_73 {dimension_numbers = #tpu.dot_dimension_numbers<[1], [0], [0], [1], [0, 0, 1, 1], [], []>} : vector<16x32xf32>, vector<32x16xf32>, vector<16x16xf32> -> vector<16x16xf32>
    %c793 = arith.constant 793 : index
    %c0_74 = arith.constant 0 : index
    %210 = vector.load %arg3[%c793, %c0_74] : memref<840x128xf32, #tpu.memory_space<vmem>>, vector<1x16xf32>
    %211 = vector.broadcast %210 : vector<1x16xf32> to vector<16x16xf32>
    %212 = arith.addf %209, %211 : vector<16x16xf32>
    %213 = vector.shape_cast %212 : vector<16x16xf32> to vector<2x8x16xf32>
    %c528 = arith.constant 528 : index
    %c0_75 = arith.constant 0 : index
    %214 = vector.load %arg3[%c528, %c0_75] : memref<840x128xf32, #tpu.memory_space<vmem>>, vector<32x16xf32>
    %cst_76 = arith.constant dense<0.000000e+00> : vector<16x16xf32>
    %215 = tpu.matmul %201, %214, %cst_76 {dimension_numbers = #tpu.dot_dimension_numbers<[1], [0], [0], [1], [0, 0, 1, 1], [], []>} : vector<16x32xf32>, vector<32x16xf32>, vector<16x16xf32> -> vector<16x16xf32>
    %c795 = arith.constant 795 : index
    %c0_77 = arith.constant 0 : index
    %216 = vector.load %arg3[%c795, %c0_77] : memref<840x128xf32, #tpu.memory_space<vmem>>, vector<1x16xf32>
    %217 = vector.broadcast %216 : vector<1x16xf32> to vector<16x16xf32>
    %218 = arith.addf %215, %217 : vector<16x16xf32>
    %219 = vector.shape_cast %218 : vector<16x16xf32> to vector<2x8x16xf32>
    "tpu.trace_start"() <{level = 10 : i32, message = "bqd,bkd->bqk"}> : () -> ()
    %cst_78 = arith.constant dense<0.000000e+00> : vector<2x8x8xf32>
    %220 = tpu.matmul %207, %213, %cst_78 {dimension_numbers = #tpu.dot_dimension_numbers<[2], [2], [1], [1], [0, 0, 0, 1, 1, 1], [0], [0]>} : vector<2x8x16xf32>, vector<2x8x16xf32>, vector<2x8x8xf32> -> vector<2x8x8xf32>
    "tpu.trace_stop"() : () -> ()
    %cst_79 = arith.constant 2.500000e-01 : f32
    %221 = vector.broadcast %cst_79 : f32 to vector<2x8x8xf32>
    %222 = arith.mulf %220, %221 : vector<2x8x8xf32>
    %cst_80 = arith.constant -1.000000e+09 : f32
    %223 = vector.broadcast %cst_80 : f32 to vector<2x8x8xf32>
    %224 = arith.select %29, %222, %223 : vector<2x8x8xi1>, vector<2x8x8xf32>
    %cst_81 = arith.constant dense<0xFF800000> : vector<2x8xf32>
    %225 = vector.multi_reduction <maximumf>, %224, %cst_81 [2] : vector<2x8x8xf32> to vector<2x8xf32>
    %226 = vector.shape_cast %225 : vector<2x8xf32> to vector<2x8x1xf32>
    %227 = vector.broadcast %226 : vector<2x8x1xf32> to vector<2x8x8xf32>
    %228 = arith.subf %224, %227 : vector<2x8x8xf32>
    %229 = math.exp %228 : vector<2x8x8xf32>
    %cst_82 = arith.constant dense<0.000000e+00> : vector<2x8xf32>
    %230 = vector.multi_reduction <add>, %229, %cst_82 [2] : vector<2x8x8xf32> to vector<2x8xf32>
    %231 = vector.shape_cast %230 : vector<2x8xf32> to vector<2x8x1xf32>
    %232 = tpu.reciprocal %231 {approx = true} : vector<2x8x1xf32> -> vector<2x8x1xf32>
    %233 = vector.broadcast %232 : vector<2x8x1xf32> to vector<2x8x8xf32>
    %234 = arith.mulf %229, %233 : vector<2x8x8xf32>
    "tpu.trace_start"() <{level = 10 : i32, message = "bqk,bkd->bqd"}> : () -> ()
    %cst_83 = arith.constant dense<0.000000e+00> : vector<2x8x16xf32>
    %235 = tpu.matmul %234, %219, %cst_83 {dimension_numbers = #tpu.dot_dimension_numbers<[2], [1], [1], [2], [0, 0, 0, 1, 1, 2], [0], [0]>} : vector<2x8x8xf32>, vector<2x8x16xf32>, vector<2x8x16xf32> -> vector<2x8x16xf32>
    "tpu.trace_stop"() : () -> ()
    %c432 = arith.constant 432 : index
    %c0_84 = arith.constant 0 : index
    %236 = vector.load %arg3[%c432, %c0_84] : memref<840x128xf32, #tpu.memory_space<vmem>>, vector<32x16xf32>
    %cst_85 = arith.constant dense<0.000000e+00> : vector<16x16xf32>
    %237 = tpu.matmul %201, %236, %cst_85 {dimension_numbers = #tpu.dot_dimension_numbers<[1], [0], [0], [1], [0, 0, 1, 1], [], []>} : vector<16x32xf32>, vector<32x16xf32>, vector<16x16xf32> -> vector<16x16xf32>
    %c792 = arith.constant 792 : index
    %c0_86 = arith.constant 0 : index
    %238 = vector.load %arg3[%c792, %c0_86] : memref<840x128xf32, #tpu.memory_space<vmem>>, vector<1x16xf32>
    %239 = vector.broadcast %238 : vector<1x16xf32> to vector<16x16xf32>
    %240 = arith.addf %237, %239 : vector<16x16xf32>
    %241 = vector.shape_cast %240 : vector<16x16xf32> to vector<2x8x16xf32>
    %c496 = arith.constant 496 : index
    %c0_87 = arith.constant 0 : index
    %242 = vector.load %arg3[%c496, %c0_87] : memref<840x128xf32, #tpu.memory_space<vmem>>, vector<32x16xf32>
    %cst_88 = arith.constant dense<0.000000e+00> : vector<16x16xf32>
    %243 = tpu.matmul %201, %242, %cst_88 {dimension_numbers = #tpu.dot_dimension_numbers<[1], [0], [0], [1], [0, 0, 1, 1], [], []>} : vector<16x32xf32>, vector<32x16xf32>, vector<16x16xf32> -> vector<16x16xf32>
    %c794 = arith.constant 794 : index
    %c0_89 = arith.constant 0 : index
    %244 = vector.load %arg3[%c794, %c0_89] : memref<840x128xf32, #tpu.memory_space<vmem>>, vector<1x16xf32>
    %245 = vector.broadcast %244 : vector<1x16xf32> to vector<16x16xf32>
    %246 = arith.addf %243, %245 : vector<16x16xf32>
    %247 = vector.shape_cast %246 : vector<16x16xf32> to vector<2x8x16xf32>
    %c560 = arith.constant 560 : index
    %c0_90 = arith.constant 0 : index
    %248 = vector.load %arg3[%c560, %c0_90] : memref<840x128xf32, #tpu.memory_space<vmem>>, vector<32x16xf32>
    %cst_91 = arith.constant dense<0.000000e+00> : vector<16x16xf32>
    %249 = tpu.matmul %201, %248, %cst_91 {dimension_numbers = #tpu.dot_dimension_numbers<[1], [0], [0], [1], [0, 0, 1, 1], [], []>} : vector<16x32xf32>, vector<32x16xf32>, vector<16x16xf32> -> vector<16x16xf32>
    %c796 = arith.constant 796 : index
    %c0_92 = arith.constant 0 : index
    %250 = vector.load %arg3[%c796, %c0_92] : memref<840x128xf32, #tpu.memory_space<vmem>>, vector<1x16xf32>
    %251 = vector.broadcast %250 : vector<1x16xf32> to vector<16x16xf32>
    %252 = arith.addf %249, %251 : vector<16x16xf32>
    %253 = vector.shape_cast %252 : vector<16x16xf32> to vector<2x8x16xf32>
    "tpu.trace_start"() <{level = 10 : i32, message = "bqd,bkd->bqk"}> : () -> ()
    %cst_93 = arith.constant dense<0.000000e+00> : vector<2x8x8xf32>
    %254 = tpu.matmul %241, %247, %cst_93 {dimension_numbers = #tpu.dot_dimension_numbers<[2], [2], [1], [1], [0, 0, 0, 1, 1, 1], [0], [0]>} : vector<2x8x16xf32>, vector<2x8x16xf32>, vector<2x8x8xf32> -> vector<2x8x8xf32>
    "tpu.trace_stop"() : () -> ()
    %cst_94 = arith.constant 2.500000e-01 : f32
    %255 = vector.broadcast %cst_94 : f32 to vector<2x8x8xf32>
    %256 = arith.mulf %254, %255 : vector<2x8x8xf32>
    %cst_95 = arith.constant -1.000000e+09 : f32
    %257 = vector.broadcast %cst_95 : f32 to vector<2x8x8xf32>
    %258 = arith.select %29, %256, %257 : vector<2x8x8xi1>, vector<2x8x8xf32>
    %cst_96 = arith.constant dense<0xFF800000> : vector<2x8xf32>
    %259 = vector.multi_reduction <maximumf>, %258, %cst_96 [2] : vector<2x8x8xf32> to vector<2x8xf32>
    %260 = vector.shape_cast %259 : vector<2x8xf32> to vector<2x8x1xf32>
    %261 = vector.broadcast %260 : vector<2x8x1xf32> to vector<2x8x8xf32>
    %262 = arith.subf %258, %261 : vector<2x8x8xf32>
    %263 = math.exp %262 : vector<2x8x8xf32>
    %cst_97 = arith.constant dense<0.000000e+00> : vector<2x8xf32>
    %264 = vector.multi_reduction <add>, %263, %cst_97 [2] : vector<2x8x8xf32> to vector<2x8xf32>
    %265 = vector.shape_cast %264 : vector<2x8xf32> to vector<2x8x1xf32>
    %266 = tpu.reciprocal %265 {approx = true} : vector<2x8x1xf32> -> vector<2x8x1xf32>
    %267 = vector.broadcast %266 : vector<2x8x1xf32> to vector<2x8x8xf32>
    %268 = arith.mulf %263, %267 : vector<2x8x8xf32>
    "tpu.trace_start"() <{level = 10 : i32, message = "bqk,bkd->bqd"}> : () -> ()
    %cst_98 = arith.constant dense<0.000000e+00> : vector<2x8x16xf32>
    %269 = tpu.matmul %268, %253, %cst_98 {dimension_numbers = #tpu.dot_dimension_numbers<[2], [1], [1], [2], [0, 0, 0, 1, 1, 2], [0], [0]>} : vector<2x8x8xf32>, vector<2x8x16xf32>, vector<2x8x16xf32> -> vector<2x8x16xf32>
    "tpu.trace_stop"() : () -> ()
    %270 = tpu.concatenate %235, %269 in 2 : vector<2x8x16xf32>, vector<2x8x16xf32> -> vector<2x8x32xf32>
    %271 = vector.shape_cast %270 : vector<2x8x32xf32> to vector<16x32xf32>
    %c592 = arith.constant 592 : index
    %c0_99 = arith.constant 0 : index
    %272 = vector.load %arg3[%c592, %c0_99] : memref<840x128xf32, #tpu.memory_space<vmem>>, vector<32x32xf32>
    %cst_100 = arith.constant dense<0.000000e+00> : vector<16x32xf32>
    %273 = tpu.matmul %271, %272, %cst_100 {dimension_numbers = #tpu.dot_dimension_numbers<[1], [0], [0], [1], [0, 0, 1, 1], [], []>} : vector<16x32xf32>, vector<32x32xf32>, vector<16x32xf32> -> vector<16x32xf32>
    %274 = arith.addf %177, %273 : vector<16x32xf32>
    %c788 = arith.constant 788 : index
    %c0_101 = arith.constant 0 : index
    %275 = vector.load %arg3[%c788, %c0_101] : memref<840x128xf32, #tpu.memory_space<vmem>>, vector<1x32xf32>
    %276 = vector.broadcast %275 : vector<1x32xf32> to vector<16x32xf32>
    %277 = arith.addf %274, %276 : vector<16x32xf32>
    %c786 = arith.constant 786 : index
    %c0_102 = arith.constant 0 : index
    %278 = vector.load %arg3[%c786, %c0_102] : memref<840x128xf32, #tpu.memory_space<vmem>>, vector<1x32xf32>
    %c787 = arith.constant 787 : index
    %c0_103 = arith.constant 0 : index
    %279 = vector.load %arg3[%c787, %c0_103] : memref<840x128xf32, #tpu.memory_space<vmem>>, vector<1x32xf32>
    %cst_104 = arith.constant dense<0.000000e+00> : vector<16xf32>
    %280 = vector.multi_reduction <add>, %277, %cst_104 [1] : vector<16x32xf32> to vector<16xf32>
    %281 = vector.shape_cast %280 : vector<16xf32> to vector<16x1xf32>
    %cst_105 = arith.constant 3.200000e+01 : f32
    %282 = vector.broadcast %cst_105 : f32 to vector<16x1xf32>
    %283 = arith.divf %281, %282 : vector<16x1xf32>
    %284 = vector.broadcast %283 : vector<16x1xf32> to vector<16x32xf32>
    %285 = arith.subf %277, %284 : vector<16x32xf32>
    %286 = arith.mulf %285, %285 : vector<16x32xf32>
    %cst_106 = arith.constant dense<0.000000e+00> : vector<16xf32>
    %287 = vector.multi_reduction <add>, %286, %cst_106 [1] : vector<16x32xf32> to vector<16xf32>
    %288 = vector.shape_cast %287 : vector<16xf32> to vector<16x1xf32>
    %cst_107 = arith.constant 3.200000e+01 : f32
    %289 = vector.broadcast %cst_107 : f32 to vector<16x1xf32>
    %290 = arith.divf %288, %289 : vector<16x1xf32>
    %291 = vector.broadcast %283 : vector<16x1xf32> to vector<16x32xf32>
    %292 = arith.subf %277, %291 : vector<16x32xf32>
    %cst_108 = arith.constant 9.99999974E-6 : f32
    %293 = vector.broadcast %cst_108 : f32 to vector<16x1xf32>
    %294 = arith.addf %290, %293 : vector<16x1xf32>
    %295 = math.rsqrt %294 : vector<16x1xf32>
    %296 = vector.broadcast %295 : vector<16x1xf32> to vector<16x32xf32>
    %297 = arith.mulf %292, %296 : vector<16x32xf32>
    %298 = vector.broadcast %278 : vector<1x32xf32> to vector<16x32xf32>
    %299 = arith.mulf %297, %298 : vector<16x32xf32>
    %300 = vector.broadcast %279 : vector<1x32xf32> to vector<16x32xf32>
    %301 = arith.addf %299, %300 : vector<16x32xf32>
    %c624 = arith.constant 624 : index
    %c0_109 = arith.constant 0 : index
    %302 = vector.load %arg3[%c624, %c0_109] : memref<840x128xf32, #tpu.memory_space<vmem>>, vector<32x128xf32>
    %c656 = arith.constant 656 : index
    %c0_110 = arith.constant 0 : index
    %303 = vector.load %arg3[%c656, %c0_110] : memref<840x128xf32, #tpu.memory_space<vmem>>, vector<128x32xf32>
    %cst_111 = arith.constant dense<0.000000e+00> : vector<16x128xf32>
    %304 = tpu.matmul %301, %302, %cst_111 {dimension_numbers = #tpu.dot_dimension_numbers<[1], [0], [0], [1], [0, 0, 1, 1], [], []>} : vector<16x32xf32>, vector<32x128xf32>, vector<16x128xf32> -> vector<16x128xf32>
    %c790 = arith.constant 790 : index
    %c0_112 = arith.constant 0 : index
    %305 = vector.load %arg3[%c790, %c0_112] : memref<840x128xf32, #tpu.memory_space<vmem>>, vector<1x128xf32>
    %306 = vector.broadcast %305 : vector<1x128xf32> to vector<16x128xf32>
    %307 = arith.addf %304, %306 : vector<16x128xf32>
    %308 = arith.mulf %307, %307 : vector<16x128xf32>
    %309 = arith.mulf %307, %308 : vector<16x128xf32>
    %cst_113 = arith.constant 4.471500e-02 : f32
    %310 = vector.broadcast %cst_113 : f32 to vector<16x128xf32>
    %311 = arith.mulf %310, %309 : vector<16x128xf32>
    %312 = arith.addf %307, %311 : vector<16x128xf32>
    %cst_114 = arith.constant 0.797884583 : f32
    %313 = vector.broadcast %cst_114 : f32 to vector<16x128xf32>
    %314 = arith.mulf %313, %312 : vector<16x128xf32>
    %315 = math.tanh %314 : vector<16x128xf32>
    %cst_115 = arith.constant 1.000000e+00 : f32
    %316 = vector.broadcast %cst_115 : f32 to vector<16x128xf32>
    %317 = arith.addf %316, %315 : vector<16x128xf32>
    %cst_116 = arith.constant 5.000000e-01 : f32
    %318 = vector.broadcast %cst_116 : f32 to vector<16x128xf32>
    %319 = arith.mulf %318, %317 : vector<16x128xf32>
    %320 = arith.mulf %307, %319 : vector<16x128xf32>
    %cst_117 = arith.constant dense<0.000000e+00> : vector<16x32xf32>
    %321 = tpu.matmul %320, %303, %cst_117 {dimension_numbers = #tpu.dot_dimension_numbers<[1], [0], [0], [1], [0, 0, 1, 1], [], []>} : vector<16x128xf32>, vector<128x32xf32>, vector<16x32xf32> -> vector<16x32xf32>
    %c789 = arith.constant 789 : index
    %c0_118 = arith.constant 0 : index
    %322 = vector.load %arg3[%c789, %c0_118] : memref<840x128xf32, #tpu.memory_space<vmem>>, vector<1x32xf32>
    %323 = vector.broadcast %322 : vector<1x32xf32> to vector<16x32xf32>
    %324 = arith.addf %321, %323 : vector<16x32xf32>
    %325 = arith.addf %277, %324 : vector<16x32xf32>
    %c0_119 = arith.constant 0 : index
    %c0_120 = arith.constant 0 : index
    %326 = vector.load %arg5[%c0_119, %c0_120] : memref<16x32xf32, #tpu.memory_space<vmem>>, vector<16x32xf32>
    tpu.vector_store %arg5[%c0_119, %c0_120], %325 {strides = array<i32>} : memref<16x32xf32, #tpu.memory_space<vmem>>, vector<16x32xf32>,
    %c0_121 = arith.constant 0 : index
    %327 = memref.load %arg1[%c0_121] : memref<2xi32, #tpu.memory_space<smem>>
    %328 = arith.index_cast %327 : i32 to index
    %c0_122 = arith.constant 0 : index
    %329 = vector.load %arg5[%328, %c0_122] : memref<16x32xf32, #tpu.memory_space<vmem>>, vector<1x32xf32>
    %c0_123 = arith.constant 0 : index
    %c0_124 = arith.constant 0 : index
    %330 = vector.load %arg6[%c0_123, %c0_124] : memref<2x32xf32, #tpu.memory_space<vmem>>, vector<1x32xf32>
    tpu.vector_store %arg6[%c0_123, %c0_124], %329 {strides = array<i32>} : memref<2x32xf32, #tpu.memory_space<vmem>>, vector<1x32xf32>,
    %c1 = arith.constant 1 : index
    %331 = memref.load %arg1[%c1] : memref<2xi32, #tpu.memory_space<smem>>
    %332 = arith.index_cast %331 : i32 to index
    %c0_125 = arith.constant 0 : index
    %333 = vector.load %arg5[%332, %c0_125] : memref<16x32xf32, #tpu.memory_space<vmem>>, vector<1x32xf32>
    %c1_126 = arith.constant 1 : index
    %c0_127 = arith.constant 0 : index
    %334 = vector.load %arg6[%c1_126, %c0_127] : memref<2x32xf32, #tpu.memory_space<vmem>>, vector<1x32xf32>
    tpu.vector_store %arg6[%c1_126, %c0_127], %333 {strides = array<i32>} : memref<2x32xf32, #tpu.memory_space<vmem>>, vector<1x32xf32>,
    %c0_128 = arith.constant 0 : index
    %c0_129 = arith.constant 0 : index
    %335 = vector.load %arg6[%c0_128, %c0_129] : memref<2x32xf32, #tpu.memory_space<vmem>>, vector<2x32xf32>
    %c832 = arith.constant 832 : index
    %c0_130 = arith.constant 0 : index
    %336 = vector.load %arg3[%c832, %c0_130] : memref<840x128xf32, #tpu.memory_space<vmem>>, vector<1x32xf32>
    %c833 = arith.constant 833 : index
    %c0_131 = arith.constant 0 : index
    %337 = vector.load %arg3[%c833, %c0_131] : memref<840x128xf32, #tpu.memory_space<vmem>>, vector<1x32xf32>
    %cst_132 = arith.constant dense<0.000000e+00> : vector<2xf32>
    %338 = vector.multi_reduction <add>, %335, %cst_132 [1] : vector<2x32xf32> to vector<2xf32>
    %339 = vector.shape_cast %338 : vector<2xf32> to vector<2x1xf32>
    %cst_133 = arith.constant 3.200000e+01 : f32
    %340 = vector.broadcast %cst_133 : f32 to vector<2x1xf32>
    %341 = arith.divf %339, %340 : vector<2x1xf32>
    %342 = vector.broadcast %341 : vector<2x1xf32> to vector<2x32xf32>
    %343 = arith.subf %335, %342 : vector<2x32xf32>
    %344 = arith.mulf %343, %343 : vector<2x32xf32>
    %cst_134 = arith.constant dense<0.000000e+00> : vector<2xf32>
    %345 = vector.multi_reduction <add>, %344, %cst_134 [1] : vector<2x32xf32> to vector<2xf32>
    %346 = vector.shape_cast %345 : vector<2xf32> to vector<2x1xf32>
    %cst_135 = arith.constant 3.200000e+01 : f32
    %347 = vector.broadcast %cst_135 : f32 to vector<2x1xf32>
    %348 = arith.divf %346, %347 : vector<2x1xf32>
    %349 = vector.broadcast %341 : vector<2x1xf32> to vector<2x32xf32>
    %350 = arith.subf %335, %349 : vector<2x32xf32>
    %cst_136 = arith.constant 9.99999974E-6 : f32
    %351 = vector.broadcast %cst_136 : f32 to vector<2x1xf32>
    %352 = arith.addf %348, %351 : vector<2x1xf32>
    %353 = math.rsqrt %352 : vector<2x1xf32>
    %354 = vector.broadcast %353 : vector<2x1xf32> to vector<2x32xf32>
    %355 = arith.mulf %350, %354 : vector<2x32xf32>
    %356 = vector.broadcast %336 : vector<1x32xf32> to vector<2x32xf32>
    %357 = arith.mulf %355, %356 : vector<2x32xf32>
    %358 = vector.broadcast %337 : vector<1x32xf32> to vector<2x32xf32>
    %359 = arith.addf %357, %358 : vector<2x32xf32>
    %c800 = arith.constant 800 : index
    %c0_137 = arith.constant 0 : index
    %360 = vector.load %arg3[%c800, %c0_137] : memref<840x128xf32, #tpu.memory_space<vmem>>, vector<32x64xf32>
    %cst_138 = arith.constant dense<0.000000e+00> : vector<2x64xf32>
    %361 = tpu.matmul %359, %360, %cst_138 {dimension_numbers = #tpu.dot_dimension_numbers<[1], [0], [0], [1], [0, 0, 1, 1], [], []>} : vector<2x32xf32>, vector<32x64xf32>, vector<2x64xf32> -> vector<2x64xf32>
    %c0_139 = arith.constant 0 : index
    %c0_140 = arith.constant 0 : index
    %362 = vector.load %arg4[%c0_139, %c0_140] : memref<2x64xf32, #tpu.memory_space<vmem>>, vector<2x64xf32>
    tpu.vector_store %arg4[%c0_139, %c0_140], %361 {strides = array<i32>} : memref<2x64xf32, #tpu.memory_space<vmem>>, vector<2x64xf32>,
    return
  }
}

</mosaic_0001>

<llo_original>
// kernel: decoder_retrieval_forward.1
$region0: #{decoder_retrieval_forward.1}
  #allocation0 [shape = 'u32[]', space=smem, size = 0x4, offset = 0x4, fixed_abs, tag = 'smem constant byte address 0x4 - core index']
  #allocation1 [shape = 'u32[144,128]{1,0:T(1,128)}', space=vmem, size = 0x12000, scoped, tag = 'internal scratch']
  #allocation2 [shape = 'f32[16,32]{1,0:T(8,128)}', space=vmem, size = 0x2000, scoped, tag = 'scratch operand']
  #allocation3 [shape = 'f32[2,32]{1,0:T(2,128)}', space=vmem, size = 0x400, scoped, tag = 'scratch operand']
  %s0 = inlined_call_operand.vmem [shape: s32[2,8,4], index: 0, kind: input, shape index: {}]
  %s1 = inlined_call_operand.vmem [shape: s32[2], index: 1, kind: input, shape index: {}]
  %s2 = inlined_call_operand.vmem [shape: f32[384,32], index: 2, kind: input, shape index: {}]
  %s3 = inlined_call_operand.hbm [shape: f32[840,128], index: 3, kind: input, shape index: {}]
  %s4 = inlined_call_operand.hbm [shape: f32[2,64], index: 4, kind: output, shape index: {}]
  %s5 = sld [smem:[#allocation0]]
  $region34: #{decoder_retrieval_forward.1} parent=0
    _
  %s7 = ssub.s32 1, %s5
  %s8 = scalar_select 0, %s7, %s5
  $region1: #{decoder_retrieval_forward.1} parent=0
    #allocation4 [shape = 'u8[512]{0}', space=smem, size = 0x200, scoped, tag = 'input window, operand 1, single buffered']
    #allocation5 [shape = 's32[1]{0}', space=sflag, size = 0x4, scoped, tag = 'scoped memory for decoder_retrieval_forward.1']
    #allocation6 [shape = 's32[1]{0}', space=sflag, size = 0x4, scoped, tag = 'scoped memory for decoder_retrieval_forward.1']
    #allocation7 [shape = 's32[1]{0}', space=sflag, size = 0x4, scoped, tag = 'scoped memory for decoder_retrieval_forward.1']
    #allocation8 [shape = 'u8[430080]{0}', space=vmem, size = 0x69000, scoped, tag = 'input window, operand 3, single buffered']
    #allocation9 [shape = 'u8[1024]{0}', space=vmem, size = 0x400, scoped, tag = 'output window, operand 0, single buffered']
    %9 = vsyncpa [#allocation7], 0
    %10 = vsyncpa [#allocation5], 0
    %11 = vsyncpa [#allocation6], 0
    // Predicated region
    $region2: #{decoder_retrieval_forward.1} parent=1 // pred_check
      _
    $region3: #{decoder_retrieval_forward.1} parent=1 // pred_check_branch
      %13 = sbr.rel (0) target = $region5
    $region4: #{decoder_retrieval_forward.1} parent=1 // pred_region
      _
    $region5: #{decoder_retrieval_forward.1} parent=1 // pred_fallthru
      _
    // Predicated region
    $region6: #{decoder_retrieval_forward.1} parent=1 // pred_check
      _
    $region7: #{decoder_retrieval_forward.1} parent=1 // pred_check_branch
      %15 = sbr.rel (0) target = $region9
    $region8: #{decoder_retrieval_forward.1} parent=1 // pred_region
      %s17 = ssub.s32 16, 16
      %18 = vsyncadd [#allocation7], %s17
      %s20 = sshll.u32 %s1, 4
      %s21 = int_to_ptr.vmem [resolvable:$true] %s20
      %23 = dma.vmem_to_smem %s21, 16, [#allocation4], [#allocation7]
    $region9: #{decoder_retrieval_forward.1} parent=1 // pred_fallthru
      _
    // Predicated region
    $region10: #{decoder_retrieval_forward.1} parent=1 // pred_check
      _
    $region11: #{decoder_retrieval_forward.1} parent=1 // pred_check_branch
      %25 = sbr.rel (0) target = $region13
    $region12: #{decoder_retrieval_forward.1} parent=1 // pred_region
      _
    $region13: #{decoder_retrieval_forward.1} parent=1 // pred_fallthru
      _
    // Predicated region
    $region14: #{decoder_retrieval_forward.1} parent=1 // pred_check
      _
    $region15: #{decoder_retrieval_forward.1} parent=1 // pred_check_branch
      %27 = sbr.rel (0) target = $region17
    $region16: #{decoder_retrieval_forward.1} parent=1 // pred_region
      %s29 = ssub.s32 13440, 13440
      %30 = vsyncadd [#allocation5], %s29
      %s31 = sshll.u32 [#allocation8], 4
      %s32 = int_to_ptr.vmem [resolvable:$true] %s31
      %37 = dma.hbm_to_vmem [thread:$0]  %s3, 13440, %s32, [#allocation5], 128, 128, 8
    $region17: #{decoder_retrieval_forward.1} parent=1 // pred_fallthru
      _
    // Predicated region
    $region18: #{decoder_retrieval_forward.1} parent=1 // pred_check
      _
    $region19: #{decoder_retrieval_forward.1} parent=1 // pred_check_branch
      %39 = sbr.rel (0) target = $region21
    $region20: #{decoder_retrieval_forward.1} parent=1 // pred_region
      %40 = dma.done [#allocation7], 16
    $region21: #{decoder_retrieval_forward.1} parent=1 // pred_fallthru
      _
    // Predicated region
    $region22: #{decoder_retrieval_forward.1} parent=1 // pred_check
      _
    $region23: #{decoder_retrieval_forward.1} parent=1 // pred_check_branch
      %42 = sbr.rel (0) target = $region25
    $region24: #{decoder_retrieval_forward.1} parent=1 // pred_region
      %43 = dma.done [#allocation5], 13440
    $region25: #{decoder_retrieval_forward.1} parent=1 // pred_fallthru
      _
    %44 = sfence
    %v45 = vld [vmem:[%s0] sm:$0xff]
    %v46 = vld [vmem:[%s0 + $0x8] sm:$0xff]
    %v47 = vlaneseq
    %v48 = vand.u32 %v47, 127
    %v49 = vadd.s32 %v48, 128
    %v50 = vadd.s32 %v48, 256
    %51 = vset.pattern.permute.xlu0 0
    %52 = vperm.xlu0 %51, %v45
    %v53 = vpop.permute.xlu0 %52
    %54 = vset.pattern.permute.xlu0 0
    %55 = vperm.xlu0 %54, %v46
    %v56 = vpop.permute.xlu0 %55
    %vm57 = vcmp.eq.s32.totalorder %v48, %v53
    %vm58 = vcmp.eq.s32.totalorder %v49, %v53
    %vm59 = vcmp.eq.s32.totalorder %v50, %v53
    %vm60 = vcmp.eq.s32.totalorder %v48, %v56
    %vm61 = vcmp.eq.s32.totalorder %v49, %v56
    %vm62 = vcmp.eq.s32.totalorder %v50, %v56
    %63 = vset.pattern.permute.xlu0 1
    %64 = vperm.xlu0 %63, %v45
    %v65 = vpop.permute.xlu0 %64
    %66 = vset.pattern.permute.xlu0 1
    %67 = vperm.xlu0 %66, %v46
    %v68 = vpop.permute.xlu0 %67
    %vm69 = vcmp.eq.s32.totalorder %v48, %v65
    %vm70 = vcmp.eq.s32.totalorder %v49, %v65
    %vm71 = vcmp.eq.s32.totalorder %v50, %v65
    %vm72 = vcmp.eq.s32.totalorder %v48, %v68
    %vm73 = vcmp.eq.s32.totalorder %v49, %v68
    %vm74 = vcmp.eq.s32.totalorder %v50, %v68
    %vm75 = vmor %vm57, %vm69
    %vm76 = vmor %vm58, %vm70
    %vm77 = vmor %vm59, %vm71
    %vm78 = vmor %vm60, %vm72
    %vm79 = vmor %vm61, %vm73
    %vm80 = vmor %vm62, %vm74
    %81 = vset.pattern.permute.xlu0 2
    %82 = vperm.xlu0 %81, %v45
    %v83 = vpop.permute.xlu0 %82
    %84 = vset.pattern.permute.xlu0 2
    %85 = vperm.xlu0 %84, %v46
    %v86 = vpop.permute.xlu0 %85
    %vm87 = vcmp.eq.s32.totalorder %v48, %v83
    %vm88 = vcmp.eq.s32.totalorder %v49, %v83
    %vm89 = vcmp.eq.s32.totalorder %v50, %v83
    %vm90 = vcmp.eq.s32.totalorder %v48, %v86
    %vm91 = vcmp.eq.s32.totalorder %v49, %v86
    %vm92 = vcmp.eq.s32.totalorder %v50, %v86
    %vm93 = vmor %vm75, %vm87
    %vm94 = vmor %vm76, %vm88
    %vm95 = vmor %vm77, %vm89
    %vm96 = vmor %vm78, %vm90
    %vm97 = vmor %vm79, %vm91
    %vm98 = vmor %vm80, %vm92
    %v99 = vsel %vm93, 1, 0
    %v100 = vsel %vm94, 1, 0
    %v101 = vsel %vm95, 1, 0
    %v102 = vsel %vm96, 1, 0
    %v103 = vsel %vm97, 1, 0
    %v104 = vsel %vm98, 1, 0
    %v105 = vcvt.s32.f32 %v99
    %v106 = vcvt.s32.f32 %v100
    %v107 = vcvt.s32.f32 %v101
    %v108 = vcvt.s32.f32 %v102
    %v109 = vcvt.s32.f32 %v103
    %v110 = vcvt.s32.f32 %v104
    %v111 = vld [vmem:[%s2] sm:$0xff]
    %v112 = vld [vmem:[%s2 + $0x8] sm:$0xff]
    %v113 = vld [vmem:[%s2 + $0x10] sm:$0xff]
    %v114 = vld [vmem:[%s2 + $0x18] sm:$0xff]
    %v115 = vld [vmem:[%s2 + $0x20] sm:$0xff]
    %v116 = vld [vmem:[%s2 + $0x28] sm:$0xff]
    %v117 = vld [vmem:[%s2 + $0x30] sm:$0xff]
    %v118 = vld [vmem:[%s2 + $0x38] sm:$0xff]
    %v119 = vld [vmem:[%s2 + $0x40] sm:$0xff]
    %v120 = vld [vmem:[%s2 + $0x48] sm:$0xff]
    %v121 = vld [vmem:[%s2 + $0x50] sm:$0xff]
    %v122 = vld [vmem:[%s2 + $0x58] sm:$0xff]
    %v123 = vld [vmem:[%s2 + $0x60] sm:$0xff]
    %v124 = vld [vmem:[%s2 + $0x68] sm:$0xff]
    %v125 = vld [vmem:[%s2 + $0x70] sm:$0xff]
    %v126 = vld [vmem:[%s2 + $0x78] sm:$0xff]
    %v127 = vld [vmem:[%s2 + $0x80] sm:$0xff]
    %v128 = vld [vmem:[%s2 + $0x88] sm:$0xff]
    %v129 = vld [vmem:[%s2 + $0x90] sm:$0xff]
    %v130 = vld [vmem:[%s2 + $0x98] sm:$0xff]
    %v131 = vld [vmem:[%s2 + $0xa0] sm:$0xff]
    %v132 = vld [vmem:[%s2 + $0xa8] sm:$0xff]
    %v133 = vld [vmem:[%s2 + $0xb0] sm:$0xff]
    %v134 = vld [vmem:[%s2 + $0xb8] sm:$0xff]
    %v135 = vld [vmem:[%s2 + $0xc0] sm:$0xff]
    %v136 = vld [vmem:[%s2 + $0xc8] sm:$0xff]
    %v137 = vld [vmem:[%s2 + $0xd0] sm:$0xff]
    %v138 = vld [vmem:[%s2 + $0xd8] sm:$0xff]
    %v139 = vld [vmem:[%s2 + $0xe0] sm:$0xff]
    %v140 = vld [vmem:[%s2 + $0xe8] sm:$0xff]
    %v141 = vld [vmem:[%s2 + $0xf0] sm:$0xff]
    %v142 = vld [vmem:[%s2 + $0xf8] sm:$0xff]
    %v143 = vld [vmem:[%s2 + $0x100] sm:$0xff]
    %v144 = vld [vmem:[%s2 + $0x108] sm:$0xff]
    %v145 = vld [vmem:[%s2 + $0x110] sm:$0xff]
    %v146 = vld [vmem:[%s2 + $0x118] sm:$0xff]
    %v147 = vld [vmem:[%s2 + $0x120] sm:$0xff]
    %v148 = vld [vmem:[%s2 + $0x128] sm:$0xff]
    %v149 = vld [vmem:[%s2 + $0x130] sm:$0xff]
    %v150 = vld [vmem:[%s2 + $0x138] sm:$0xff]
    %v151 = vld [vmem:[%s2 + $0x140] sm:$0xff]
    %v152 = vld [vmem:[%s2 + $0x148] sm:$0xff]
    %v153 = vld [vmem:[%s2 + $0x150] sm:$0xff]
    %v154 = vld [vmem:[%s2 + $0x158] sm:$0xff]
    %v155 = vld [vmem:[%s2 + $0x160] sm:$0xff]
    %v156 = vld [vmem:[%s2 + $0x168] sm:$0xff]
    %v157 = vld [vmem:[%s2 + $0x170] sm:$0xff]
    %v158 = vld [vmem:[%s2 + $0x178] sm:$0xff]
    %159 = vmatprep.subr.mxu0 0.0
    %160 = vmatpush1.msra.mxu0 %v111
    %161 = vmatprep.subr.mxu0 0.0
    %162 = vmatpush1.msra.mxu0 %v112
    %163 = vmatprep.subr.mxu0 0.0
    %164 = vmatpush1.msra.mxu0 %v113
    %165 = vmatprep.subr.mxu0 0.0
    %166 = vmatpush1.msra.mxu0 %v114
    %167 = vmatprep.subr.mxu0 0.0
    %168 = vmatpush1.msra.mxu0 %v115
    %169 = vmatprep.subr.mxu0 0.0
    %170 = vmatpush1.msra.mxu0 %v116
    %171 = vmatprep.subr.mxu0 0.0
    %172 = vmatpush1.msra.mxu0 %v117
    %173 = vmatprep.subr.mxu0 0.0
    %174 = vmatpush1.msra.mxu0 %v118
    %175 = vmatprep.subr.mxu0 0.0
    %176 = vmatpush1.msra.mxu0 %v119
    %177 = vmatprep.subr.mxu0 0.0
    %178 = vmatpush1.msra.mxu0 %v120
    %179 = vmatprep.subr.mxu0 0.0
    %180 = vmatpush1.msra.mxu0 %v121
    %181 = vmatprep.subr.mxu0 0.0
    %182 = vmatpush1.msra.mxu0 %v122
    %183 = vmatprep.subr.mxu0 0.0
    %184 = vmatpush1.msra.mxu0 %v123
    %185 = vmatprep.subr.mxu0 0.0
    %186 = vmatpush1.msra.mxu0 %v124
    %187 = vmatprep.subr.mxu0 0.0
    %188 = vmatpush1.msra.mxu0 %v125
    %189 = vmatprep.subr.mxu0 0.0
    %190 = vmatpush1.msra.mxu0 %v126
    %191 = vmatprep.subr.mxu0 0.0
    %192 = vmatpush1.msra.mxu0 %v127
    %193 = vmatprep.subr.mxu0 0.0
    %194 = vmatpush1.msra.mxu0 %v128
    %195 = vmatprep.subr.mxu0 0.0
    %196 = vmatpush1.msra.mxu0 %v129
    %197 = vmatprep.subr.mxu0 0.0
    %198 = vmatpush1.msra.mxu0 %v130
    %199 = vmatprep.subr.mxu0 0.0
    %200 = vmatpush1.msra.mxu0 %v131
    %201 = vmatprep.subr.mxu0 0.0
    %202 = vmatpush1.msra.mxu0 %v132
    %203 = vmatprep.subr.mxu0 0.0
    %204 = vmatpush1.msra.mxu0 %v133
    %205 = vmatprep.subr.mxu0 0.0
    %206 = vmatpush1.msra.mxu0 %v134
    %207 = vmatprep.subr.mxu0 0.0
    %208 = vmatpush1.msra.mxu0 %v135
    %209 = vmatprep.subr.mxu0 0.0
    %210 = vmatpush1.msra.mxu0 %v136
    %211 = vmatprep.subr.mxu0 0.0
    %212 = vmatpush1.msra.mxu0 %v137
    %213 = vmatprep.subr.mxu0 0.0
    %214 = vmatpush1.msra.mxu0 %v138
    %215 = vmatprep.subr.mxu0 0.0
    %216 = vmatpush1.msra.mxu0 %v139
    %217 = vmatprep.subr.mxu0 0.0
    %218 = vmatpush1.msra.mxu0 %v140
    %219 = vmatprep.subr.mxu0 0.0
    %220 = vmatpush1.msra.mxu0 %v141
    %221 = vmatprep.subr.mxu0 0.0
    %222 = vmatpush1.msra.mxu0 %v142
    %223 = vmatprep.mubr.f32.mxu0 %v106
    %224 = vmatmul.mubr.f32.gmra.mrb[0].mxu0 %v105
    %v225 = vpop.f32.mrb[0].mxu0
    %v226 = vadd.f32 0.0, %v225
    %v227 = vpop.f32.mrb[0].mxu0
    %228 = vmatprep.mubr.f32.mxu0 %v109
    %229 = vmatmul.mubr.f32.gmra.mrb[0].mxu0 %v108
    %v230 = vpop.f32.mrb[0].mxu0
    %v231 = vadd.f32 0.0, %v230
    %v232 = vpop.f32.mrb[0].mxu0
    %233 = vdwg.mxu0
    %234 = vmatprep.subr.mxu0 0.0
    %235 = vmatpush1.msra.mxu0 %v143
    %236 = vmatprep.subr.mxu0 0.0
    %237 = vmatpush1.msra.mxu0 %v144
    %238 = vmatprep.subr.mxu0 0.0
    %239 = vmatpush1.msra.mxu0 %v145
    %240 = vmatprep.subr.mxu0 0.0
    %241 = vmatpush1.msra.mxu0 %v146
    %242 = vmatprep.subr.mxu0 0.0
    %243 = vmatpush1.msra.mxu0 %v147
    %244 = vmatprep.subr.mxu0 0.0
    %245 = vmatpush1.msra.mxu0 %v148
    %246 = vmatprep.subr.mxu0 0.0
    %247 = vmatpush1.msra.mxu0 %v149
    %248 = vmatprep.subr.mxu0 0.0
    %249 = vmatpush1.msra.mxu0 %v150
    %250 = vmatprep.subr.mxu0 0.0
    %251 = vmatpush1.msra.mxu0 %v151
    %252 = vmatprep.subr.mxu0 0.0
    %253 = vmatpush1.msra.mxu0 %v152
    %254 = vmatprep.subr.mxu0 0.0
    %255 = vmatpush1.msra.mxu0 %v153
    %256 = vmatprep.subr.mxu0 0.0
    %257 = vmatpush1.msra.mxu0 %v154
    %258 = vmatprep.subr.mxu0 0.0
    %259 = vmatpush1.msra.mxu0 %v155
    %260 = vmatprep.subr.mxu0 0.0
    %261 = vmatpush1.msra.mxu0 %v156
    %262 = vmatprep.subr.mxu0 0.0
    %263 = vmatpush1.msra.mxu0 %v157
    %264 = vmatprep.subr.mxu0 0.0
    %265 = vmatpush1.msra.mxu0 %v158
    %266 = vmatprep.subr.mxu0 0.0
    %267 = vmatpush1.msra.mxu0 0.0
    %268 = vmatprep.subr.mxu0 0.0
    %269 = vmatpush1.msra.mxu0 0.0
    %270 = vmatprep.subr.mxu0 0.0
    %271 = vmatpush1.msra.mxu0 0.0
    %272 = vmatprep.subr.mxu0 0.0
    %273 = vmatpush1.msra.mxu0 0.0
    %274 = vmatprep.subr.mxu0 0.0
    %275 = vmatpush1.msra.mxu0 0.0
    %276 = vmatprep.subr.mxu0 0.0
    %277 = vmatpush1.msra.mxu0 0.0
    %278 = vmatprep.subr.mxu0 0.0
    %279 = vmatpush1.msra.mxu0 0.0
    %280 = vmatprep.subr.mxu0 0.0
    %281 = vmatpush1.msra.mxu0 0.0
    %282 = vmatprep.subr.mxu0 0.0
    %283 = vmatpush1.msra.mxu0 0.0
    %284 = vmatprep.subr.mxu0 0.0
    %285 = vmatpush1.msra.mxu0 0.0
    %286 = vmatprep.subr.mxu0 0.0
    %287 = vmatpush1.msra.mxu0 0.0
    %288 = vmatprep.subr.mxu0 0.0
    %289 = vmatpush1.msra.mxu0 0.0
    %290 = vmatprep.subr.mxu0 0.0
    %291 = vmatpush1.msra.mxu0 0.0
    %292 = vmatprep.subr.mxu0 0.0
    %293 = vmatpush1.msra.mxu0 0.0
    %294 = vmatprep.subr.mxu0 0.0
    %295 = vmatpush1.msra.mxu0 0.0
    %296 = vmatprep.subr.mxu0 0.0
    %297 = vmatpush1.msra.mxu0 0.0
    %298 = vmatprep.mubr.f32.mxu0 0.0
    %299 = vmatmul.mubr.f32.gmra.mrb[0].mxu0 %v107
    %v300 = vpop.f32.mrb[0].mxu0
    %v301 = vadd.f32 %v226, %v300
    %v302 = vpop.f32.mrb[0].mxu0
    %303 = vmatprep.mubr.f32.mxu0 0.0
    %304 = vmatmul.mubr.f32.gmra.mrb[0].mxu0 %v110
    %v305 = vpop.f32.mrb[0].mxu0
    %v306 = vadd.f32 %v231, %v305
    %v307 = vpop.f32.mrb[0].mxu0
    %308 = vdwg.mxu0
    %vm309 = vcmp.gt.s32.totalorder %v45, 0
    %vm310 = vcmp.gt.s32.totalorder %v46, 0
    %v311 = vlaneseq
    %v312 = vshrl.u32 %v311, 7
    %vm313 = vcmp.le.s32.totalorder %v48, %v312
    %v314 = vsel %vm313, 1, 0
    %vm315 = vcmp.eq.s32.totalorder %v314, 1
    %v316 = vsel %vm309, 1, 0
    %v317 = vsel %vm310, 1, 0
    %vm318 = vcmp.eq.s32.totalorder %v316, 1
    %vm319 = vcmp.eq.s32.totalorder %v317, 1
    %v320 = vsel %vm318, 1, 0
    %v321 = vsel %vm319, 1, 0
    %322 = vset.pattern.permute.xlu0 3
    %323 = vperm.xlu0 %322, %v320
    %v324 = vpop.permute.xlu0 %323
    %325 = vset.pattern.permute.xlu0 3
    %326 = vperm.xlu0 %325, %v321
    %v327 = vpop.permute.xlu0 %326
    %v328 = vlaneseq
    %v329 = vshrl.u32 %v328, 7
    %v330 = vsub.s32 %v48, %v329
    %v331 = vrot.slane %v324, %v330
    %v332 = vlaneseq
    %v333 = vshrl.u32 %v332, 7
    %v334 = vsub.s32 %v48, %v333
    %v335 = vrot.slane %v327, %v334
    %vm336 = vcmask 1042434
    %v337 = vsel %vm336, %v331, %v331
    %vm338 = vcmask 1043459
    %v339 = vsel %vm338, %v331, %v337
    %vm340 = vcmask 1044484
    %v341 = vsel %vm340, %v331, %v339
    %vm342 = vcmask 1045509
    %v343 = vsel %vm342, %v331, %v341
    %vm344 = vcmask 1046534
    %v345 = vsel %vm344, %v331, %v343
    %vm346 = vcmask 1047559
    %v347 = vsel %vm346, %v331, %v345
    %v348 = vsel %vm336, %v335, %v335
    %v349 = vsel %vm338, %v335, %v348
    %v350 = vsel %vm340, %v335, %v349
    %v351 = vsel %vm342, %v335, %v350
    %v352 = vsel %vm344, %v335, %v351
    %v353 = vsel %vm346, %v335, %v352
    %vm354 = vcmp.ne.s32.totalorder %v347, 0
    %vm355 = vcmp.ne.s32.totalorder %v353, 0
    %vm356 = vmand %vm315, %vm354
    %vm357 = vmand %vm315, %vm355
    %v358 = vld [vmem:[#allocation8 + $0x180] sm:$0x1]
    %v359 = vld [vmem:[#allocation8 + $0x181] sm:$0x1]
    %vm360 = vcmask 261120
    %v361 = vsel %vm360, %v301, 0.0
    %362 = vadd.xlane.f32.xlu0 %v361
    %v363 = vpop.xlane.xlu0 %362
    %v364 = vsel %vm360, %v306, 0.0
    %365 = vadd.xlane.f32.xlu0 %v364
    %v366 = vpop.xlane.xlu0 %365
    %v367 = vrcp.pop 32.0
    %v368 = vmul.f32 %v363, %v367
    %v369 = vmul.f32 %v366, %v367
    %v370 = vsub.f32 %v301, %v368
    %v371 = vsub.f32 %v306, %v369
    %v372 = vmul.f32 %v370, %v370
    %v373 = vmul.f32 %v371, %v371
    %v374 = vsel %vm360, %v372, 0.0
    %375 = vadd.xlane.f32.xlu0 %v374
    %v376 = vpop.xlane.xlu0 %375
    %v377 = vsel %vm360, %v373, 0.0
    %378 = vadd.xlane.f32.xlu0 %v377
    %v379 = vpop.xlane.xlu0 %378
    %v380 = vmul.f32 %v376, %v367
    %v381 = vmul.f32 %v379, %v367
    %v382 = vadd.f32 %v380, 1e-05
    %v383 = vadd.f32 %v381, 1e-05
    %v384 = vrsqrt.pop %v382
    %v385 = vrsqrt.pop %v383
    %v386 = vmul.f32 %v370, %v384
    %v387 = vmul.f32 %v371, %v385
    %v388 = vlaneseq
    %v389 = vshrl.u32 %v388, 7
    %v390 = vsub.s32 0, %v389
    %v391 = vrot.slane %v358, %v390
    %v392 = vmul.f32 %v386, %v391
    %v393 = vmul.f32 %v387, %v391
    %v394 = vlaneseq
    %v395 = vshrl.u32 %v394, 7
    %v396 = vsub.s32 0, %v395
    %v397 = vrot.slane %v359, %v396
    %v398 = vadd.f32 %v392, %v397
    %v399 = vadd.f32 %v393, %v397
    %v400 = vld [vmem:[#allocation8] sm:$0xff]
    %v401 = vld [vmem:[#allocation8 + $0x8] sm:$0xff]
    %v402 = vld [vmem:[#allocation8 + $0x10] sm:$0xff]
    %v403 = vld [vmem:[#allocation8 + $0x18] sm:$0xff]
    %v404 = vld [vmem:[#allocation8 + $0x187] sm:$0x1]
    %v405 = vlaneseq
    %v406 = vshrl.u32 %v405, 7
    %v407 = vsub.s32 0, %v406
    %v408 = vrot.slane %v404, %v407
    %v410 = vsel %vm360, %v398, 0
    %v413 = vsel %vm360, %v399, 0
    %415 = vmatprep.subr.mxu0 0.0
    %416 = vmatpush1.msra.mxu0 %v400
    %417 = vmatprep.subr.mxu0 0.0
    %418 = vmatpush1.msra.mxu0 %v401
    %419 = vmatprep.subr.mxu0 0.0
    %420 = vmatpush1.msra.mxu0 %v402
    %421 = vmatprep.subr.mxu0 0.0
    %422 = vmatpush1.msra.mxu0 %v403
    %423 = vmatprep.subr.mxu0 0.0
    %424 = vmatpush1.msra.mxu0 0.0
    %425 = vmatprep.subr.mxu0 0.0
    %426 = vmatpush1.msra.mxu0 0.0
    %427 = vmatprep.subr.mxu0 0.0
    %428 = vmatpush1.msra.mxu0 0.0
    %429 = vmatprep.subr.mxu0 0.0
    %430 = vmatpush1.msra.mxu0 0.0
    %431 = vmatprep.subr.mxu0 0.0
    %432 = vmatpush1.msra.mxu0 0.0
    %433 = vmatprep.subr.mxu0 0.0
    %434 = vmatpush1.msra.mxu0 0.0
    %435 = vmatprep.subr.mxu0 0.0
    %436 = vmatpush1.msra.mxu0 0.0
    %437 = vmatprep.subr.mxu0 0.0
    %438 = vmatpush1.msra.mxu0 0.0
    %439 = vmatprep.subr.mxu0 0.0
    %440 = vmatpush1.msra.mxu0 0.0
    %441 = vmatprep.subr.mxu0 0.0
    %442 = vmatpush1.msra.mxu0 0.0
    %443 = vmatprep.subr.mxu0 0.0
    %444 = vmatpush1.msra.mxu0 0.0
    %445 = vmatprep.subr.mxu0 0.0
    %446 = vmatpush1.msra.mxu0 0.0
    %447 = vmatprep.subr.mxu0 0.0
    %448 = vmatpush1.msra.mxu0 0.0
    %449 = vmatprep.subr.mxu0 0.0
    %450 = vmatpush1.msra.mxu0 0.0
    %451 = vmatprep.subr.mxu0 0.0
    %452 = vmatpush1.msra.mxu0 0.0
    %453 = vmatprep.subr.mxu0 0.0
    %454 = vmatpush1.msra.mxu0 0.0
    %455 = vmatprep.subr.mxu0 0.0
    %456 = vmatpush1.msra.mxu0 0.0
    %457 = vmatprep.subr.mxu0 0.0
    %458 = vmatpush1.msra.mxu0 0.0
    %459 = vmatprep.subr.mxu0 0.0
    %460 = vmatpush1.msra.mxu0 0.0
    %461 = vmatprep.subr.mxu0 0.0
    %462 = vmatpush1.msra.mxu0 0.0
    %463 = vmatprep.subr.mxu0 0.0
    %464 = vmatpush1.msra.mxu0 0.0
    %465 = vmatprep.subr.mxu0 0.0
    %466 = vmatpush1.msra.mxu0 0.0
    %467 = vmatprep.subr.mxu0 0.0
    %468 = vmatpush1.msra.mxu0 0.0
    %469 = vmatprep.subr.mxu0 0.0
    %470 = vmatpush1.msra.mxu0 0.0
    %471 = vmatprep.subr.mxu0 0.0
    %472 = vmatpush1.msra.mxu0 0.0
    %473 = vmatprep.subr.mxu0 0.0
    %474 = vmatpush1.msra.mxu0 0.0
    %475 = vmatprep.subr.mxu0 0.0
    %476 = vmatpush1.msra.mxu0 0.0
    %477 = vmatprep.subr.mxu0 0.0
    %478 = vmatpush1.msra.mxu0 0.0
    %479 = vmatprep.mubr.f32.mxu0 0.0
    %480 = vmatmul.mubr.f32.gmra.mrb[0].mxu0 %v410
    %v481 = vpop.f32.mrb[0].mxu0
    %v482 = vadd.f32 %v408, %v481
    %v483 = vpop.f32.mrb[0].mxu0
    %484 = vmatprep.mubr.f32.mxu0 0.0
    %485 = vmatmul.mubr.f32.gmra.mrb[0].mxu0 %v413
    %v486 = vpop.f32.mrb[0].mxu0
    %v487 = vadd.f32 %v408, %v486
    %v488 = vpop.f32.mrb[0].mxu0
    %489 = vdwg.mxu0
    %v490 = vld [vmem:[#allocation8 + $0x40] sm:$0xff]
    %v491 = vld [vmem:[#allocation8 + $0x48] sm:$0xff]
    %v492 = vld [vmem:[#allocation8 + $0x50] sm:$0xff]
    %v493 = vld [vmem:[#allocation8 + $0x58] sm:$0xff]
    %v494 = vld [vmem:[#allocation8 + $0x189] sm:$0x1]
    %v495 = vlaneseq
    %v496 = vshrl.u32 %v495, 7
    %v497 = vsub.s32 0, %v496
    %v498 = vrot.slane %v494, %v497
    %499 = vmatprep.subr.mxu0 0.0
    %500 = vmatpush1.msra.mxu0 %v490
    %501 = vmatprep.subr.mxu0 0.0
    %502 = vmatpush1.msra.mxu0 %v491
    %503 = vmatprep.subr.mxu0 0.0
    %504 = vmatpush1.msra.mxu0 %v492
    %505 = vmatprep.subr.mxu0 0.0
    %506 = vmatpush1.msra.mxu0 %v493
    %507 = vmatprep.subr.mxu0 0.0
    %508 = vmatpush1.msra.mxu0 0.0
    %509 = vmatprep.subr.mxu0 0.0
    %510 = vmatpush1.msra.mxu0 0.0
    %511 = vmatprep.subr.mxu0 0.0
    %512 = vmatpush1.msra.mxu0 0.0
    %513 = vmatprep.subr.mxu0 0.0
    %514 = vmatpush1.msra.mxu0 0.0
    %515 = vmatprep.subr.mxu0 0.0
    %516 = vmatpush1.msra.mxu0 0.0
    %517 = vmatprep.subr.mxu0 0.0
    %518 = vmatpush1.msra.mxu0 0.0
    %519 = vmatprep.subr.mxu0 0.0
    %520 = vmatpush1.msra.mxu0 0.0
    %521 = vmatprep.subr.mxu0 0.0
    %522 = vmatpush1.msra.mxu0 0.0
    %523 = vmatprep.subr.mxu0 0.0
    %524 = vmatpush1.msra.mxu0 0.0
    %525 = vmatprep.subr.mxu0 0.0
    %526 = vmatpush1.msra.mxu0 0.0
    %527 = vmatprep.subr.mxu0 0.0
    %528 = vmatpush1.msra.mxu0 0.0
    %529 = vmatprep.subr.mxu0 0.0
    %530 = vmatpush1.msra.mxu0 0.0
    %531 = vmatprep.subr.mxu0 0.0
    %532 = vmatpush1.msra.mxu0 0.0
    %533 = vmatprep.subr.mxu0 0.0
    %534 = vmatpush1.msra.mxu0 0.0
    %535 = vmatprep.subr.mxu0 0.0
    %536 = vmatpush1.msra.mxu0 0.0
    %537 = vmatprep.subr.mxu0 0.0
    %538 = vmatpush1.msra.mxu0 0.0
    %539 = vmatprep.subr.mxu0 0.0
    %540 = vmatpush1.msra.mxu0 0.0
    %541 = vmatprep.subr.mxu0 0.0
    %542 = vmatpush1.msra.mxu0 0.0
    %543 = vmatprep.subr.mxu0 0.0
    %544 = vmatpush1.msra.mxu0 0.0
    %545 = vmatprep.subr.mxu0 0.0
    %546 = vmatpush1.msra.mxu0 0.0
    %547 = vmatprep.subr.mxu0 0.0
    %548 = vmatpush1.msra.mxu0 0.0
    %549 = vmatprep.subr.mxu0 0.0
    %550 = vmatpush1.msra.mxu0 0.0
    %551 = vmatprep.subr.mxu0 0.0
    %552 = vmatpush1.msra.mxu0 0.0
    %553 = vmatprep.subr.mxu0 0.0
    %554 = vmatpush1.msra.mxu0 0.0
    %555 = vmatprep.subr.mxu0 0.0
    %556 = vmatpush1.msra.mxu0 0.0
    %557 = vmatprep.subr.mxu0 0.0
    %558 = vmatpush1.msra.mxu0 0.0
    %559 = vmatprep.subr.mxu0 0.0
    %560 = vmatpush1.msra.mxu0 0.0
    %561 = vmatprep.subr.mxu0 0.0
    %562 = vmatpush1.msra.mxu0 0.0
    %563 = vmatprep.mubr.f32.mxu0 0.0
    %564 = vmatmul.mubr.f32.gmra.mrb[0].mxu0 %v410
    %v565 = vpop.f32.mrb[0].mxu0
    %v566 = vadd.f32 %v498, %v565
    %v567 = vpop.f32.mrb[0].mxu0
    %568 = vmatprep.mubr.f32.mxu0 0.0
    %569 = vmatmul.mubr.f32.gmra.mrb[0].mxu0 %v413
    %v570 = vpop.f32.mrb[0].mxu0
    %v571 = vadd.f32 %v498, %v570
    %v572 = vpop.f32.mrb[0].mxu0
    %573 = vdwg.mxu0
    %v574 = vld [vmem:[#allocation8 + $0x80] sm:$0xff]
    %v575 = vld [vmem:[#allocation8 + $0x88] sm:$0xff]
    %v576 = vld [vmem:[#allocation8 + $0x90] sm:$0xff]
    %v577 = vld [vmem:[#allocation8 + $0x98] sm:$0xff]
    %v578 = vld [vmem:[#allocation8 + $0x18b] sm:$0x1]
    %v579 = vlaneseq
    %v580 = vshrl.u32 %v579, 7
    %v581 = vsub.s32 0, %v580
    %v582 = vrot.slane %v578, %v581
    %583 = vmatprep.subr.mxu0 0.0
    %584 = vmatpush1.msra.mxu0 %v574
    %585 = vmatprep.subr.mxu0 0.0
    %586 = vmatpush1.msra.mxu0 %v575
    %587 = vmatprep.subr.mxu0 0.0
    %588 = vmatpush1.msra.mxu0 %v576
    %589 = vmatprep.subr.mxu0 0.0
    %590 = vmatpush1.msra.mxu0 %v577
    %591 = vmatprep.subr.mxu0 0.0
    %592 = vmatpush1.msra.mxu0 0.0
    %593 = vmatprep.subr.mxu0 0.0
    %594 = vmatpush1.msra.mxu0 0.0
    %595 = vmatprep.subr.mxu0 0.0
    %596 = vmatpush1.msra.mxu0 0.0
    %597 = vmatprep.subr.mxu0 0.0
    %598 = vmatpush1.msra.mxu0 0.0
    %599 = vmatprep.subr.mxu0 0.0
    %600 = vmatpush1.msra.mxu0 0.0
    %601 = vmatprep.subr.mxu0 0.0
    %602 = vmatpush1.msra.mxu0 0.0
    %603 = vmatprep.subr.mxu0 0.0
    %604 = vmatpush1.msra.mxu0 0.0
    %605 = vmatprep.subr.mxu0 0.0
    %606 = vmatpush1.msra.mxu0 0.0
    %607 = vmatprep.subr.mxu0 0.0
    %608 = vmatpush1.msra.mxu0 0.0
    %609 = vmatprep.subr.mxu0 0.0
    %610 = vmatpush1.msra.mxu0 0.0
    %611 = vmatprep.subr.mxu0 0.0
    %612 = vmatpush1.msra.mxu0 0.0
    %613 = vmatprep.subr.mxu0 0.0
    %614 = vmatpush1.msra.mxu0 0.0
    %615 = vmatprep.subr.mxu0 0.0
    %616 = vmatpush1.msra.mxu0 0.0
    %617 = vmatprep.subr.mxu0 0.0
    %618 = vmatpush1.msra.mxu0 0.0
    %619 = vmatprep.subr.mxu0 0.0
    %620 = vmatpush1.msra.mxu0 0.0
    %621 = vmatprep.subr.mxu0 0.0
    %622 = vmatpush1.msra.mxu0 0.0
    %623 = vmatprep.subr.mxu0 0.0
    %624 = vmatpush1.msra.mxu0 0.0
    %625 = vmatprep.subr.mxu0 0.0
    %626 = vmatpush1.msra.mxu0 0.0
    %627 = vmatprep.subr.mxu0 0.0
    %628 = vmatpush1.msra.mxu0 0.0
    %629 = vmatprep.subr.mxu0 0.0
    %630 = vmatpush1.msra.mxu0 0.0
    %631 = vmatprep.subr.mxu0 0.0
    %632 = vmatpush1.msra.mxu0 0.0
    %633 = vmatprep.subr.mxu0 0.0
    %634 = vmatpush1.msra.mxu0 0.0
    %635 = vmatprep.subr.mxu0 0.0
    %636 = vmatpush1.msra.mxu0 0.0
    %637 = vmatprep.subr.mxu0 0.0
    %638 = vmatpush1.msra.mxu0 0.0
    %639 = vmatprep.subr.mxu0 0.0
    %640 = vmatpush1.msra.mxu0 0.0
    %641 = vmatprep.subr.mxu0 0.0
    %642 = vmatpush1.msra.mxu0 0.0
    %643 = vmatprep.subr.mxu0 0.0
    %644 = vmatpush1.msra.mxu0 0.0
    %645 = vmatprep.subr.mxu0 0.0
    %646 = vmatpush1.msra.mxu0 0.0
    %647 = vmatprep.mubr.f32.mxu0 0.0
    %648 = vmatmul.mubr.f32.gmra.mrb[0].mxu0 %v410
    %v649 = vpop.f32.mrb[0].mxu0
    %v650 = vadd.f32 %v582, %v649
    %v651 = vpop.f32.mrb[0].mxu0
    %652 = vmatprep.mubr.f32.mxu0 0.0
    %653 = vmatmul.mubr.f32.gmra.mrb[0].mxu0 %v413
    %v654 = vpop.f32.mrb[0].mxu0
    %v655 = vadd.f32 %v582, %v654
    %v656 = vpop.f32.mrb[0].mxu0
    %657 = vdwg.mxu0
    %vm658 = vcmask 130048
    %v660 = vsel %vm658, %v482, 0
    %v663 = vsel %vm658, %v566, 0
    %665 = vmatprep.subr.mxu0 0.0
    %666 = vmatpush1.xpose.msra.mxu0 %v663
    %667 = vmatprep.subr.mxu0 0.0
    %668 = vmatpush1.xpose.msra.mxu0 0.0
    %669 = vmatprep.subr.mxu0 0.0
    %670 = vmatpush1.xpose.msra.mxu0 0.0
    %671 = vmatprep.subr.mxu0 0.0
    %672 = vmatpush1.xpose.msra.mxu0 0.0
    %673 = vmatprep.subr.mxu0 0.0
    %674 = vmatpush1.xpose.msra.mxu0 0.0
    %675 = vmatprep.subr.mxu0 0.0
    %676 = vmatpush1.xpose.msra.mxu0 0.0
    %677 = vmatprep.subr.mxu0 0.0
    %678 = vmatpush1.xpose.msra.mxu0 0.0
    %679 = vmatprep.subr.mxu0 0.0
    %680 = vmatpush1.xpose.msra.mxu0 0.0
    %681 = vmatprep.subr.mxu0 0.0
    %682 = vmatpush1.xpose.msra.mxu0 0.0
    %683 = vmatprep.subr.mxu0 0.0
    %684 = vmatpush1.xpose.msra.mxu0 0.0
    %685 = vmatprep.subr.mxu0 0.0
    %686 = vmatpush1.xpose.msra.mxu0 0.0
    %687 = vmatprep.subr.mxu0 0.0
    %688 = vmatpush1.xpose.msra.mxu0 0.0
    %689 = vmatprep.subr.mxu0 0.0
    %690 = vmatpush1.xpose.msra.mxu0 0.0
    %691 = vmatprep.subr.mxu0 0.0
    %692 = vmatpush1.xpose.msra.mxu0 0.0
    %693 = vmatprep.subr.mxu0 0.0
    %694 = vmatpush1.xpose.msra.mxu0 0.0
    %695 = vmatprep.subr.mxu0 0.0
    %696 = vmatpush1.xpose.msra.mxu0 0.0
    %697 = vmatprep.subr.mxu0 0.0
    %698 = vmatpush1.xpose.msra.mxu0 0.0
    %699 = vmatprep.subr.mxu0 0.0
    %700 = vmatpush1.xpose.msra.mxu0 0.0
    %701 = vmatprep.subr.mxu0 0.0
    %702 = vmatpush1.xpose.msra.mxu0 0.0
    %703 = vmatprep.subr.mxu0 0.0
    %704 = vmatpush1.xpose.msra.mxu0 0.0
    %705 = vmatprep.subr.mxu0 0.0
    %706 = vmatpush1.xpose.msra.mxu0 0.0
    %707 = vmatprep.subr.mxu0 0.0
    %708 = vmatpush1.xpose.msra.mxu0 0.0
    %709 = vmatprep.subr.mxu0 0.0
    %710 = vmatpush1.xpose.msra.mxu0 0.0
    %711 = vmatprep.subr.mxu0 0.0
    %712 = vmatpush1.xpose.msra.mxu0 0.0
    %713 = vmatprep.subr.mxu0 0.0
    %714 = vmatpush1.xpose.msra.mxu0 0.0
    %715 = vmatprep.subr.mxu0 0.0
    %716 = vmatpush1.xpose.msra.mxu0 0.0
    %717 = vmatprep.subr.mxu0 0.0
    %718 = vmatpush1.xpose.msra.mxu0 0.0
    %719 = vmatprep.subr.mxu0 0.0
    %720 = vmatpush1.xpose.msra.mxu0 0.0
    %721 = vmatprep.subr.mxu0 0.0
    %722 = vmatpush1.xpose.msra.mxu0 0.0
    %723 = vmatprep.subr.mxu0 0.0
    %724 = vmatpush1.xpose.msra.mxu0 0.0
    %725 = vmatprep.subr.mxu0 0.0
    %726 = vmatpush1.xpose.msra.mxu0 0.0
    %727 = vmatprep.subr.mxu0 0.0
    %728 = vmatpush1.xpose.msra.mxu0 0.0
    %729 = vmatprep.mubr.f32.mxu0 0.0
    %730 = vmatmul.mubr.f32.gmra.mrb[0].mxu0 %v660
    %v731 = vpop.f32.mrb[0].mxu0
    %v732 = vadd.f32 0.0, %v731
    %v733 = vpop.f32.mrb[0].mxu0
    %734 = vdwg.mxu0
    %v736 = vsel %vm658, %v487, 0
    %v739 = vsel %vm658, %v571, 0
    %741 = vmatprep.subr.mxu0 0.0
    %742 = vmatpush1.xpose.msra.mxu0 %v739
    %743 = vmatprep.subr.mxu0 0.0
    %744 = vmatpush1.xpose.msra.mxu0 0.0
    %745 = vmatprep.subr.mxu0 0.0
    %746 = vmatpush1.xpose.msra.mxu0 0.0
    %747 = vmatprep.subr.mxu0 0.0
    %748 = vmatpush1.xpose.msra.mxu0 0.0
    %749 = vmatprep.subr.mxu0 0.0
    %750 = vmatpush1.xpose.msra.mxu0 0.0
    %751 = vmatprep.subr.mxu0 0.0
    %752 = vmatpush1.xpose.msra.mxu0 0.0
    %753 = vmatprep.subr.mxu0 0.0
    %754 = vmatpush1.xpose.msra.mxu0 0.0
    %755 = vmatprep.subr.mxu0 0.0
    %756 = vmatpush1.xpose.msra.mxu0 0.0
    %757 = vmatprep.subr.mxu0 0.0
    %758 = vmatpush1.xpose.msra.mxu0 0.0
    %759 = vmatprep.subr.mxu0 0.0
    %760 = vmatpush1.xpose.msra.mxu0 0.0
    %761 = vmatprep.subr.mxu0 0.0
    %762 = vmatpush1.xpose.msra.mxu0 0.0
    %763 = vmatprep.subr.mxu0 0.0
    %764 = vmatpush1.xpose.msra.mxu0 0.0
    %765 = vmatprep.subr.mxu0 0.0
    %766 = vmatpush1.xpose.msra.mxu0 0.0
    %767 = vmatprep.subr.mxu0 0.0
    %768 = vmatpush1.xpose.msra.mxu0 0.0
    %769 = vmatprep.subr.mxu0 0.0
    %770 = vmatpush1.xpose.msra.mxu0 0.0
    %771 = vmatprep.subr.mxu0 0.0
    %772 = vmatpush1.xpose.msra.mxu0 0.0
    %773 = vmatprep.subr.mxu0 0.0
    %774 = vmatpush1.xpose.msra.mxu0 0.0
    %775 = vmatprep.subr.mxu0 0.0
    %776 = vmatpush1.xpose.msra.mxu0 0.0
    %777 = vmatprep.subr.mxu0 0.0
    %778 = vmatpush1.xpose.msra.mxu0 0.0
    %779 = vmatprep.subr.mxu0 0.0
    %780 = vmatpush1.xpose.msra.mxu0 0.0
    %781 = vmatprep.subr.mxu0 0.0
    %782 = vmatpush1.xpose.msra.mxu0 0.0
    %783 = vmatprep.subr.mxu0 0.0
    %784 = vmatpush1.xpose.msra.mxu0 0.0
    %785 = vmatprep.subr.mxu0 0.0
    %786 = vmatpush1.xpose.msra.mxu0 0.0
    %787 = vmatprep.subr.mxu0 0.0
    %788 = vmatpush1.xpose.msra.mxu0 0.0
    %789 = vmatprep.subr.mxu0 0.0
    %790 = vmatpush1.xpose.msra.mxu0 0.0
    %791 = vmatprep.subr.mxu0 0.0
    %792 = vmatpush1.xpose.msra.mxu0 0.0
    %793 = vmatprep.subr.mxu0 0.0
    %794 = vmatpush1.xpose.msra.mxu0 0.0
    %795 = vmatprep.subr.mxu0 0.0
    %796 = vmatpush1.xpose.msra.mxu0 0.0
    %797 = vmatprep.subr.mxu0 0.0
    %798 = vmatpush1.xpose.msra.mxu0 0.0
    %799 = vmatprep.subr.mxu0 0.0
    %800 = vmatpush1.xpose.msra.mxu0 0.0
    %801 = vmatprep.subr.mxu0 0.0
    %802 = vmatpush1.xpose.msra.mxu0 0.0
    %803 = vmatprep.subr.mxu0 0.0
    %804 = vmatpush1.xpose.msra.mxu0 0.0
    %805 = vmatprep.mubr.f32.mxu0 0.0
    %806 = vmatmul.mubr.f32.gmra.mrb[0].mxu0 %v736
    %v807 = vpop.f32.mrb[0].mxu0
    %v808 = vadd.f32 0.0, %v807
    %v809 = vpop.f32.mrb[0].mxu0
    %810 = vdwg.mxu0
    %v811 = vmul.f32 %v732, 0.25
    %v812 = vmul.f32 %v808, 0.25
    %v813 = vsel %vm356, %v811, -1e+09
    %v814 = vsel %vm357, %v812, -1e+09
    %vm815 = vcmask 64512
    %v816 = vsel %vm815, %v813, -inf
    %817 = vmax.xlane.f32.xlu0 %v816
    %v818 = vpop.xlane.xlu0 %817
    %v819 = vsel %vm815, %v814, -inf
    %820 = vmax.xlane.f32.xlu0 %v819
    %v821 = vpop.xlane.xlu0 %820
    %v822 = vsub.f32 %v813, %v818
    %v823 = vsub.f32 %v814, %v821
    %v824 = vmul.f32 %v822, 1.442695
    %v825 = vpow.pop %v824
    %v826 = vmul.f32 %v823, 1.442695
    %v827 = vpow.pop %v826
    %v828 = vsel %vm815, %v825, 0.0
    %829 = vadd.xlane.f32.xlu0 %v828
    %v830 = vpop.xlane.xlu0 %829
    %v831 = vsel %vm815, %v827, 0.0
    %832 = vadd.xlane.f32.xlu0 %v831
    %v833 = vpop.xlane.xlu0 %832
    %v834 = vrcp.pop %v830
    %v835 = vrcp.pop %v833
    %v836 = vmul.f32 %v825, %v834
    %v837 = vmul.f32 %v827, %v835
    %v839 = vsel %vm815, %v836, 0
    %841 = vmatprep.subr.mxu0 0.0
    %842 = vmatpush1.msra.mxu0 %v650
    %843 = vmatprep.subr.mxu0 0.0
    %844 = vmatpush1.msra.mxu0 0.0
    %845 = vmatprep.subr.mxu0 0.0
    %846 = vmatpush1.msra.mxu0 0.0
    %847 = vmatprep.subr.mxu0 0.0
    %848 = vmatpush1.msra.mxu0 0.0
    %849 = vmatprep.subr.mxu0 0.0
    %850 = vmatpush1.msra.mxu0 0.0
    %851 = vmatprep.subr.mxu0 0.0
    %852 = vmatpush1.msra.mxu0 0.0
    %853 = vmatprep.subr.mxu0 0.0
    %854 = vmatpush1.msra.mxu0 0.0
    %855 = vmatprep.subr.mxu0 0.0
    %856 = vmatpush1.msra.mxu0 0.0
    %857 = vmatprep.subr.mxu0 0.0
    %858 = vmatpush1.msra.mxu0 0.0
    %859 = vmatprep.subr.mxu0 0.0
    %860 = vmatpush1.msra.mxu0 0.0
    %861 = vmatprep.subr.mxu0 0.0
    %862 = vmatpush1.msra.mxu0 0.0
    %863 = vmatprep.subr.mxu0 0.0
    %864 = vmatpush1.msra.mxu0 0.0
    %865 = vmatprep.subr.mxu0 0.0
    %866 = vmatpush1.msra.mxu0 0.0
    %867 = vmatprep.subr.mxu0 0.0
    %868 = vmatpush1.msra.mxu0 0.0
    %869 = vmatprep.subr.mxu0 0.0
    %870 = vmatpush1.msra.mxu0 0.0
    %871 = vmatprep.subr.mxu0 0.0
    %872 = vmatpush1.msra.mxu0 0.0
    %873 = vmatprep.subr.mxu0 0.0
    %874 = vmatpush1.msra.mxu0 0.0
    %875 = vmatprep.subr.mxu0 0.0
    %876 = vmatpush1.msra.mxu0 0.0
    %877 = vmatprep.subr.mxu0 0.0
    %878 = vmatpush1.msra.mxu0 0.0
    %879 = vmatprep.subr.mxu0 0.0
    %880 = vmatpush1.msra.mxu0 0.0
    %881 = vmatprep.subr.mxu0 0.0
    %882 = vmatpush1.msra.mxu0 0.0
    %883 = vmatprep.subr.mxu0 0.0
    %884 = vmatpush1.msra.mxu0 0.0
    %885 = vmatprep.subr.mxu0 0.0
    %886 = vmatpush1.msra.mxu0 0.0
    %887 = vmatprep.subr.mxu0 0.0
    %888 = vmatpush1.msra.mxu0 0.0
    %889 = vmatprep.subr.mxu0 0.0
    %890 = vmatpush1.msra.mxu0 0.0
    %891 = vmatprep.subr.mxu0 0.0
    %892 = vmatpush1.msra.mxu0 0.0
    %893 = vmatprep.subr.mxu0 0.0
    %894 = vmatpush1.msra.mxu0 0.0
    %895 = vmatprep.subr.mxu0 0.0
    %896 = vmatpush1.msra.mxu0 0.0
    %897 = vmatprep.subr.mxu0 0.0
    %898 = vmatpush1.msra.mxu0 0.0
    %899 = vmatprep.subr.mxu0 0.0
    %900 = vmatpush1.msra.mxu0 0.0
    %901 = vmatprep.subr.mxu0 0.0
    %902 = vmatpush1.msra.mxu0 0.0
    %903 = vmatprep.subr.mxu0 0.0
    %904 = vmatpush1.msra.mxu0 0.0
    %905 = vmatprep.mubr.f32.mxu0 0.0
    %906 = vmatmul.mubr.f32.gmra.mrb[0].mxu0 %v839
    %v907 = vpop.f32.mrb[0].mxu0
    %v908 = vadd.f32 0.0, %v907
    %v909 = vpop.f32.mrb[0].mxu0
    %910 = vdwg.mxu0
    %v912 = vsel %vm815, %v837, 0
    %914 = vmatprep.subr.mxu0 0.0
    %915 = vmatpush1.msra.mxu0 %v655
    %916 = vmatprep.subr.mxu0 0.0
    %917 = vmatpush1.msra.mxu0 0.0
    %918 = vmatprep.subr.mxu0 0.0
    %919 = vmatpush1.msra.mxu0 0.0
    %920 = vmatprep.subr.mxu0 0.0
    %921 = vmatpush1.msra.mxu0 0.0
    %922 = vmatprep.subr.mxu0 0.0
    %923 = vmatpush1.msra.mxu0 0.0
    %924 = vmatprep.subr.mxu0 0.0
    %925 = vmatpush1.msra.mxu0 0.0
    %926 = vmatprep.subr.mxu0 0.0
    %927 = vmatpush1.msra.mxu0 0.0
    %928 = vmatprep.subr.mxu0 0.0
    %929 = vmatpush1.msra.mxu0 0.0
    %930 = vmatprep.subr.mxu0 0.0
    %931 = vmatpush1.msra.mxu0 0.0
    %932 = vmatprep.subr.mxu0 0.0
    %933 = vmatpush1.msra.mxu0 0.0
    %934 = vmatprep.subr.mxu0 0.0
    %935 = vmatpush1.msra.mxu0 0.0
    %936 = vmatprep.subr.mxu0 0.0
    %937 = vmatpush1.msra.mxu0 0.0
    %938 = vmatprep.subr.mxu0 0.0
    %939 = vmatpush1.msra.mxu0 0.0
    %940 = vmatprep.subr.mxu0 0.0
    %941 = vmatpush1.msra.mxu0 0.0
    %942 = vmatprep.subr.mxu0 0.0
    %943 = vmatpush1.msra.mxu0 0.0
    %944 = vmatprep.subr.mxu0 0.0
    %945 = vmatpush1.msra.mxu0 0.0
    %946 = vmatprep.subr.mxu0 0.0
    %947 = vmatpush1.msra.mxu0 0.0
    %948 = vmatprep.subr.mxu0 0.0
    %949 = vmatpush1.msra.mxu0 0.0
    %950 = vmatprep.subr.mxu0 0.0
    %951 = vmatpush1.msra.mxu0 0.0
    %952 = vmatprep.subr.mxu0 0.0
    %953 = vmatpush1.msra.mxu0 0.0
    %954 = vmatprep.subr.mxu0 0.0
    %955 = vmatpush1.msra.mxu0 0.0
    %956 = vmatprep.subr.mxu0 0.0
    %957 = vmatpush1.msra.mxu0 0.0
    %958 = vmatprep.subr.mxu0 0.0
    %959 = vmatpush1.msra.mxu0 0.0
    %960 = vmatprep.subr.mxu0 0.0
    %961 = vmatpush1.msra.mxu0 0.0
    %962 = vmatprep.subr.mxu0 0.0
    %963 = vmatpush1.msra.mxu0 0.0
    %964 = vmatprep.subr.mxu0 0.0
    %965 = vmatpush1.msra.mxu0 0.0
    %966 = vmatprep.subr.mxu0 0.0
    %967 = vmatpush1.msra.mxu0 0.0
    %968 = vmatprep.subr.mxu0 0.0
    %969 = vmatpush1.msra.mxu0 0.0
    %970 = vmatprep.subr.mxu0 0.0
    %971 = vmatpush1.msra.mxu0 0.0
    %972 = vmatprep.subr.mxu0 0.0
    %973 = vmatpush1.msra.mxu0 0.0
    %974 = vmatprep.subr.mxu0 0.0
    %975 = vmatpush1.msra.mxu0 0.0
    %976 = vmatprep.subr.mxu0 0.0
    %977 = vmatpush1.msra.mxu0 0.0
    %978 = vmatprep.mubr.f32.mxu0 0.0
    %979 = vmatmul.mubr.f32.gmra.mrb[0].mxu0 %v912
    %v980 = vpop.f32.mrb[0].mxu0
    %v981 = vadd.f32 0.0, %v980
    %v982 = vpop.f32.mrb[0].mxu0
    %983 = vdwg.mxu0
    %v984 = vld [vmem:[#allocation8 + $0x20] sm:$0xff]
    %v985 = vld [vmem:[#allocation8 + $0x28] sm:$0xff]
    %v986 = vld [vmem:[#allocation8 + $0x30] sm:$0xff]
    %v987 = vld [vmem:[#allocation8 + $0x38] sm:$0xff]
    %v988 = vld [vmem:[#allocation8 + $0x188] sm:$0x1]
    %v989 = vlaneseq
    %v990 = vshrl.u32 %v989, 7
    %v991 = vsub.s32 0, %v990
    %v992 = vrot.slane %v988, %v991
    %993 = vmatprep.subr.mxu0 0.0
    %994 = vmatpush1.msra.mxu0 %v984
    %995 = vmatprep.subr.mxu0 0.0
    %996 = vmatpush1.msra.mxu0 %v985
    %997 = vmatprep.subr.mxu0 0.0
    %998 = vmatpush1.msra.mxu0 %v986
    %999 = vmatprep.subr.mxu0 0.0
    %1000 = vmatpush1.msra.mxu0 %v987
    %1001 = vmatprep.subr.mxu0 0.0
    %1002 = vmatpush1.msra.mxu0 0.0
    %1003 = vmatprep.subr.mxu0 0.0
    %1004 = vmatpush1.msra.mxu0 0.0
    %1005 = vmatprep.subr.mxu0 0.0
    %1006 = vmatpush1.msra.mxu0 0.0
    %1007 = vmatprep.subr.mxu0 0.0
    %1008 = vmatpush1.msra.mxu0 0.0
    %1009 = vmatprep.subr.mxu0 0.0
    %1010 = vmatpush1.msra.mxu0 0.0
    %1011 = vmatprep.subr.mxu0 0.0
    %1012 = vmatpush1.msra.mxu0 0.0
    %1013 = vmatprep.subr.mxu0 0.0
    %1014 = vmatpush1.msra.mxu0 0.0
    %1015 = vmatprep.subr.mxu0 0.0
    %1016 = vmatpush1.msra.mxu0 0.0
    %1017 = vmatprep.subr.mxu0 0.0
    %1018 = vmatpush1.msra.mxu0 0.0
    %1019 = vmatprep.subr.mxu0 0.0
    %1020 = vmatpush1.msra.mxu0 0.0
    %1021 = vmatprep.subr.mxu0 0.0
    %1022 = vmatpush1.msra.mxu0 0.0
    %1023 = vmatprep.subr.mxu0 0.0
    %1024 = vmatpush1.msra.mxu0 0.0
    %1025 = vmatprep.subr.mxu0 0.0
    %1026 = vmatpush1.msra.mxu0 0.0
    %1027 = vmatprep.subr.mxu0 0.0
    %1028 = vmatpush1.msra.mxu0 0.0
    %1029 = vmatprep.subr.mxu0 0.0
    %1030 = vmatpush1.msra.mxu0 0.0
    %1031 = vmatprep.subr.mxu0 0.0
    %1032 = vmatpush1.msra.mxu0 0.0
    %1033 = vmatprep.subr.mxu0 0.0
    %1034 = vmatpush1.msra.mxu0 0.0
    %1035 = vmatprep.subr.mxu0 0.0
    %1036 = vmatpush1.msra.mxu0 0.0
    %1037 = vmatprep.subr.mxu0 0.0
    %1038 = vmatpush1.msra.mxu0 0.0
    %1039 = vmatprep.subr.mxu0 0.0
    %1040 = vmatpush1.msra.mxu0 0.0
    %1041 = vmatprep.subr.mxu0 0.0
    %1042 = vmatpush1.msra.mxu0 0.0
    %1043 = vmatprep.subr.mxu0 0.0
    %1044 = vmatpush1.msra.mxu0 0.0
    %1045 = vmatprep.subr.mxu0 0.0
    %1046 = vmatpush1.msra.mxu0 0.0
    %1047 = vmatprep.subr.mxu0 0.0
    %1048 = vmatpush1.msra.mxu0 0.0
    %1049 = vmatprep.subr.mxu0 0.0
    %1050 = vmatpush1.msra.mxu0 0.0
    %1051 = vmatprep.subr.mxu0 0.0
    %1052 = vmatpush1.msra.mxu0 0.0
    %1053 = vmatprep.subr.mxu0 0.0
    %1054 = vmatpush1.msra.mxu0 0.0
    %1055 = vmatprep.subr.mxu0 0.0
    %1056 = vmatpush1.msra.mxu0 0.0
    %1057 = vmatprep.mubr.f32.mxu0 0.0
    %1058 = vmatmul.mubr.f32.gmra.mrb[0].mxu0 %v410
    %v1059 = vpop.f32.mrb[0].mxu0
    %v1060 = vadd.f32 %v992, %v1059
    %v1061 = vpop.f32.mrb[0].mxu0
    %1062 = vmatprep.mubr.f32.mxu0 0.0
    %1063 = vmatmul.mubr.f32.gmra.mrb[0].mxu0 %v413
    %v1064 = vpop.f32.mrb[0].mxu0
    %v1065 = vadd.f32 %v992, %v1064
    %v1066 = vpop.f32.mrb[0].mxu0
    %1067 = vdwg.mxu0
    %v1068 = vld [vmem:[#allocation8 + $0x60] sm:$0xff]
    %v1069 = vld [vmem:[#allocation8 + $0x68] sm:$0xff]
    %v1070 = vld [vmem:[#allocation8 + $0x70] sm:$0xff]
    %v1071 = vld [vmem:[#allocation8 + $0x78] sm:$0xff]
    %v1072 = vld [vmem:[#allocation8 + $0x18a] sm:$0x1]
    %v1073 = vlaneseq
    %v1074 = vshrl.u32 %v1073, 7
    %v1075 = vsub.s32 0, %v1074
    %v1076 = vrot.slane %v1072, %v1075
    %1077 = vmatprep.subr.mxu0 0.0
    %1078 = vmatpush1.msra.mxu0 %v1068
    %1079 = vmatprep.subr.mxu0 0.0
    %1080 = vmatpush1.msra.mxu0 %v1069
    %1081 = vmatprep.subr.mxu0 0.0
    %1082 = vmatpush1.msra.mxu0 %v1070
    %1083 = vmatprep.subr.mxu0 0.0
    %1084 = vmatpush1.msra.mxu0 %v1071
    %1085 = vmatprep.subr.mxu0 0.0
    %1086 = vmatpush1.msra.mxu0 0.0
    %1087 = vmatprep.subr.mxu0 0.0
    %1088 = vmatpush1.msra.mxu0 0.0
    %1089 = vmatprep.subr.mxu0 0.0
    %1090 = vmatpush1.msra.mxu0 0.0
    %1091 = vmatprep.subr.mxu0 0.0
    %1092 = vmatpush1.msra.mxu0 0.0
    %1093 = vmatprep.subr.mxu0 0.0
    %1094 = vmatpush1.msra.mxu0 0.0
    %1095 = vmatprep.subr.mxu0 0.0
    %1096 = vmatpush1.msra.mxu0 0.0
    %1097 = vmatprep.subr.mxu0 0.0
    %1098 = vmatpush1.msra.mxu0 0.0
    %1099 = vmatprep.subr.mxu0 0.0
    %1100 = vmatpush1.msra.mxu0 0.0
    %1101 = vmatprep.subr.mxu0 0.0
    %1102 = vmatpush1.msra.mxu0 0.0
    %1103 = vmatprep.subr.mxu0 0.0
    %1104 = vmatpush1.msra.mxu0 0.0
    %1105 = vmatprep.subr.mxu0 0.0
    %1106 = vmatpush1.msra.mxu0 0.0
    %1107 = vmatprep.subr.mxu0 0.0
    %1108 = vmatpush1.msra.mxu0 0.0
    %1109 = vmatprep.subr.mxu0 0.0
    %1110 = vmatpush1.msra.mxu0 0.0
    %1111 = vmatprep.subr.mxu0 0.0
    %1112 = vmatpush1.msra.mxu0 0.0
    %1113 = vmatprep.subr.mxu0 0.0
    %1114 = vmatpush1.msra.mxu0 0.0
    %1115 = vmatprep.subr.mxu0 0.0
    %1116 = vmatpush1.msra.mxu0 0.0
    %1117 = vmatprep.subr.mxu0 0.0
    %1118 = vmatpush1.msra.mxu0 0.0
    %1119 = vmatprep.subr.mxu0 0.0
    %1120 = vmatpush1.msra.mxu0 0.0
    %1121 = vmatprep.subr.mxu0 0.0
    %1122 = vmatpush1.msra.mxu0 0.0
    %1123 = vmatprep.subr.mxu0 0.0
    %1124 = vmatpush1.msra.mxu0 0.0
    %1125 = vmatprep.subr.mxu0 0.0
    %1126 = vmatpush1.msra.mxu0 0.0
    %1127 = vmatprep.subr.mxu0 0.0
    %1128 = vmatpush1.msra.mxu0 0.0
    %1129 = vmatprep.subr.mxu0 0.0
    %1130 = vmatpush1.msra.mxu0 0.0
    %1131 = vmatprep.subr.mxu0 0.0
    %1132 = vmatpush1.msra.mxu0 0.0
    %1133 = vmatprep.subr.mxu0 0.0
    %1134 = vmatpush1.msra.mxu0 0.0
    %1135 = vmatprep.subr.mxu0 0.0
    %1136 = vmatpush1.msra.mxu0 0.0
    %1137 = vmatprep.subr.mxu0 0.0
    %1138 = vmatpush1.msra.mxu0 0.0
    %1139 = vmatprep.subr.mxu0 0.0
    %1140 = vmatpush1.msra.mxu0 0.0
    %1141 = vmatprep.mubr.f32.mxu0 0.0
    %1142 = vmatmul.mubr.f32.gmra.mrb[0].mxu0 %v410
    %v1143 = vpop.f32.mrb[0].mxu0
    %v1144 = vadd.f32 %v1076, %v1143
    %v1145 = vpop.f32.mrb[0].mxu0
    %1146 = vmatprep.mubr.f32.mxu0 0.0
    %1147 = vmatmul.mubr.f32.gmra.mrb[0].mxu0 %v413
    %v1148 = vpop.f32.mrb[0].mxu0
    %v1149 = vadd.f32 %v1076, %v1148
    %v1150 = vpop.f32.mrb[0].mxu0
    %1151 = vdwg.mxu0
    %v1152 = vld [vmem:[#allocation8 + $0xa0] sm:$0xff]
    %v1153 = vld [vmem:[#allocation8 + $0xa8] sm:$0xff]
    %v1154 = vld [vmem:[#allocation8 + $0xb0] sm:$0xff]
    %v1155 = vld [vmem:[#allocation8 + $0xb8] sm:$0xff]
    %v1156 = vld [vmem:[#allocation8 + $0x18c] sm:$0x1]
    %v1157 = vlaneseq
    %v1158 = vshrl.u32 %v1157, 7
    %v1159 = vsub.s32 0, %v1158
    %v1160 = vrot.slane %v1156, %v1159
    %1161 = vmatprep.subr.mxu0 0.0
    %1162 = vmatpush1.msra.mxu0 %v1152
    %1163 = vmatprep.subr.mxu0 0.0
    %1164 = vmatpush1.msra.mxu0 %v1153
    %1165 = vmatprep.subr.mxu0 0.0
    %1166 = vmatpush1.msra.mxu0 %v1154
    %1167 = vmatprep.subr.mxu0 0.0
    %1168 = vmatpush1.msra.mxu0 %v1155
    %1169 = vmatprep.subr.mxu0 0.0
    %1170 = vmatpush1.msra.mxu0 0.0
    %1171 = vmatprep.subr.mxu0 0.0
    %1172 = vmatpush1.msra.mxu0 0.0
    %1173 = vmatprep.subr.mxu0 0.0
    %1174 = vmatpush1.msra.mxu0 0.0
    %1175 = vmatprep.subr.mxu0 0.0
    %1176 = vmatpush1.msra.mxu0 0.0
    %1177 = vmatprep.subr.mxu0 0.0
    %1178 = vmatpush1.msra.mxu0 0.0
    %1179 = vmatprep.subr.mxu0 0.0
    %1180 = vmatpush1.msra.mxu0 0.0
    %1181 = vmatprep.subr.mxu0 0.0
    %1182 = vmatpush1.msra.mxu0 0.0
    %1183 = vmatprep.subr.mxu0 0.0
    %1184 = vmatpush1.msra.mxu0 0.0
    %1185 = vmatprep.subr.mxu0 0.0
    %1186 = vmatpush1.msra.mxu0 0.0
    %1187 = vmatprep.subr.mxu0 0.0
    %1188 = vmatpush1.msra.mxu0 0.0
    %1189 = vmatprep.subr.mxu0 0.0
    %1190 = vmatpush1.msra.mxu0 0.0
    %1191 = vmatprep.subr.mxu0 0.0
    %1192 = vmatpush1.msra.mxu0 0.0
    %1193 = vmatprep.subr.mxu0 0.0
    %1194 = vmatpush1.msra.mxu0 0.0
    %1195 = vmatprep.subr.mxu0 0.0
    %1196 = vmatpush1.msra.mxu0 0.0
    %1197 = vmatprep.subr.mxu0 0.0
    %1198 = vmatpush1.msra.mxu0 0.0
    %1199 = vmatprep.subr.mxu0 0.0
    %1200 = vmatpush1.msra.mxu0 0.0
    %1201 = vmatprep.subr.mxu0 0.0
    %1202 = vmatpush1.msra.mxu0 0.0
    %1203 = vmatprep.subr.mxu0 0.0
    %1204 = vmatpush1.msra.mxu0 0.0
    %1205 = vmatprep.subr.mxu0 0.0
    %1206 = vmatpush1.msra.mxu0 0.0
    %1207 = vmatprep.subr.mxu0 0.0
    %1208 = vmatpush1.msra.mxu0 0.0
    %1209 = vmatprep.subr.mxu0 0.0
    %1210 = vmatpush1.msra.mxu0 0.0
    %1211 = vmatprep.subr.mxu0 0.0
    %1212 = vmatpush1.msra.mxu0 0.0
    %1213 = vmatprep.subr.mxu0 0.0
    %1214 = vmatpush1.msra.mxu0 0.0
    %1215 = vmatprep.subr.mxu0 0.0
    %1216 = vmatpush1.msra.mxu0 0.0
    %1217 = vmatprep.subr.mxu0 0.0
    %1218 = vmatpush1.msra.mxu0 0.0
    %1219 = vmatprep.subr.mxu0 0.0
    %1220 = vmatpush1.msra.mxu0 0.0
    %1221 = vmatprep.subr.mxu0 0.0
    %1222 = vmatpush1.msra.mxu0 0.0
    %1223 = vmatprep.subr.mxu0 0.0
    %1224 = vmatpush1.msra.mxu0 0.0
    %1225 = vmatprep.mubr.f32.mxu0 0.0
    %1226 = vmatmul.mubr.f32.gmra.mrb[0].mxu0 %v410
    %v1227 = vpop.f32.mrb[0].mxu0
    %v1228 = vadd.f32 %v1160, %v1227
    %v1229 = vpop.f32.mrb[0].mxu0
    %1230 = vmatprep.mubr.f32.mxu0 0.0
    %1231 = vmatmul.mubr.f32.gmra.mrb[0].mxu0 %v413
    %v1232 = vpop.f32.mrb[0].mxu0
    %v1233 = vadd.f32 %v1160, %v1232
    %v1234 = vpop.f32.mrb[0].mxu0
    %1235 = vdwg.mxu0
    %v1237 = vsel %vm658, %v1060, 0
    %v1240 = vsel %vm658, %v1144, 0
    %1242 = vmatprep.subr.mxu0 0.0
    %1243 = vmatpush1.xpose.msra.mxu0 %v1240
    %1244 = vmatprep.subr.mxu0 0.0
    %1245 = vmatpush1.xpose.msra.mxu0 0.0
    %1246 = vmatprep.subr.mxu0 0.0
    %1247 = vmatpush1.xpose.msra.mxu0 0.0
    %1248 = vmatprep.subr.mxu0 0.0
    %1249 = vmatpush1.xpose.msra.mxu0 0.0
    %1250 = vmatprep.subr.mxu0 0.0
    %1251 = vmatpush1.xpose.msra.mxu0 0.0
    %1252 = vmatprep.subr.mxu0 0.0
    %1253 = vmatpush1.xpose.msra.mxu0 0.0
    %1254 = vmatprep.subr.mxu0 0.0
    %1255 = vmatpush1.xpose.msra.mxu0 0.0
    %1256 = vmatprep.subr.mxu0 0.0
    %1257 = vmatpush1.xpose.msra.mxu0 0.0
    %1258 = vmatprep.subr.mxu0 0.0
    %1259 = vmatpush1.xpose.msra.mxu0 0.0
    %1260 = vmatprep.subr.mxu0 0.0
    %1261 = vmatpush1.xpose.msra.mxu0 0.0
    %1262 = vmatprep.subr.mxu0 0.0
    %1263 = vmatpush1.xpose.msra.mxu0 0.0
    %1264 = vmatprep.subr.mxu0 0.0
    %1265 = vmatpush1.xpose.msra.mxu0 0.0
    %1266 = vmatprep.subr.mxu0 0.0
    %1267 = vmatpush1.xpose.msra.mxu0 0.0
    %1268 = vmatprep.subr.mxu0 0.0
    %1269 = vmatpush1.xpose.msra.mxu0 0.0
    %1270 = vmatprep.subr.mxu0 0.0
    %1271 = vmatpush1.xpose.msra.mxu0 0.0
    %1272 = vmatprep.subr.mxu0 0.0
    %1273 = vmatpush1.xpose.msra.mxu0 0.0
    %1274 = vmatprep.subr.mxu0 0.0
    %1275 = vmatpush1.xpose.msra.mxu0 0.0
    %1276 = vmatprep.subr.mxu0 0.0
    %1277 = vmatpush1.xpose.msra.mxu0 0.0
    %1278 = vmatprep.subr.mxu0 0.0
    %1279 = vmatpush1.xpose.msra.mxu0 0.0
    %1280 = vmatprep.subr.mxu0 0.0
    %1281 = vmatpush1.xpose.msra.mxu0 0.0
    %1282 = vmatprep.subr.mxu0 0.0
    %1283 = vmatpush1.xpose.msra.mxu0 0.0
    %1284 = vmatprep.subr.mxu0 0.0
    %1285 = vmatpush1.xpose.msra.mxu0 0.0
    %1286 = vmatprep.subr.mxu0 0.0
    %1287 = vmatpush1.xpose.msra.mxu0 0.0
    %1288 = vmatprep.subr.mxu0 0.0
    %1289 = vmatpush1.xpose.msra.mxu0 0.0
    %1290 = vmatprep.subr.mxu0 0.0
    %1291 = vmatpush1.xpose.msra.mxu0 0.0
    %1292 = vmatprep.subr.mxu0 0.0
    %1293 = vmatpush1.xpose.msra.mxu0 0.0
    %1294 = vmatprep.subr.mxu0 0.0
    %1295 = vmatpush1.xpose.msra.mxu0 0.0
    %1296 = vmatprep.subr.mxu0 0.0
    %1297 = vmatpush1.xpose.msra.mxu0 0.0
    %1298 = vmatprep.subr.mxu0 0.0
    %1299 = vmatpush1.xpose.msra.mxu0 0.0
    %1300 = vmatprep.subr.mxu0 0.0
    %1301 = vmatpush1.xpose.msra.mxu0 0.0
    %1302 = vmatprep.subr.mxu0 0.0
    %1303 = vmatpush1.xpose.msra.mxu0 0.0
    %1304 = vmatprep.subr.mxu0 0.0
    %1305 = vmatpush1.xpose.msra.mxu0 0.0
    %1306 = vmatprep.mubr.f32.mxu0 0.0
    %1307 = vmatmul.mubr.f32.gmra.mrb[0].mxu0 %v1237
    %v1308 = vpop.f32.mrb[0].mxu0
    %v1309 = vadd.f32 0.0, %v1308
    %v1310 = vpop.f32.mrb[0].mxu0
    %1311 = vdwg.mxu0
    %v1313 = vsel %vm658, %v1065, 0
    %v1316 = vsel %vm658, %v1149, 0
    %1318 = vmatprep.subr.mxu0 0.0
    %1319 = vmatpush1.xpose.msra.mxu0 %v1316
    %1320 = vmatprep.subr.mxu0 0.0
    %1321 = vmatpush1.xpose.msra.mxu0 0.0
    %1322 = vmatprep.subr.mxu0 0.0
    %1323 = vmatpush1.xpose.msra.mxu0 0.0
    %1324 = vmatprep.subr.mxu0 0.0
    %1325 = vmatpush1.xpose.msra.mxu0 0.0
    %1326 = vmatprep.subr.mxu0 0.0
    %1327 = vmatpush1.xpose.msra.mxu0 0.0
    %1328 = vmatprep.subr.mxu0 0.0
    %1329 = vmatpush1.xpose.msra.mxu0 0.0
    %1330 = vmatprep.subr.mxu0 0.0
    %1331 = vmatpush1.xpose.msra.mxu0 0.0
    %1332 = vmatprep.subr.mxu0 0.0
    %1333 = vmatpush1.xpose.msra.mxu0 0.0
    %1334 = vmatprep.subr.mxu0 0.0
    %1335 = vmatpush1.xpose.msra.mxu0 0.0
    %1336 = vmatprep.subr.mxu0 0.0
    %1337 = vmatpush1.xpose.msra.mxu0 0.0
    %1338 = vmatprep.subr.mxu0 0.0
    %1339 = vmatpush1.xpose.msra.mxu0 0.0
    %1340 = vmatprep.subr.mxu0 0.0
    %1341 = vmatpush1.xpose.msra.mxu0 0.0
    %1342 = vmatprep.subr.mxu0 0.0
    %1343 = vmatpush1.xpose.msra.mxu0 0.0
    %1344 = vmatprep.subr.mxu0 0.0
    %1345 = vmatpush1.xpose.msra.mxu0 0.0
    %1346 = vmatprep.subr.mxu0 0.0
    %1347 = vmatpush1.xpose.msra.mxu0 0.0
    %1348 = vmatprep.subr.mxu0 0.0
    %1349 = vmatpush1.xpose.msra.mxu0 0.0
    %1350 = vmatprep.subr.mxu0 0.0
    %1351 = vmatpush1.xpose.msra.mxu0 0.0
    %1352 = vmatprep.subr.mxu0 0.0
    %1353 = vmatpush1.xpose.msra.mxu0 0.0
    %1354 = vmatprep.subr.mxu0 0.0
    %1355 = vmatpush1.xpose.msra.mxu0 0.0
    %1356 = vmatprep.subr.mxu0 0.0
    %1357 = vmatpush1.xpose.msra.mxu0 0.0
    %1358 = vmatprep.subr.mxu0 0.0
    %1359 = vmatpush1.xpose.msra.mxu0 0.0
    %1360 = vmatprep.subr.mxu0 0.0
    %1361 = vmatpush1.xpose.msra.mxu0 0.0
    %1362 = vmatprep.subr.mxu0 0.0
    %1363 = vmatpush1.xpose.msra.mxu0 0.0
    %1364 = vmatprep.subr.mxu0 0.0
    %1365 = vmatpush1.xpose.msra.mxu0 0.0
    %1366 = vmatprep.subr.mxu0 0.0
    %1367 = vmatpush1.xpose.msra.mxu0 0.0
    %1368 = vmatprep.subr.mxu0 0.0
    %1369 = vmatpush1.xpose.msra.mxu0 0.0
    %1370 = vmatprep.subr.mxu0 0.0
    %1371 = vmatpush1.xpose.msra.mxu0 0.0
    %1372 = vmatprep.subr.mxu0 0.0
    %1373 = vmatpush1.xpose.msra.mxu0 0.0
    %1374 = vmatprep.subr.mxu0 0.0
    %1375 = vmatpush1.xpose.msra.mxu0 0.0
    %1376 = vmatprep.subr.mxu0 0.0
    %1377 = vmatpush1.xpose.msra.mxu0 0.0
    %1378 = vmatprep.subr.mxu0 0.0
    %1379 = vmatpush1.xpose.msra.mxu0 0.0
    %1380 = vmatprep.subr.mxu0 0.0
    %1381 = vmatpush1.xpose.msra.mxu0 0.0
    %1382 = vmatprep.mubr.f32.mxu0 0.0
    %1383 = vmatmul.mubr.f32.gmra.mrb[0].mxu0 %v1313
    %v1384 = vpop.f32.mrb[0].mxu0
    %v1385 = vadd.f32 0.0, %v1384
    %v1386 = vpop.f32.mrb[0].mxu0
    %1387 = vdwg.mxu0
    %v1388 = vmul.f32 %v1309, 0.25
    %v1389 = vmul.f32 %v1385, 0.25
    %v1390 = vsel %vm356, %v1388, -1e+09
    %v1391 = vsel %vm357, %v1389, -1e+09
    %v1392 = vsel %vm815, %v1390, -inf
    %1393 = vmax.xlane.f32.xlu0 %v1392
    %v1394 = vpop.xlane.xlu0 %1393
    %v1395 = vsel %vm815, %v1391, -inf
    %1396 = vmax.xlane.f32.xlu0 %v1395
    %v1397 = vpop.xlane.xlu0 %1396
    %v1398 = vsub.f32 %v1390, %v1394
    %v1399 = vsub.f32 %v1391, %v1397
    %v1400 = vmul.f32 %v1398, 1.442695
    %v1401 = vpow.pop %v1400
    %v1402 = vmul.f32 %v1399, 1.442695
    %v1403 = vpow.pop %v1402
    %v1404 = vsel %vm815, %v1401, 0.0
    %1405 = vadd.xlane.f32.xlu0 %v1404
    %v1406 = vpop.xlane.xlu0 %1405
    %v1407 = vsel %vm815, %v1403, 0.0
    %1408 = vadd.xlane.f32.xlu0 %v1407
    %v1409 = vpop.xlane.xlu0 %1408
    %v1410 = vrcp.pop %v1406
    %v1411 = vrcp.pop %v1409
    %v1412 = vmul.f32 %v1401, %v1410
    %v1413 = vmul.f32 %v1403, %v1411
    %v1415 = vsel %vm815, %v1412, 0
    %1417 = vmatprep.subr.mxu0 0.0
    %1418 = vmatpush1.msra.mxu0 %v1228
    %1419 = vmatprep.subr.mxu0 0.0
    %1420 = vmatpush1.msra.mxu0 0.0
    %1421 = vmatprep.subr.mxu0 0.0
    %1422 = vmatpush1.msra.mxu0 0.0
    %1423 = vmatprep.subr.mxu0 0.0
    %1424 = vmatpush1.msra.mxu0 0.0
    %1425 = vmatprep.subr.mxu0 0.0
    %1426 = vmatpush1.msra.mxu0 0.0
    %1427 = vmatprep.subr.mxu0 0.0
    %1428 = vmatpush1.msra.mxu0 0.0
    %1429 = vmatprep.subr.mxu0 0.0
    %1430 = vmatpush1.msra.mxu0 0.0
    %1431 = vmatprep.subr.mxu0 0.0
    %1432 = vmatpush1.msra.mxu0 0.0
    %1433 = vmatprep.subr.mxu0 0.0
    %1434 = vmatpush1.msra.mxu0 0.0
    %1435 = vmatprep.subr.mxu0 0.0
    %1436 = vmatpush1.msra.mxu0 0.0
    %1437 = vmatprep.subr.mxu0 0.0
    %1438 = vmatpush1.msra.mxu0 0.0
    %1439 = vmatprep.subr.mxu0 0.0
    %1440 = vmatpush1.msra.mxu0 0.0
    %1441 = vmatprep.subr.mxu0 0.0
    %1442 = vmatpush1.msra.mxu0 0.0
    %1443 = vmatprep.subr.mxu0 0.0
    %1444 = vmatpush1.msra.mxu0 0.0
    %1445 = vmatprep.subr.mxu0 0.0
    %1446 = vmatpush1.msra.mxu0 0.0
    %1447 = vmatprep.subr.mxu0 0.0
    %1448 = vmatpush1.msra.mxu0 0.0
    %1449 = vmatprep.subr.mxu0 0.0
    %1450 = vmatpush1.msra.mxu0 0.0
    %1451 = vmatprep.subr.mxu0 0.0
    %1452 = vmatpush1.msra.mxu0 0.0
    %1453 = vmatprep.subr.mxu0 0.0
    %1454 = vmatpush1.msra.mxu0 0.0
    %1455 = vmatprep.subr.mxu0 0.0
    %1456 = vmatpush1.msra.mxu0 0.0
    %1457 = vmatprep.subr.mxu0 0.0
    %1458 = vmatpush1.msra.mxu0 0.0
    %1459 = vmatprep.subr.mxu0 0.0
    %1460 = vmatpush1.msra.mxu0 0.0
    %1461 = vmatprep.subr.mxu0 0.0
    %1462 = vmatpush1.msra.mxu0 0.0
    %1463 = vmatprep.subr.mxu0 0.0
    %1464 = vmatpush1.msra.mxu0 0.0
    %1465 = vmatprep.subr.mxu0 0.0
    %1466 = vmatpush1.msra.mxu0 0.0
    %1467 = vmatprep.subr.mxu0 0.0
    %1468 = vmatpush1.msra.mxu0 0.0
    %1469 = vmatprep.subr.mxu0 0.0
    %1470 = vmatpush1.msra.mxu0 0.0
    %1471 = vmatprep.subr.mxu0 0.0
    %1472 = vmatpush1.msra.mxu0 0.0
    %1473 = vmatprep.subr.mxu0 0.0
    %1474 = vmatpush1.msra.mxu0 0.0
    %1475 = vmatprep.subr.mxu0 0.0
    %1476 = vmatpush1.msra.mxu0 0.0
    %1477 = vmatprep.subr.mxu0 0.0
    %1478 = vmatpush1.msra.mxu0 0.0
    %1479 = vmatprep.subr.mxu0 0.0
    %1480 = vmatpush1.msra.mxu0 0.0
    %1481 = vmatprep.mubr.f32.mxu0 0.0
    %1482 = vmatmul.mubr.f32.gmra.mrb[0].mxu0 %v1415
    %v1483 = vpop.f32.mrb[0].mxu0
    %v1484 = vadd.f32 0.0, %v1483
    %v1485 = vpop.f32.mrb[0].mxu0
    %1486 = vdwg.mxu0
    %v1488 = vsel %vm815, %v1413, 0
    %1490 = vmatprep.subr.mxu0 0.0
    %1491 = vmatpush1.msra.mxu0 %v1233
    %1492 = vmatprep.subr.mxu0 0.0
    %1493 = vmatpush1.msra.mxu0 0.0
    %1494 = vmatprep.subr.mxu0 0.0
    %1495 = vmatpush1.msra.mxu0 0.0
    %1496 = vmatprep.subr.mxu0 0.0
    %1497 = vmatpush1.msra.mxu0 0.0
    %1498 = vmatprep.subr.mxu0 0.0
    %1499 = vmatpush1.msra.mxu0 0.0
    %1500 = vmatprep.subr.mxu0 0.0
    %1501 = vmatpush1.msra.mxu0 0.0
    %1502 = vmatprep.subr.mxu0 0.0
    %1503 = vmatpush1.msra.mxu0 0.0
    %1504 = vmatprep.subr.mxu0 0.0
    %1505 = vmatpush1.msra.mxu0 0.0
    %1506 = vmatprep.subr.mxu0 0.0
    %1507 = vmatpush1.msra.mxu0 0.0
    %1508 = vmatprep.subr.mxu0 0.0
    %1509 = vmatpush1.msra.mxu0 0.0
    %1510 = vmatprep.subr.mxu0 0.0
    %1511 = vmatpush1.msra.mxu0 0.0
    %1512 = vmatprep.subr.mxu0 0.0
    %1513 = vmatpush1.msra.mxu0 0.0
    %1514 = vmatprep.subr.mxu0 0.0
    %1515 = vmatpush1.msra.mxu0 0.0
    %1516 = vmatprep.subr.mxu0 0.0
    %1517 = vmatpush1.msra.mxu0 0.0
    %1518 = vmatprep.subr.mxu0 0.0
    %1519 = vmatpush1.msra.mxu0 0.0
    %1520 = vmatprep.subr.mxu0 0.0
    %1521 = vmatpush1.msra.mxu0 0.0
    %1522 = vmatprep.subr.mxu0 0.0
    %1523 = vmatpush1.msra.mxu0 0.0
    %1524 = vmatprep.subr.mxu0 0.0
    %1525 = vmatpush1.msra.mxu0 0.0
    %1526 = vmatprep.subr.mxu0 0.0
    %1527 = vmatpush1.msra.mxu0 0.0
    %1528 = vmatprep.subr.mxu0 0.0
    %1529 = vmatpush1.msra.mxu0 0.0
    %1530 = vmatprep.subr.mxu0 0.0
    %1531 = vmatpush1.msra.mxu0 0.0
    %1532 = vmatprep.subr.mxu0 0.0
    %1533 = vmatpush1.msra.mxu0 0.0
    %1534 = vmatprep.subr.mxu0 0.0
    %1535 = vmatpush1.msra.mxu0 0.0
    %1536 = vmatprep.subr.mxu0 0.0
    %1537 = vmatpush1.msra.mxu0 0.0
    %1538 = vmatprep.subr.mxu0 0.0
    %1539 = vmatpush1.msra.mxu0 0.0
    %1540 = vmatprep.subr.mxu0 0.0
    %1541 = vmatpush1.msra.mxu0 0.0
    %1542 = vmatprep.subr.mxu0 0.0
    %1543 = vmatpush1.msra.mxu0 0.0
    %1544 = vmatprep.subr.mxu0 0.0
    %1545 = vmatpush1.msra.mxu0 0.0
    %1546 = vmatprep.subr.mxu0 0.0
    %1547 = vmatpush1.msra.mxu0 0.0
    %1548 = vmatprep.subr.mxu0 0.0
    %1549 = vmatpush1.msra.mxu0 0.0
    %1550 = vmatprep.subr.mxu0 0.0
    %1551 = vmatpush1.msra.mxu0 0.0
    %1552 = vmatprep.subr.mxu0 0.0
    %1553 = vmatpush1.msra.mxu0 0.0
    %1554 = vmatprep.mubr.f32.mxu0 0.0
    %1555 = vmatmul.mubr.f32.gmra.mrb[0].mxu0 %v1488
    %v1556 = vpop.f32.mrb[0].mxu0
    %v1557 = vadd.f32 0.0, %v1556
    %v1558 = vpop.f32.mrb[0].mxu0
    %1559 = vdwg.mxu0
    %1562 = vrot.lane.b32.xlu0 %v1484, 16
    %v1563 = vpop.permute.xlu0 %1562
    %1564 = vrot.lane.b32.xlu0 %v1557, 16
    %v1565 = vpop.permute.xlu0 %1564
    %v1568 = vsel %vm658, %v908, %v1563
    %v1569 = vsel %vm658, %v981, %v1565
    %v1570 = vld [vmem:[#allocation8 + $0xc0] sm:$0xff]
    %v1571 = vld [vmem:[#allocation8 + $0xc8] sm:$0xff]
    %v1572 = vld [vmem:[#allocation8 + $0xd0] sm:$0xff]
    %v1573 = vld [vmem:[#allocation8 + $0xd8] sm:$0xff]
    %v1575 = vsel %vm360, %v1568, 0
    %v1578 = vsel %vm360, %v1569, 0
    %1580 = vmatprep.subr.mxu0 0.0
    %1581 = vmatpush1.msra.mxu0 %v1570
    %1582 = vmatprep.subr.mxu0 0.0
    %1583 = vmatpush1.msra.mxu0 %v1571
    %1584 = vmatprep.subr.mxu0 0.0
    %1585 = vmatpush1.msra.mxu0 %v1572
    %1586 = vmatprep.subr.mxu0 0.0
    %1587 = vmatpush1.msra.mxu0 %v1573
    %1588 = vmatprep.subr.mxu0 0.0
    %1589 = vmatpush1.msra.mxu0 0.0
    %1590 = vmatprep.subr.mxu0 0.0
    %1591 = vmatpush1.msra.mxu0 0.0
    %1592 = vmatprep.subr.mxu0 0.0
    %1593 = vmatpush1.msra.mxu0 0.0
    %1594 = vmatprep.subr.mxu0 0.0
    %1595 = vmatpush1.msra.mxu0 0.0
    %1596 = vmatprep.subr.mxu0 0.0
    %1597 = vmatpush1.msra.mxu0 0.0
    %1598 = vmatprep.subr.mxu0 0.0
    %1599 = vmatpush1.msra.mxu0 0.0
    %1600 = vmatprep.subr.mxu0 0.0
    %1601 = vmatpush1.msra.mxu0 0.0
    %1602 = vmatprep.subr.mxu0 0.0
    %1603 = vmatpush1.msra.mxu0 0.0
    %1604 = vmatprep.subr.mxu0 0.0
    %1605 = vmatpush1.msra.mxu0 0.0
    %1606 = vmatprep.subr.mxu0 0.0
    %1607 = vmatpush1.msra.mxu0 0.0
    %1608 = vmatprep.subr.mxu0 0.0
    %1609 = vmatpush1.msra.mxu0 0.0
    %1610 = vmatprep.subr.mxu0 0.0
    %1611 = vmatpush1.msra.mxu0 0.0
    %1612 = vmatprep.subr.mxu0 0.0
    %1613 = vmatpush1.msra.mxu0 0.0
    %1614 = vmatprep.subr.mxu0 0.0
    %1615 = vmatpush1.msra.mxu0 0.0
    %1616 = vmatprep.subr.mxu0 0.0
    %1617 = vmatpush1.msra.mxu0 0.0
    %1618 = vmatprep.subr.mxu0 0.0
    %1619 = vmatpush1.msra.mxu0 0.0
    %1620 = vmatprep.subr.mxu0 0.0
    %1621 = vmatpush1.msra.mxu0 0.0
    %1622 = vmatprep.subr.mxu0 0.0
    %1623 = vmatpush1.msra.mxu0 0.0
    %1624 = vmatprep.subr.mxu0 0.0
    %1625 = vmatpush1.msra.mxu0 0.0
    %1626 = vmatprep.subr.mxu0 0.0
    %1627 = vmatpush1.msra.mxu0 0.0
    %1628 = vmatprep.subr.mxu0 0.0
    %1629 = vmatpush1.msra.mxu0 0.0
    %1630 = vmatprep.subr.mxu0 0.0
    %1631 = vmatpush1.msra.mxu0 0.0
    %1632 = vmatprep.subr.mxu0 0.0
    %1633 = vmatpush1.msra.mxu0 0.0
    %1634 = vmatprep.subr.mxu0 0.0
    %1635 = vmatpush1.msra.mxu0 0.0
    %1636 = vmatprep.subr.mxu0 0.0
    %1637 = vmatpush1.msra.mxu0 0.0
    %1638 = vmatprep.subr.mxu0 0.0
    %1639 = vmatpush1.msra.mxu0 0.0
    %1640 = vmatprep.subr.mxu0 0.0
    %1641 = vmatpush1.msra.mxu0 0.0
    %1642 = vmatprep.subr.mxu0 0.0
    %1643 = vmatpush1.msra.mxu0 0.0
    %1644 = vmatprep.mubr.f32.mxu0 0.0
    %1645 = vmatmul.mubr.f32.gmra.mrb[0].mxu0 %v1575
    %v1646 = vpop.f32.mrb[0].mxu0
    %v1647 = vadd.f32 0.0, %v1646
    %v1648 = vpop.f32.mrb[0].mxu0
    %1649 = vmatprep.mubr.f32.mxu0 0.0
    %1650 = vmatmul.mubr.f32.gmra.mrb[0].mxu0 %v1578
    %v1651 = vpop.f32.mrb[0].mxu0
    %v1652 = vadd.f32 0.0, %v1651
    %v1653 = vpop.f32.mrb[0].mxu0
    %1654 = vdwg.mxu0
    %v1655 = vadd.f32 %v301, %v1647
    %v1656 = vadd.f32 %v306, %v1652
    %v1657 = vld [vmem:[#allocation8 + $0x184] sm:$0x1]
    %v1658 = vlaneseq
    %v1659 = vshrl.u32 %v1658, 7
    %v1660 = vsub.s32 0, %v1659
    %v1661 = vrot.slane %v1657, %v1660
    %v1662 = vadd.f32 %v1655, %v1661
    %v1663 = vadd.f32 %v1656, %v1661
    %v1664 = vld [vmem:[#allocation8 + $0x182] sm:$0x1]
    %v1665 = vld [vmem:[#allocation8 + $0x183] sm:$0x1]
    %v1666 = vsel %vm360, %v1662, 0.0
    %1667 = vadd.xlane.f32.xlu0 %v1666
    %v1668 = vpop.xlane.xlu0 %1667
    %v1669 = vsel %vm360, %v1663, 0.0
    %1670 = vadd.xlane.f32.xlu0 %v1669
    %v1671 = vpop.xlane.xlu0 %1670
    %v1672 = vmul.f32 %v1668, %v367
    %v1673 = vmul.f32 %v1671, %v367
    %v1674 = vsub.f32 %v1662, %v1672
    %v1675 = vsub.f32 %v1663, %v1673
    %v1676 = vmul.f32 %v1674, %v1674
    %v1677 = vmul.f32 %v1675, %v1675
    %v1678 = vsel %vm360, %v1676, 0.0
    %1679 = vadd.xlane.f32.xlu0 %v1678
    %v1680 = vpop.xlane.xlu0 %1679
    %v1681 = vsel %vm360, %v1677, 0.0
    %1682 = vadd.xlane.f32.xlu0 %v1681
    %v1683 = vpop.xlane.xlu0 %1682
    %v1684 = vmul.f32 %v1680, %v367
    %v1685 = vmul.f32 %v1683, %v367
    %v1686 = vadd.f32 %v1684, 1e-05
    %v1687 = vadd.f32 %v1685, 1e-05
    %v1688 = vrsqrt.pop %v1686
    %v1689 = vrsqrt.pop %v1687
    %v1690 = vmul.f32 %v1674, %v1688
    %v1691 = vmul.f32 %v1675, %v1689
    %v1692 = vlaneseq
    %v1693 = vshrl.u32 %v1692, 7
    %v1694 = vsub.s32 0, %v1693
    %v1695 = vrot.slane %v1664, %v1694
    %v1696 = vmul.f32 %v1690, %v1695
    %v1697 = vmul.f32 %v1691, %v1695
    %v1698 = vlaneseq
    %v1699 = vshrl.u32 %v1698, 7
    %v1700 = vsub.s32 0, %v1699
    %v1701 = vrot.slane %v1665, %v1700
    %v1702 = vadd.f32 %v1696, %v1701
    %v1703 = vadd.f32 %v1697, %v1701
    %v1704 = vld [vmem:[#allocation8 + $0xe0] sm:$0xff]
    %v1705 = vld [vmem:[#allocation8 + $0xe8] sm:$0xff]
    %v1706 = vld [vmem:[#allocation8 + $0xf0] sm:$0xff]
    %v1707 = vld [vmem:[#allocation8 + $0xf8] sm:$0xff]
    %v1708 = vld [vmem:[#allocation8 + $0x100] sm:$0xff]
    %v1709 = vld [vmem:[#allocation8 + $0x108] sm:$0xff]
    %v1710 = vld [vmem:[#allocation8 + $0x110] sm:$0xff]
    %v1711 = vld [vmem:[#allocation8 + $0x118] sm:$0xff]
    %v1712 = vld [vmem:[#allocation8 + $0x120] sm:$0xff]
    %v1713 = vld [vmem:[#allocation8 + $0x128] sm:$0xff]
    %v1714 = vld [vmem:[#allocation8 + $0x130] sm:$0xff]
    %v1715 = vld [vmem:[#allocation8 + $0x138] sm:$0xff]
    %v1716 = vld [vmem:[#allocation8 + $0x140] sm:$0xff]
    %v1717 = vld [vmem:[#allocation8 + $0x148] sm:$0xff]
    %v1718 = vld [vmem:[#allocation8 + $0x150] sm:$0xff]
    %v1719 = vld [vmem:[#allocation8 + $0x158] sm:$0xff]
    %v1720 = vld [vmem:[#allocation8 + $0x160] sm:$0xff]
    %v1721 = vld [vmem:[#allocation8 + $0x168] sm:$0xff]
    %v1722 = vld [vmem:[#allocation8 + $0x170] sm:$0xff]
    %v1723 = vld [vmem:[#allocation8 + $0x178] sm:$0xff]
    %v1724 = vld [vmem:[#allocation8 + $0x186] sm:$0x1]
    %v1725 = vlaneseq
    %v1726 = vshrl.u32 %v1725, 7
    %v1727 = vsub.s32 0, %v1726
    %v1728 = vrot.slane %v1724, %v1727
    %v1730 = vsel %vm360, %v1702, 0
    %v1733 = vsel %vm360, %v1703, 0
    %1735 = vmatprep.subr.mxu0 0.0
    %1736 = vmatpush1.msra.mxu0 %v1704
    %1737 = vmatprep.subr.mxu0 0.0
    %1738 = vmatpush1.msra.mxu0 %v1705
    %1739 = vmatprep.subr.mxu0 0.0
    %1740 = vmatpush1.msra.mxu0 %v1706
    %1741 = vmatprep.subr.mxu0 0.0
    %1742 = vmatpush1.msra.mxu0 %v1707
    %1743 = vmatprep.subr.mxu0 0.0
    %1744 = vmatpush1.msra.mxu0 0.0
    %1745 = vmatprep.subr.mxu0 0.0
    %1746 = vmatpush1.msra.mxu0 0.0
    %1747 = vmatprep.subr.mxu0 0.0
    %1748 = vmatpush1.msra.mxu0 0.0
    %1749 = vmatprep.subr.mxu0 0.0
    %1750 = vmatpush1.msra.mxu0 0.0
    %1751 = vmatprep.subr.mxu0 0.0
    %1752 = vmatpush1.msra.mxu0 0.0
    %1753 = vmatprep.subr.mxu0 0.0
    %1754 = vmatpush1.msra.mxu0 0.0
    %1755 = vmatprep.subr.mxu0 0.0
    %1756 = vmatpush1.msra.mxu0 0.0
    %1757 = vmatprep.subr.mxu0 0.0
    %1758 = vmatpush1.msra.mxu0 0.0
    %1759 = vmatprep.subr.mxu0 0.0
    %1760 = vmatpush1.msra.mxu0 0.0
    %1761 = vmatprep.subr.mxu0 0.0
    %1762 = vmatpush1.msra.mxu0 0.0
    %1763 = vmatprep.subr.mxu0 0.0
    %1764 = vmatpush1.msra.mxu0 0.0
    %1765 = vmatprep.subr.mxu0 0.0
    %1766 = vmatpush1.msra.mxu0 0.0
    %1767 = vmatprep.subr.mxu0 0.0
    %1768 = vmatpush1.msra.mxu0 0.0
    %1769 = vmatprep.subr.mxu0 0.0
    %1770 = vmatpush1.msra.mxu0 0.0
    %1771 = vmatprep.subr.mxu0 0.0
    %1772 = vmatpush1.msra.mxu0 0.0
    %1773 = vmatprep.subr.mxu0 0.0
    %1774 = vmatpush1.msra.mxu0 0.0
    %1775 = vmatprep.subr.mxu0 0.0
    %1776 = vmatpush1.msra.mxu0 0.0
    %1777 = vmatprep.subr.mxu0 0.0
    %1778 = vmatpush1.msra.mxu0 0.0
    %1779 = vmatprep.subr.mxu0 0.0
    %1780 = vmatpush1.msra.mxu0 0.0
    %1781 = vmatprep.subr.mxu0 0.0
    %1782 = vmatpush1.msra.mxu0 0.0
    %1783 = vmatprep.subr.mxu0 0.0
    %1784 = vmatpush1.msra.mxu0 0.0
    %1785 = vmatprep.subr.mxu0 0.0
    %1786 = vmatpush1.msra.mxu0 0.0
    %1787 = vmatprep.subr.mxu0 0.0
    %1788 = vmatpush1.msra.mxu0 0.0
    %1789 = vmatprep.subr.mxu0 0.0
    %1790 = vmatpush1.msra.mxu0 0.0
    %1791 = vmatprep.subr.mxu0 0.0
    %1792 = vmatpush1.msra.mxu0 0.0
    %1793 = vmatprep.subr.mxu0 0.0
    %1794 = vmatpush1.msra.mxu0 0.0
    %1795 = vmatprep.subr.mxu0 0.0
    %1796 = vmatpush1.msra.mxu0 0.0
    %1797 = vmatprep.subr.mxu0 0.0
    %1798 = vmatpush1.msra.mxu0 0.0
    %1799 = vmatprep.mubr.f32.mxu0 0.0
    %1800 = vmatmul.mubr.f32.gmra.mrb[0].mxu0 %v1730
    %v1801 = vpop.f32.mrb[0].mxu0
    %v1802 = vadd.f32 %v1728, %v1801
    %v1803 = vpop.f32.mrb[0].mxu0
    %1804 = vmatprep.mubr.f32.mxu0 0.0
    %1805 = vmatmul.mubr.f32.gmra.mrb[0].mxu0 %v1733
    %v1806 = vpop.f32.mrb[0].mxu0
    %v1807 = vadd.f32 %v1728, %v1806
    %v1808 = vpop.f32.mrb[0].mxu0
    %1809 = vdwg.mxu0
    %v1810 = vmul.f32 %v1802, %v1802
    %v1811 = vmul.f32 %v1807, %v1807
    %v1812 = vmul.f32 %v1802, %v1810
    %v1813 = vmul.f32 %v1807, %v1811
    %v1814 = vmul.f32 %v1812, 0.044715
    %v1815 = vmul.f32 %v1813, 0.044715
    %v1816 = vadd.f32 %v1802, %v1814
    %v1817 = vadd.f32 %v1807, %v1815
    %v1818 = vmul.f32 %v1816, 0.7978846
    %v1819 = vmul.f32 %v1817, 0.7978846
    %v1820 = vtanh.pop %v1818
    %v1821 = vtanh.pop %v1819
    %v1822 = vadd.f32 %v1820, 1.0
    %v1823 = vadd.f32 %v1821, 1.0
    %v1824 = vmul.f32 %v1822, 0.5
    %v1825 = vmul.f32 %v1823, 0.5
    %v1826 = vmul.f32 %v1802, %v1824
    %v1827 = vmul.f32 %v1807, %v1825
    %v1828 = vld [vmem:[#allocation8 + $0x185] sm:$0x1]
    %v1829 = vlaneseq
    %v1830 = vshrl.u32 %v1829, 7
    %v1831 = vsub.s32 0, %v1830
    %v1832 = vrot.slane %v1828, %v1831
    %1833 = vmatprep.subr.mxu0 0.0
    %1834 = vmatpush1.msra.mxu0 %v1708
    %1835 = vmatprep.subr.mxu0 0.0
    %1836 = vmatpush1.msra.mxu0 %v1709
    %1837 = vmatprep.subr.mxu0 0.0
    %1838 = vmatpush1.msra.mxu0 %v1710
    %1839 = vmatprep.subr.mxu0 0.0
    %1840 = vmatpush1.msra.mxu0 %v1711
    %1841 = vmatprep.subr.mxu0 0.0
    %1842 = vmatpush1.msra.mxu0 %v1712
    %1843 = vmatprep.subr.mxu0 0.0
    %1844 = vmatpush1.msra.mxu0 %v1713
    %1845 = vmatprep.subr.mxu0 0.0
    %1846 = vmatpush1.msra.mxu0 %v1714
    %1847 = vmatprep.subr.mxu0 0.0
    %1848 = vmatpush1.msra.mxu0 %v1715
    %1849 = vmatprep.subr.mxu0 0.0
    %1850 = vmatpush1.msra.mxu0 %v1716
    %1851 = vmatprep.subr.mxu0 0.0
    %1852 = vmatpush1.msra.mxu0 %v1717
    %1853 = vmatprep.subr.mxu0 0.0
    %1854 = vmatpush1.msra.mxu0 %v1718
    %1855 = vmatprep.subr.mxu0 0.0
    %1856 = vmatpush1.msra.mxu0 %v1719
    %1857 = vmatprep.subr.mxu0 0.0
    %1858 = vmatpush1.msra.mxu0 %v1720
    %1859 = vmatprep.subr.mxu0 0.0
    %1860 = vmatpush1.msra.mxu0 %v1721
    %1861 = vmatprep.subr.mxu0 0.0
    %1862 = vmatpush1.msra.mxu0 %v1722
    %1863 = vmatprep.subr.mxu0 0.0
    %1864 = vmatpush1.msra.mxu0 %v1723
    %1865 = vmatprep.subr.mxu0 0.0
    %1866 = vmatpush1.msra.mxu0 0.0
    %1867 = vmatprep.subr.mxu0 0.0
    %1868 = vmatpush1.msra.mxu0 0.0
    %1869 = vmatprep.subr.mxu0 0.0
    %1870 = vmatpush1.msra.mxu0 0.0
    %1871 = vmatprep.subr.mxu0 0.0
    %1872 = vmatpush1.msra.mxu0 0.0
    %1873 = vmatprep.subr.mxu0 0.0
    %1874 = vmatpush1.msra.mxu0 0.0
    %1875 = vmatprep.subr.mxu0 0.0
    %1876 = vmatpush1.msra.mxu0 0.0
    %1877 = vmatprep.subr.mxu0 0.0
    %1878 = vmatpush1.msra.mxu0 0.0
    %1879 = vmatprep.subr.mxu0 0.0
    %1880 = vmatpush1.msra.mxu0 0.0
    %1881 = vmatprep.subr.mxu0 0.0
    %1882 = vmatpush1.msra.mxu0 0.0
    %1883 = vmatprep.subr.mxu0 0.0
    %1884 = vmatpush1.msra.mxu0 0.0
    %1885 = vmatprep.subr.mxu0 0.0
    %1886 = vmatpush1.msra.mxu0 0.0
    %1887 = vmatprep.subr.mxu0 0.0
    %1888 = vmatpush1.msra.mxu0 0.0
    %1889 = vmatprep.subr.mxu0 0.0
    %1890 = vmatpush1.msra.mxu0 0.0
    %1891 = vmatprep.subr.mxu0 0.0
    %1892 = vmatpush1.msra.mxu0 0.0
    %1893 = vmatprep.subr.mxu0 0.0
    %1894 = vmatpush1.msra.mxu0 0.0
    %1895 = vmatprep.subr.mxu0 0.0
    %1896 = vmatpush1.msra.mxu0 0.0
    %1897 = vmatprep.mubr.f32.mxu0 0.0
    %1898 = vmatmul.mubr.f32.gmra.mrb[0].mxu0 %v1826
    %v1899 = vpop.f32.mrb[0].mxu0
    %v1900 = vadd.f32 %v1832, %v1899
    %v1901 = vpop.f32.mrb[0].mxu0
    %1902 = vmatprep.mubr.f32.mxu0 0.0
    %1903 = vmatmul.mubr.f32.gmra.mrb[0].mxu0 %v1827
    %v1904 = vpop.f32.mrb[0].mxu0
    %v1905 = vadd.f32 %v1832, %v1904
    %v1906 = vpop.f32.mrb[0].mxu0
    %1907 = vdwg.mxu0
    %v1908 = vadd.f32 %v1662, %v1900
    %v1909 = vadd.f32 %v1663, %v1905
    %v1910 = vld [vmem:[#allocation8 + $0x310] sm:$0x1]
    %v1911 = vld [vmem:[#allocation8 + $0x311] sm:$0x1]
    %v1912 = vsel %vm360, %v1908, 0.0
    %1913 = vadd.xlane.f32.xlu0 %v1912
    %v1914 = vpop.xlane.xlu0 %1913
    %v1915 = vsel %vm360, %v1909, 0.0
    %1916 = vadd.xlane.f32.xlu0 %v1915
    %v1917 = vpop.xlane.xlu0 %1916
    %v1918 = vmul.f32 %v1914, %v367
    %v1919 = vmul.f32 %v1917, %v367
    %v1920 = vsub.f32 %v1908, %v1918
    %v1921 = vsub.f32 %v1909, %v1919
    %v1922 = vmul.f32 %v1920, %v1920
    %v1923 = vmul.f32 %v1921, %v1921
    %v1924 = vsel %vm360, %v1922, 0.0
    %1925 = vadd.xlane.f32.xlu0 %v1924
    %v1926 = vpop.xlane.xlu0 %1925
    %v1927 = vsel %vm360, %v1923, 0.0
    %1928 = vadd.xlane.f32.xlu0 %v1927
    %v1929 = vpop.xlane.xlu0 %1928
    %v1930 = vmul.f32 %v1926, %v367
    %v1931 = vmul.f32 %v1929, %v367
    %v1932 = vadd.f32 %v1930, 1e-05
    %v1933 = vadd.f32 %v1931, 1e-05
    %v1934 = vrsqrt.pop %v1932
    %v1935 = vrsqrt.pop %v1933
    %v1936 = vmul.f32 %v1920, %v1934
    %v1937 = vmul.f32 %v1921, %v1935
    %v1938 = vlaneseq
    %v1939 = vshrl.u32 %v1938, 7
    %v1940 = vsub.s32 0, %v1939
    %v1941 = vrot.slane %v1910, %v1940
    %v1942 = vmul.f32 %v1936, %v1941
    %v1943 = vmul.f32 %v1937, %v1941
    %v1944 = vlaneseq
    %v1945 = vshrl.u32 %v1944, 7
    %v1946 = vsub.s32 0, %v1945
    %v1947 = vrot.slane %v1911, %v1946
    %v1948 = vadd.f32 %v1942, %v1947
    %v1949 = vadd.f32 %v1943, %v1947
    %v1950 = vld [vmem:[#allocation8 + $0x190] sm:$0xff]
    %v1951 = vld [vmem:[#allocation8 + $0x198] sm:$0xff]
    %v1952 = vld [vmem:[#allocation8 + $0x1a0] sm:$0xff]
    %v1953 = vld [vmem:[#allocation8 + $0x1a8] sm:$0xff]
    %v1954 = vld [vmem:[#allocation8 + $0x317] sm:$0x1]
    %v1955 = vlaneseq
    %v1956 = vshrl.u32 %v1955, 7
    %v1957 = vsub.s32 0, %v1956
    %v1958 = vrot.slane %v1954, %v1957
    %v1960 = vsel %vm360, %v1948, 0
    %v1963 = vsel %vm360, %v1949, 0
    %1965 = vmatprep.subr.mxu0 0.0
    %1966 = vmatpush1.msra.mxu0 %v1950
    %1967 = vmatprep.subr.mxu0 0.0
    %1968 = vmatpush1.msra.mxu0 %v1951
    %1969 = vmatprep.subr.mxu0 0.0
    %1970 = vmatpush1.msra.mxu0 %v1952
    %1971 = vmatprep.subr.mxu0 0.0
    %1972 = vmatpush1.msra.mxu0 %v1953
    %1973 = vmatprep.subr.mxu0 0.0
    %1974 = vmatpush1.msra.mxu0 0.0
    %1975 = vmatprep.subr.mxu0 0.0
    %1976 = vmatpush1.msra.mxu0 0.0
    %1977 = vmatprep.subr.mxu0 0.0
    %1978 = vmatpush1.msra.mxu0 0.0
    %1979 = vmatprep.subr.mxu0 0.0
    %1980 = vmatpush1.msra.mxu0 0.0
    %1981 = vmatprep.subr.mxu0 0.0
    %1982 = vmatpush1.msra.mxu0 0.0
    %1983 = vmatprep.subr.mxu0 0.0
    %1984 = vmatpush1.msra.mxu0 0.0
    %1985 = vmatprep.subr.mxu0 0.0
    %1986 = vmatpush1.msra.mxu0 0.0
    %1987 = vmatprep.subr.mxu0 0.0
    %1988 = vmatpush1.msra.mxu0 0.0
    %1989 = vmatprep.subr.mxu0 0.0
    %1990 = vmatpush1.msra.mxu0 0.0
    %1991 = vmatprep.subr.mxu0 0.0
    %1992 = vmatpush1.msra.mxu0 0.0
    %1993 = vmatprep.subr.mxu0 0.0
    %1994 = vmatpush1.msra.mxu0 0.0
    %1995 = vmatprep.subr.mxu0 0.0
    %1996 = vmatpush1.msra.mxu0 0.0
    %1997 = vmatprep.subr.mxu0 0.0
    %1998 = vmatpush1.msra.mxu0 0.0
    %1999 = vmatprep.subr.mxu0 0.0
    %2000 = vmatpush1.msra.mxu0 0.0
    %2001 = vmatprep.subr.mxu0 0.0
    %2002 = vmatpush1.msra.mxu0 0.0
    %2003 = vmatprep.subr.mxu0 0.0
    %2004 = vmatpush1.msra.mxu0 0.0
    %2005 = vmatprep.subr.mxu0 0.0
    %2006 = vmatpush1.msra.mxu0 0.0
    %2007 = vmatprep.subr.mxu0 0.0
    %2008 = vmatpush1.msra.mxu0 0.0
    %2009 = vmatprep.subr.mxu0 0.0
    %2010 = vmatpush1.msra.mxu0 0.0
    %2011 = vmatprep.subr.mxu0 0.0
    %2012 = vmatpush1.msra.mxu0 0.0
    %2013 = vmatprep.subr.mxu0 0.0
    %2014 = vmatpush1.msra.mxu0 0.0
    %2015 = vmatprep.subr.mxu0 0.0
    %2016 = vmatpush1.msra.mxu0 0.0
    %2017 = vmatprep.subr.mxu0 0.0
    %2018 = vmatpush1.msra.mxu0 0.0
    %2019 = vmatprep.subr.mxu0 0.0
    %2020 = vmatpush1.msra.mxu0 0.0
    %2021 = vmatprep.subr.mxu0 0.0
    %2022 = vmatpush1.msra.mxu0 0.0
    %2023 = vmatprep.subr.mxu0 0.0
    %2024 = vmatpush1.msra.mxu0 0.0
    %2025 = vmatprep.subr.mxu0 0.0
    %2026 = vmatpush1.msra.mxu0 0.0
    %2027 = vmatprep.subr.mxu0 0.0
    %2028 = vmatpush1.msra.mxu0 0.0
    %2029 = vmatprep.mubr.f32.mxu0 0.0
    %2030 = vmatmul.mubr.f32.gmra.mrb[0].mxu0 %v1960
    %v2031 = vpop.f32.mrb[0].mxu0
    %v2032 = vadd.f32 %v1958, %v2031
    %v2033 = vpop.f32.mrb[0].mxu0
    %2034 = vmatprep.mubr.f32.mxu0 0.0
    %2035 = vmatmul.mubr.f32.gmra.mrb[0].mxu0 %v1963
    %v2036 = vpop.f32.mrb[0].mxu0
    %v2037 = vadd.f32 %v1958, %v2036
    %v2038 = vpop.f32.mrb[0].mxu0
    %2039 = vdwg.mxu0
    %v2040 = vld [vmem:[#allocation8 + $0x1d0] sm:$0xff]
    %v2041 = vld [vmem:[#allocation8 + $0x1d8] sm:$0xff]
    %v2042 = vld [vmem:[#allocation8 + $0x1e0] sm:$0xff]
    %v2043 = vld [vmem:[#allocation8 + $0x1e8] sm:$0xff]
    %v2044 = vld [vmem:[#allocation8 + $0x319] sm:$0x1]
    %v2045 = vlaneseq
    %v2046 = vshrl.u32 %v2045, 7
    %v2047 = vsub.s32 0, %v2046
    %v2048 = vrot.slane %v2044, %v2047
    %2049 = vmatprep.subr.mxu0 0.0
    %2050 = vmatpush1.msra.mxu0 %v2040
    %2051 = vmatprep.subr.mxu0 0.0
    %2052 = vmatpush1.msra.mxu0 %v2041
    %2053 = vmatprep.subr.mxu0 0.0
    %2054 = vmatpush1.msra.mxu0 %v2042
    %2055 = vmatprep.subr.mxu0 0.0
    %2056 = vmatpush1.msra.mxu0 %v2043
    %2057 = vmatprep.subr.mxu0 0.0
    %2058 = vmatpush1.msra.mxu0 0.0
    %2059 = vmatprep.subr.mxu0 0.0
    %2060 = vmatpush1.msra.mxu0 0.0
    %2061 = vmatprep.subr.mxu0 0.0
    %2062 = vmatpush1.msra.mxu0 0.0
    %2063 = vmatprep.subr.mxu0 0.0
    %2064 = vmatpush1.msra.mxu0 0.0
    %2065 = vmatprep.subr.mxu0 0.0
    %2066 = vmatpush1.msra.mxu0 0.0
    %2067 = vmatprep.subr.mxu0 0.0
    %2068 = vmatpush1.msra.mxu0 0.0
    %2069 = vmatprep.subr.mxu0 0.0
    %2070 = vmatpush1.msra.mxu0 0.0
    %2071 = vmatprep.subr.mxu0 0.0
    %2072 = vmatpush1.msra.mxu0 0.0
    %2073 = vmatprep.subr.mxu0 0.0
    %2074 = vmatpush1.msra.mxu0 0.0
    %2075 = vmatprep.subr.mxu0 0.0
    %2076 = vmatpush1.msra.mxu0 0.0
    %2077 = vmatprep.subr.mxu0 0.0
    %2078 = vmatpush1.msra.mxu0 0.0
    %2079 = vmatprep.subr.mxu0 0.0
    %2080 = vmatpush1.msra.mxu0 0.0
    %2081 = vmatprep.subr.mxu0 0.0
    %2082 = vmatpush1.msra.mxu0 0.0
    %2083 = vmatprep.subr.mxu0 0.0
    %2084 = vmatpush1.msra.mxu0 0.0
    %2085 = vmatprep.subr.mxu0 0.0
    %2086 = vmatpush1.msra.mxu0 0.0
    %2087 = vmatprep.subr.mxu0 0.0
    %2088 = vmatpush1.msra.mxu0 0.0
    %2089 = vmatprep.subr.mxu0 0.0
    %2090 = vmatpush1.msra.mxu0 0.0
    %2091 = vmatprep.subr.mxu0 0.0
    %2092 = vmatpush1.msra.mxu0 0.0
    %2093 = vmatprep.subr.mxu0 0.0
    %2094 = vmatpush1.msra.mxu0 0.0
    %2095 = vmatprep.subr.mxu0 0.0
    %2096 = vmatpush1.msra.mxu0 0.0
    %2097 = vmatprep.subr.mxu0 0.0
    %2098 = vmatpush1.msra.mxu0 0.0
    %2099 = vmatprep.subr.mxu0 0.0
    %2100 = vmatpush1.msra.mxu0 0.0
    %2101 = vmatprep.subr.mxu0 0.0
    %2102 = vmatpush1.msra.mxu0 0.0
    %2103 = vmatprep.subr.mxu0 0.0
    %2104 = vmatpush1.msra.mxu0 0.0
    %2105 = vmatprep.subr.mxu0 0.0
    %2106 = vmatpush1.msra.mxu0 0.0
    %2107 = vmatprep.subr.mxu0 0.0
    %2108 = vmatpush1.msra.mxu0 0.0
    %2109 = vmatprep.subr.mxu0 0.0
    %2110 = vmatpush1.msra.mxu0 0.0
    %2111 = vmatprep.subr.mxu0 0.0
    %2112 = vmatpush1.msra.mxu0 0.0
    %2113 = vmatprep.mubr.f32.mxu0 0.0
    %2114 = vmatmul.mubr.f32.gmra.mrb[0].mxu0 %v1960
    %v2115 = vpop.f32.mrb[0].mxu0
    %v2116 = vadd.f32 %v2048, %v2115
    %v2117 = vpop.f32.mrb[0].mxu0
    %2118 = vmatprep.mubr.f32.mxu0 0.0
    %2119 = vmatmul.mubr.f32.gmra.mrb[0].mxu0 %v1963
    %v2120 = vpop.f32.mrb[0].mxu0
    %v2121 = vadd.f32 %v2048, %v2120
    %v2122 = vpop.f32.mrb[0].mxu0
    %2123 = vdwg.mxu0
    %v2124 = vld [vmem:[#allocation8 + $0x210] sm:$0xff]
    %v2125 = vld [vmem:[#allocation8 + $0x218] sm:$0xff]
    %v2126 = vld [vmem:[#allocation8 + $0x220] sm:$0xff]
    %v2127 = vld [vmem:[#allocation8 + $0x228] sm:$0xff]
    %v2128 = vld [vmem:[#allocation8 + $0x31b] sm:$0x1]
    %v2129 = vlaneseq
    %v2130 = vshrl.u32 %v2129, 7
    %v2131 = vsub.s32 0, %v2130
    %v2132 = vrot.slane %v2128, %v2131
    %2133 = vmatprep.subr.mxu0 0.0
    %2134 = vmatpush1.msra.mxu0 %v2124
    %2135 = vmatprep.subr.mxu0 0.0
    %2136 = vmatpush1.msra.mxu0 %v2125
    %2137 = vmatprep.subr.mxu0 0.0
    %2138 = vmatpush1.msra.mxu0 %v2126
    %2139 = vmatprep.subr.mxu0 0.0
    %2140 = vmatpush1.msra.mxu0 %v2127
    %2141 = vmatprep.subr.mxu0 0.0
    %2142 = vmatpush1.msra.mxu0 0.0
    %2143 = vmatprep.subr.mxu0 0.0
    %2144 = vmatpush1.msra.mxu0 0.0
    %2145 = vmatprep.subr.mxu0 0.0
    %2146 = vmatpush1.msra.mxu0 0.0
    %2147 = vmatprep.subr.mxu0 0.0
    %2148 = vmatpush1.msra.mxu0 0.0
    %2149 = vmatprep.subr.mxu0 0.0
    %2150 = vmatpush1.msra.mxu0 0.0
    %2151 = vmatprep.subr.mxu0 0.0
    %2152 = vmatpush1.msra.mxu0 0.0
    %2153 = vmatprep.subr.mxu0 0.0
    %2154 = vmatpush1.msra.mxu0 0.0
    %2155 = vmatprep.subr.mxu0 0.0
    %2156 = vmatpush1.msra.mxu0 0.0
    %2157 = vmatprep.subr.mxu0 0.0
    %2158 = vmatpush1.msra.mxu0 0.0
    %2159 = vmatprep.subr.mxu0 0.0
    %2160 = vmatpush1.msra.mxu0 0.0
    %2161 = vmatprep.subr.mxu0 0.0
    %2162 = vmatpush1.msra.mxu0 0.0
    %2163 = vmatprep.subr.mxu0 0.0
    %2164 = vmatpush1.msra.mxu0 0.0
    %2165 = vmatprep.subr.mxu0 0.0
    %2166 = vmatpush1.msra.mxu0 0.0
    %2167 = vmatprep.subr.mxu0 0.0
    %2168 = vmatpush1.msra.mxu0 0.0
    %2169 = vmatprep.subr.mxu0 0.0
    %2170 = vmatpush1.msra.mxu0 0.0
    %2171 = vmatprep.subr.mxu0 0.0
    %2172 = vmatpush1.msra.mxu0 0.0
    %2173 = vmatprep.subr.mxu0 0.0
    %2174 = vmatpush1.msra.mxu0 0.0
    %2175 = vmatprep.subr.mxu0 0.0
    %2176 = vmatpush1.msra.mxu0 0.0
    %2177 = vmatprep.subr.mxu0 0.0
    %2178 = vmatpush1.msra.mxu0 0.0
    %2179 = vmatprep.subr.mxu0 0.0
    %2180 = vmatpush1.msra.mxu0 0.0
    %2181 = vmatprep.subr.mxu0 0.0
    %2182 = vmatpush1.msra.mxu0 0.0
    %2183 = vmatprep.subr.mxu0 0.0
    %2184 = vmatpush1.msra.mxu0 0.0
    %2185 = vmatprep.subr.mxu0 0.0
    %2186 = vmatpush1.msra.mxu0 0.0
    %2187 = vmatprep.subr.mxu0 0.0
    %2188 = vmatpush1.msra.mxu0 0.0
    %2189 = vmatprep.subr.mxu0 0.0
    %2190 = vmatpush1.msra.mxu0 0.0
    %2191 = vmatprep.subr.mxu0 0.0
    %2192 = vmatpush1.msra.mxu0 0.0
    %2193 = vmatprep.subr.mxu0 0.0
    %2194 = vmatpush1.msra.mxu0 0.0
    %2195 = vmatprep.subr.mxu0 0.0
    %2196 = vmatpush1.msra.mxu0 0.0
    %2197 = vmatprep.mubr.f32.mxu0 0.0
    %2198 = vmatmul.mubr.f32.gmra.mrb[0].mxu0 %v1960
    %v2199 = vpop.f32.mrb[0].mxu0
    %v2200 = vadd.f32 %v2132, %v2199
    %v2201 = vpop.f32.mrb[0].mxu0
    %2202 = vmatprep.mubr.f32.mxu0 0.0
    %2203 = vmatmul.mubr.f32.gmra.mrb[0].mxu0 %v1963
    %v2204 = vpop.f32.mrb[0].mxu0
    %v2205 = vadd.f32 %v2132, %v2204
    %v2206 = vpop.f32.mrb[0].mxu0
    %2207 = vdwg.mxu0
    %v2209 = vsel %vm658, %v2032, 0
    %v2212 = vsel %vm658, %v2116, 0
    %2214 = vmatprep.subr.mxu0 0.0
    %2215 = vmatpush1.xpose.msra.mxu0 %v2212
    %2216 = vmatprep.subr.mxu0 0.0
    %2217 = vmatpush1.xpose.msra.mxu0 0.0
    %2218 = vmatprep.subr.mxu0 0.0
    %2219 = vmatpush1.xpose.msra.mxu0 0.0
    %2220 = vmatprep.subr.mxu0 0.0
    %2221 = vmatpush1.xpose.msra.mxu0 0.0
    %2222 = vmatprep.subr.mxu0 0.0
    %2223 = vmatpush1.xpose.msra.mxu0 0.0
    %2224 = vmatprep.subr.mxu0 0.0
    %2225 = vmatpush1.xpose.msra.mxu0 0.0
    %2226 = vmatprep.subr.mxu0 0.0
    %2227 = vmatpush1.xpose.msra.mxu0 0.0
    %2228 = vmatprep.subr.mxu0 0.0
    %2229 = vmatpush1.xpose.msra.mxu0 0.0
    %2230 = vmatprep.subr.mxu0 0.0
    %2231 = vmatpush1.xpose.msra.mxu0 0.0
    %2232 = vmatprep.subr.mxu0 0.0
    %2233 = vmatpush1.xpose.msra.mxu0 0.0
    %2234 = vmatprep.subr.mxu0 0.0
    %2235 = vmatpush1.xpose.msra.mxu0 0.0
    %2236 = vmatprep.subr.mxu0 0.0
    %2237 = vmatpush1.xpose.msra.mxu0 0.0
    %2238 = vmatprep.subr.mxu0 0.0
    %2239 = vmatpush1.xpose.msra.mxu0 0.0
    %2240 = vmatprep.subr.mxu0 0.0
    %2241 = vmatpush1.xpose.msra.mxu0 0.0
    %2242 = vmatprep.subr.mxu0 0.0
    %2243 = vmatpush1.xpose.msra.mxu0 0.0
    %2244 = vmatprep.subr.mxu0 0.0
    %2245 = vmatpush1.xpose.msra.mxu0 0.0
    %2246 = vmatprep.subr.mxu0 0.0
    %2247 = vmatpush1.xpose.msra.mxu0 0.0
    %2248 = vmatprep.subr.mxu0 0.0
    %2249 = vmatpush1.xpose.msra.mxu0 0.0
    %2250 = vmatprep.subr.mxu0 0.0
    %2251 = vmatpush1.xpose.msra.mxu0 0.0
    %2252 = vmatprep.subr.mxu0 0.0
    %2253 = vmatpush1.xpose.msra.mxu0 0.0
    %2254 = vmatprep.subr.mxu0 0.0
    %2255 = vmatpush1.xpose.msra.mxu0 0.0
    %2256 = vmatprep.subr.mxu0 0.0
    %2257 = vmatpush1.xpose.msra.mxu0 0.0
    %2258 = vmatprep.subr.mxu0 0.0
    %2259 = vmatpush1.xpose.msra.mxu0 0.0
    %2260 = vmatprep.subr.mxu0 0.0
    %2261 = vmatpush1.xpose.msra.mxu0 0.0
    %2262 = vmatprep.subr.mxu0 0.0
    %2263 = vmatpush1.xpose.msra.mxu0 0.0
    %2264 = vmatprep.subr.mxu0 0.0
    %2265 = vmatpush1.xpose.msra.mxu0 0.0
    %2266 = vmatprep.subr.mxu0 0.0
    %2267 = vmatpush1.xpose.msra.mxu0 0.0
    %2268 = vmatprep.subr.mxu0 0.0
    %2269 = vmatpush1.xpose.msra.mxu0 0.0
    %2270 = vmatprep.subr.mxu0 0.0
    %2271 = vmatpush1.xpose.msra.mxu0 0.0
    %2272 = vmatprep.subr.mxu0 0.0
    %2273 = vmatpush1.xpose.msra.mxu0 0.0
    %2274 = vmatprep.subr.mxu0 0.0
    %2275 = vmatpush1.xpose.msra.mxu0 0.0
    %2276 = vmatprep.subr.mxu0 0.0
    %2277 = vmatpush1.xpose.msra.mxu0 0.0
    %2278 = vmatprep.mubr.f32.mxu0 0.0
    %2279 = vmatmul.mubr.f32.gmra.mrb[0].mxu0 %v2209
    %v2280 = vpop.f32.mrb[0].mxu0
    %v2281 = vadd.f32 0.0, %v2280
    %v2282 = vpop.f32.mrb[0].mxu0
    %2283 = vdwg.mxu0
    %v2285 = vsel %vm658, %v2037, 0
    %v2288 = vsel %vm658, %v2121, 0
    %2290 = vmatprep.subr.mxu0 0.0
    %2291 = vmatpush1.xpose.msra.mxu0 %v2288
    %2292 = vmatprep.subr.mxu0 0.0
    %2293 = vmatpush1.xpose.msra.mxu0 0.0
    %2294 = vmatprep.subr.mxu0 0.0
    %2295 = vmatpush1.xpose.msra.mxu0 0.0
    %2296 = vmatprep.subr.mxu0 0.0
    %2297 = vmatpush1.xpose.msra.mxu0 0.0
    %2298 = vmatprep.subr.mxu0 0.0
    %2299 = vmatpush1.xpose.msra.mxu0 0.0
    %2300 = vmatprep.subr.mxu0 0.0
    %2301 = vmatpush1.xpose.msra.mxu0 0.0
    %2302 = vmatprep.subr.mxu0 0.0
    %2303 = vmatpush1.xpose.msra.mxu0 0.0
    %2304 = vmatprep.subr.mxu0 0.0
    %2305 = vmatpush1.xpose.msra.mxu0 0.0
    %2306 = vmatprep.subr.mxu0 0.0
    %2307 = vmatpush1.xpose.msra.mxu0 0.0
    %2308 = vmatprep.subr.mxu0 0.0
    %2309 = vmatpush1.xpose.msra.mxu0 0.0
    %2310 = vmatprep.subr.mxu0 0.0
    %2311 = vmatpush1.xpose.msra.mxu0 0.0
    %2312 = vmatprep.subr.mxu0 0.0
    %2313 = vmatpush1.xpose.msra.mxu0 0.0
    %2314 = vmatprep.subr.mxu0 0.0
    %2315 = vmatpush1.xpose.msra.mxu0 0.0
    %2316 = vmatprep.subr.mxu0 0.0
    %2317 = vmatpush1.xpose.msra.mxu0 0.0
    %2318 = vmatprep.subr.mxu0 0.0
    %2319 = vmatpush1.xpose.msra.mxu0 0.0
    %2320 = vmatprep.subr.mxu0 0.0
    %2321 = vmatpush1.xpose.msra.mxu0 0.0
    %2322 = vmatprep.subr.mxu0 0.0
    %2323 = vmatpush1.xpose.msra.mxu0 0.0
    %2324 = vmatprep.subr.mxu0 0.0
    %2325 = vmatpush1.xpose.msra.mxu0 0.0
    %2326 = vmatprep.subr.mxu0 0.0
    %2327 = vmatpush1.xpose.msra.mxu0 0.0
    %2328 = vmatprep.subr.mxu0 0.0
    %2329 = vmatpush1.xpose.msra.mxu0 0.0
    %2330 = vmatprep.subr.mxu0 0.0
    %2331 = vmatpush1.xpose.msra.mxu0 0.0
    %2332 = vmatprep.subr.mxu0 0.0
    %2333 = vmatpush1.xpose.msra.mxu0 0.0
    %2334 = vmatprep.subr.mxu0 0.0
    %2335 = vmatpush1.xpose.msra.mxu0 0.0
    %2336 = vmatprep.subr.mxu0 0.0
    %2337 = vmatpush1.xpose.msra.mxu0 0.0
    %2338 = vmatprep.subr.mxu0 0.0
    %2339 = vmatpush1.xpose.msra.mxu0 0.0
    %2340 = vmatprep.subr.mxu0 0.0
    %2341 = vmatpush1.xpose.msra.mxu0 0.0
    %2342 = vmatprep.subr.mxu0 0.0
    %2343 = vmatpush1.xpose.msra.mxu0 0.0
    %2344 = vmatprep.subr.mxu0 0.0
    %2345 = vmatpush1.xpose.msra.mxu0 0.0
    %2346 = vmatprep.subr.mxu0 0.0
    %2347 = vmatpush1.xpose.msra.mxu0 0.0
    %2348 = vmatprep.subr.mxu0 0.0
    %2349 = vmatpush1.xpose.msra.mxu0 0.0
    %2350 = vmatprep.subr.mxu0 0.0
    %2351 = vmatpush1.xpose.msra.mxu0 0.0
    %2352 = vmatprep.subr.mxu0 0.0
    %2353 = vmatpush1.xpose.msra.mxu0 0.0
    %2354 = vmatprep.mubr.f32.mxu0 0.0
    %2355 = vmatmul.mubr.f32.gmra.mrb[0].mxu0 %v2285
    %v2356 = vpop.f32.mrb[0].mxu0
    %v2357 = vadd.f32 0.0, %v2356
    %v2358 = vpop.f32.mrb[0].mxu0
    %2359 = vdwg.mxu0
    %v2360 = vmul.f32 %v2281, 0.25
    %v2361 = vmul.f32 %v2357, 0.25
    %v2362 = vsel %vm356, %v2360, -1e+09
    %v2363 = vsel %vm357, %v2361, -1e+09
    %v2364 = vsel %vm815, %v2362, -inf
    %2365 = vmax.xlane.f32.xlu0 %v2364
    %v2366 = vpop.xlane.xlu0 %2365
    %v2367 = vsel %vm815, %v2363, -inf
    %2368 = vmax.xlane.f32.xlu0 %v2367
    %v2369 = vpop.xlane.xlu0 %2368
    %v2370 = vsub.f32 %v2362, %v2366
    %v2371 = vsub.f32 %v2363, %v2369
    %v2372 = vmul.f32 %v2370, 1.442695
    %v2373 = vpow.pop %v2372
    %v2374 = vmul.f32 %v2371, 1.442695
    %v2375 = vpow.pop %v2374
    %v2376 = vsel %vm815, %v2373, 0.0
    %2377 = vadd.xlane.f32.xlu0 %v2376
    %v2378 = vpop.xlane.xlu0 %2377
    %v2379 = vsel %vm815, %v2375, 0.0
    %2380 = vadd.xlane.f32.xlu0 %v2379
    %v2381 = vpop.xlane.xlu0 %2380
    %v2382 = vrcp.pop %v2378
    %v2383 = vrcp.pop %v2381
    %v2384 = vmul.f32 %v2373, %v2382
    %v2385 = vmul.f32 %v2375, %v2383
    %v2387 = vsel %vm815, %v2384, 0
    %2389 = vmatprep.subr.mxu0 0.0
    %2390 = vmatpush1.msra.mxu0 %v2200
    %2391 = vmatprep.subr.mxu0 0.0
    %2392 = vmatpush1.msra.mxu0 0.0
    %2393 = vmatprep.subr.mxu0 0.0
    %2394 = vmatpush1.msra.mxu0 0.0
    %2395 = vmatprep.subr.mxu0 0.0
    %2396 = vmatpush1.msra.mxu0 0.0
    %2397 = vmatprep.subr.mxu0 0.0
    %2398 = vmatpush1.msra.mxu0 0.0
    %2399 = vmatprep.subr.mxu0 0.0
    %2400 = vmatpush1.msra.mxu0 0.0
    %2401 = vmatprep.subr.mxu0 0.0
    %2402 = vmatpush1.msra.mxu0 0.0
    %2403 = vmatprep.subr.mxu0 0.0
    %2404 = vmatpush1.msra.mxu0 0.0
    %2405 = vmatprep.subr.mxu0 0.0
    %2406 = vmatpush1.msra.mxu0 0.0
    %2407 = vmatprep.subr.mxu0 0.0
    %2408 = vmatpush1.msra.mxu0 0.0
    %2409 = vmatprep.subr.mxu0 0.0
    %2410 = vmatpush1.msra.mxu0 0.0
    %2411 = vmatprep.subr.mxu0 0.0
    %2412 = vmatpush1.msra.mxu0 0.0
    %2413 = vmatprep.subr.mxu0 0.0
    %2414 = vmatpush1.msra.mxu0 0.0
    %2415 = vmatprep.subr.mxu0 0.0
    %2416 = vmatpush1.msra.mxu0 0.0
    %2417 = vmatprep.subr.mxu0 0.0
    %2418 = vmatpush1.msra.mxu0 0.0
    %2419 = vmatprep.subr.mxu0 0.0
    %2420 = vmatpush1.msra.mxu0 0.0
    %2421 = vmatprep.subr.mxu0 0.0
    %2422 = vmatpush1.msra.mxu0 0.0
    %2423 = vmatprep.subr.mxu0 0.0
    %2424 = vmatpush1.msra.mxu0 0.0
    %2425 = vmatprep.subr.mxu0 0.0
    %2426 = vmatpush1.msra.mxu0 0.0
    %2427 = vmatprep.subr.mxu0 0.0
    %2428 = vmatpush1.msra.mxu0 0.0
    %2429 = vmatprep.subr.mxu0 0.0
    %2430 = vmatpush1.msra.mxu0 0.0
    %2431 = vmatprep.subr.mxu0 0.0
    %2432 = vmatpush1.msra.mxu0 0.0
    %2433 = vmatprep.subr.mxu0 0.0
    %2434 = vmatpush1.msra.mxu0 0.0
    %2435 = vmatprep.subr.mxu0 0.0
    %2436 = vmatpush1.msra.mxu0 0.0
    %2437 = vmatprep.subr.mxu0 0.0
    %2438 = vmatpush1.msra.mxu0 0.0
    %2439 = vmatprep.subr.mxu0 0.0
    %2440 = vmatpush1.msra.mxu0 0.0
    %2441 = vmatprep.subr.mxu0 0.0
    %2442 = vmatpush1.msra.mxu0 0.0
    %2443 = vmatprep.subr.mxu0 0.0
    %2444 = vmatpush1.msra.mxu0 0.0
    %2445 = vmatprep.subr.mxu0 0.0
    %2446 = vmatpush1.msra.mxu0 0.0
    %2447 = vmatprep.subr.mxu0 0.0
    %2448 = vmatpush1.msra.mxu0 0.0
    %2449 = vmatprep.subr.mxu0 0.0
    %2450 = vmatpush1.msra.mxu0 0.0
    %2451 = vmatprep.subr.mxu0 0.0
    %2452 = vmatpush1.msra.mxu0 0.0
    %2453 = vmatprep.mubr.f32.mxu0 0.0
    %2454 = vmatmul.mubr.f32.gmra.mrb[0].mxu0 %v2387
    %v2455 = vpop.f32.mrb[0].mxu0
    %v2456 = vadd.f32 0.0, %v2455
    %v2457 = vpop.f32.mrb[0].mxu0
    %2458 = vdwg.mxu0
    %v2460 = vsel %vm815, %v2385, 0
    %2462 = vmatprep.subr.mxu0 0.0
    %2463 = vmatpush1.msra.mxu0 %v2205
    %2464 = vmatprep.subr.mxu0 0.0
    %2465 = vmatpush1.msra.mxu0 0.0
    %2466 = vmatprep.subr.mxu0 0.0
    %2467 = vmatpush1.msra.mxu0 0.0
    %2468 = vmatprep.subr.mxu0 0.0
    %2469 = vmatpush1.msra.mxu0 0.0
    %2470 = vmatprep.subr.mxu0 0.0
    %2471 = vmatpush1.msra.mxu0 0.0
    %2472 = vmatprep.subr.mxu0 0.0
    %2473 = vmatpush1.msra.mxu0 0.0
    %2474 = vmatprep.subr.mxu0 0.0
    %2475 = vmatpush1.msra.mxu0 0.0
    %2476 = vmatprep.subr.mxu0 0.0
    %2477 = vmatpush1.msra.mxu0 0.0
    %2478 = vmatprep.subr.mxu0 0.0
    %2479 = vmatpush1.msra.mxu0 0.0
    %2480 = vmatprep.subr.mxu0 0.0
    %2481 = vmatpush1.msra.mxu0 0.0
    %2482 = vmatprep.subr.mxu0 0.0
    %2483 = vmatpush1.msra.mxu0 0.0
    %2484 = vmatprep.subr.mxu0 0.0
    %2485 = vmatpush1.msra.mxu0 0.0
    %2486 = vmatprep.subr.mxu0 0.0
    %2487 = vmatpush1.msra.mxu0 0.0
    %2488 = vmatprep.subr.mxu0 0.0
    %2489 = vmatpush1.msra.mxu0 0.0
    %2490 = vmatprep.subr.mxu0 0.0
    %2491 = vmatpush1.msra.mxu0 0.0
    %2492 = vmatprep.subr.mxu0 0.0
    %2493 = vmatpush1.msra.mxu0 0.0
    %2494 = vmatprep.subr.mxu0 0.0
    %2495 = vmatpush1.msra.mxu0 0.0
    %2496 = vmatprep.subr.mxu0 0.0
    %2497 = vmatpush1.msra.mxu0 0.0
    %2498 = vmatprep.subr.mxu0 0.0
    %2499 = vmatpush1.msra.mxu0 0.0
    %2500 = vmatprep.subr.mxu0 0.0
    %2501 = vmatpush1.msra.mxu0 0.0
    %2502 = vmatprep.subr.mxu0 0.0
    %2503 = vmatpush1.msra.mxu0 0.0
    %2504 = vmatprep.subr.mxu0 0.0
    %2505 = vmatpush1.msra.mxu0 0.0
    %2506 = vmatprep.subr.mxu0 0.0
    %2507 = vmatpush1.msra.mxu0 0.0
    %2508 = vmatprep.subr.mxu0 0.0
    %2509 = vmatpush1.msra.mxu0 0.0
    %2510 = vmatprep.subr.mxu0 0.0
    %2511 = vmatpush1.msra.mxu0 0.0
    %2512 = vmatprep.subr.mxu0 0.0
    %2513 = vmatpush1.msra.mxu0 0.0
    %2514 = vmatprep.subr.mxu0 0.0
    %2515 = vmatpush1.msra.mxu0 0.0
    %2516 = vmatprep.subr.mxu0 0.0
    %2517 = vmatpush1.msra.mxu0 0.0
    %2518 = vmatprep.subr.mxu0 0.0
    %2519 = vmatpush1.msra.mxu0 0.0
    %2520 = vmatprep.subr.mxu0 0.0
    %2521 = vmatpush1.msra.mxu0 0.0
    %2522 = vmatprep.subr.mxu0 0.0
    %2523 = vmatpush1.msra.mxu0 0.0
    %2524 = vmatprep.subr.mxu0 0.0
    %2525 = vmatpush1.msra.mxu0 0.0
    %2526 = vmatprep.mubr.f32.mxu0 0.0
    %2527 = vmatmul.mubr.f32.gmra.mrb[0].mxu0 %v2460
    %v2528 = vpop.f32.mrb[0].mxu0
    %v2529 = vadd.f32 0.0, %v2528
    %v2530 = vpop.f32.mrb[0].mxu0
    %2531 = vdwg.mxu0
    %v2532 = vld [vmem:[#allocation8 + $0x1b0] sm:$0xff]
    %v2533 = vld [vmem:[#allocation8 + $0x1b8] sm:$0xff]
    %v2534 = vld [vmem:[#allocation8 + $0x1c0] sm:$0xff]
    %v2535 = vld [vmem:[#allocation8 + $0x1c8] sm:$0xff]
    %v2536 = vld [vmem:[#allocation8 + $0x318] sm:$0x1]
    %v2537 = vlaneseq
    %v2538 = vshrl.u32 %v2537, 7
    %v2539 = vsub.s32 0, %v2538
    %v2540 = vrot.slane %v2536, %v2539
    %2541 = vmatprep.subr.mxu0 0.0
    %2542 = vmatpush1.msra.mxu0 %v2532
    %2543 = vmatprep.subr.mxu0 0.0
    %2544 = vmatpush1.msra.mxu0 %v2533
    %2545 = vmatprep.subr.mxu0 0.0
    %2546 = vmatpush1.msra.mxu0 %v2534
    %2547 = vmatprep.subr.mxu0 0.0
    %2548 = vmatpush1.msra.mxu0 %v2535
    %2549 = vmatprep.subr.mxu0 0.0
    %2550 = vmatpush1.msra.mxu0 0.0
    %2551 = vmatprep.subr.mxu0 0.0
    %2552 = vmatpush1.msra.mxu0 0.0
    %2553 = vmatprep.subr.mxu0 0.0
    %2554 = vmatpush1.msra.mxu0 0.0
    %2555 = vmatprep.subr.mxu0 0.0
    %2556 = vmatpush1.msra.mxu0 0.0
    %2557 = vmatprep.subr.mxu0 0.0
    %2558 = vmatpush1.msra.mxu0 0.0
    %2559 = vmatprep.subr.mxu0 0.0
    %2560 = vmatpush1.msra.mxu0 0.0
    %2561 = vmatprep.subr.mxu0 0.0
    %2562 = vmatpush1.msra.mxu0 0.0
    %2563 = vmatprep.subr.mxu0 0.0
    %2564 = vmatpush1.msra.mxu0 0.0
    %2565 = vmatprep.subr.mxu0 0.0
    %2566 = vmatpush1.msra.mxu0 0.0
    %2567 = vmatprep.subr.mxu0 0.0
    %2568 = vmatpush1.msra.mxu0 0.0
    %2569 = vmatprep.subr.mxu0 0.0
    %2570 = vmatpush1.msra.mxu0 0.0
    %2571 = vmatprep.subr.mxu0 0.0
    %2572 = vmatpush1.msra.mxu0 0.0
    %2573 = vmatprep.subr.mxu0 0.0
    %2574 = vmatpush1.msra.mxu0 0.0
    %2575 = vmatprep.subr.mxu0 0.0
    %2576 = vmatpush1.msra.mxu0 0.0
    %2577 = vmatprep.subr.mxu0 0.0
    %2578 = vmatpush1.msra.mxu0 0.0
    %2579 = vmatprep.subr.mxu0 0.0
    %2580 = vmatpush1.msra.mxu0 0.0
    %2581 = vmatprep.subr.mxu0 0.0
    %2582 = vmatpush1.msra.mxu0 0.0
    %2583 = vmatprep.subr.mxu0 0.0
    %2584 = vmatpush1.msra.mxu0 0.0
    %2585 = vmatprep.subr.mxu0 0.0
    %2586 = vmatpush1.msra.mxu0 0.0
    %2587 = vmatprep.subr.mxu0 0.0
    %2588 = vmatpush1.msra.mxu0 0.0
    %2589 = vmatprep.subr.mxu0 0.0
    %2590 = vmatpush1.msra.mxu0 0.0
    %2591 = vmatprep.subr.mxu0 0.0
    %2592 = vmatpush1.msra.mxu0 0.0
    %2593 = vmatprep.subr.mxu0 0.0
    %2594 = vmatpush1.msra.mxu0 0.0
    %2595 = vmatprep.subr.mxu0 0.0
    %2596 = vmatpush1.msra.mxu0 0.0
    %2597 = vmatprep.subr.mxu0 0.0
    %2598 = vmatpush1.msra.mxu0 0.0
    %2599 = vmatprep.subr.mxu0 0.0
    %2600 = vmatpush1.msra.mxu0 0.0
    %2601 = vmatprep.subr.mxu0 0.0
    %2602 = vmatpush1.msra.mxu0 0.0
    %2603 = vmatprep.subr.mxu0 0.0
    %2604 = vmatpush1.msra.mxu0 0.0
    %2605 = vmatprep.mubr.f32.mxu0 0.0
    %2606 = vmatmul.mubr.f32.gmra.mrb[0].mxu0 %v1960
    %v2607 = vpop.f32.mrb[0].mxu0
    %v2608 = vadd.f32 %v2540, %v2607
    %v2609 = vpop.f32.mrb[0].mxu0
    %2610 = vmatprep.mubr.f32.mxu0 0.0
    %2611 = vmatmul.mubr.f32.gmra.mrb[0].mxu0 %v1963
    %v2612 = vpop.f32.mrb[0].mxu0
    %v2613 = vadd.f32 %v2540, %v2612
    %v2614 = vpop.f32.mrb[0].mxu0
    %2615 = vdwg.mxu0
    %v2616 = vld [vmem:[#allocation8 + $0x1f0] sm:$0xff]
    %v2617 = vld [vmem:[#allocation8 + $0x1f8] sm:$0xff]
    %v2618 = vld [vmem:[#allocation8 + $0x200] sm:$0xff]
    %v2619 = vld [vmem:[#allocation8 + $0x208] sm:$0xff]
    %v2620 = vld [vmem:[#allocation8 + $0x31a] sm:$0x1]
    %v2621 = vlaneseq
    %v2622 = vshrl.u32 %v2621, 7
    %v2623 = vsub.s32 0, %v2622
    %v2624 = vrot.slane %v2620, %v2623
    %2625 = vmatprep.subr.mxu0 0.0
    %2626 = vmatpush1.msra.mxu0 %v2616
    %2627 = vmatprep.subr.mxu0 0.0
    %2628 = vmatpush1.msra.mxu0 %v2617
    %2629 = vmatprep.subr.mxu0 0.0
    %2630 = vmatpush1.msra.mxu0 %v2618
    %2631 = vmatprep.subr.mxu0 0.0
    %2632 = vmatpush1.msra.mxu0 %v2619
    %2633 = vmatprep.subr.mxu0 0.0
    %2634 = vmatpush1.msra.mxu0 0.0
    %2635 = vmatprep.subr.mxu0 0.0
    %2636 = vmatpush1.msra.mxu0 0.0
    %2637 = vmatprep.subr.mxu0 0.0
    %2638 = vmatpush1.msra.mxu0 0.0
    %2639 = vmatprep.subr.mxu0 0.0
    %2640 = vmatpush1.msra.mxu0 0.0
    %2641 = vmatprep.subr.mxu0 0.0
    %2642 = vmatpush1.msra.mxu0 0.0
    %2643 = vmatprep.subr.mxu0 0.0
    %2644 = vmatpush1.msra.mxu0 0.0
    %2645 = vmatprep.subr.mxu0 0.0
    %2646 = vmatpush1.msra.mxu0 0.0
    %2647 = vmatprep.subr.mxu0 0.0
    %2648 = vmatpush1.msra.mxu0 0.0
    %2649 = vmatprep.subr.mxu0 0.0
    %2650 = vmatpush1.msra.mxu0 0.0
    %2651 = vmatprep.subr.mxu0 0.0
    %2652 = vmatpush1.msra.mxu0 0.0
    %2653 = vmatprep.subr.mxu0 0.0
    %2654 = vmatpush1.msra.mxu0 0.0
    %2655 = vmatprep.subr.mxu0 0.0
    %2656 = vmatpush1.msra.mxu0 0.0
    %2657 = vmatprep.subr.mxu0 0.0
    %2658 = vmatpush1.msra.mxu0 0.0
    %2659 = vmatprep.subr.mxu0 0.0
    %2660 = vmatpush1.msra.mxu0 0.0
    %2661 = vmatprep.subr.mxu0 0.0
    %2662 = vmatpush1.msra.mxu0 0.0
    %2663 = vmatprep.subr.mxu0 0.0
    %2664 = vmatpush1.msra.mxu0 0.0
    %2665 = vmatprep.subr.mxu0 0.0
    %2666 = vmatpush1.msra.mxu0 0.0
    %2667 = vmatprep.subr.mxu0 0.0
    %2668 = vmatpush1.msra.mxu0 0.0
    %2669 = vmatprep.subr.mxu0 0.0
    %2670 = vmatpush1.msra.mxu0 0.0
    %2671 = vmatprep.subr.mxu0 0.0
    %2672 = vmatpush1.msra.mxu0 0.0
    %2673 = vmatprep.subr.mxu0 0.0
    %2674 = vmatpush1.msra.mxu0 0.0
    %2675 = vmatprep.subr.mxu0 0.0
    %2676 = vmatpush1.msra.mxu0 0.0
    %2677 = vmatprep.subr.mxu0 0.0
    %2678 = vmatpush1.msra.mxu0 0.0
    %2679 = vmatprep.subr.mxu0 0.0
    %2680 = vmatpush1.msra.mxu0 0.0
    %2681 = vmatprep.subr.mxu0 0.0
    %2682 = vmatpush1.msra.mxu0 0.0
    %2683 = vmatprep.subr.mxu0 0.0
    %2684 = vmatpush1.msra.mxu0 0.0
    %2685 = vmatprep.subr.mxu0 0.0
    %2686 = vmatpush1.msra.mxu0 0.0
    %2687 = vmatprep.subr.mxu0 0.0
    %2688 = vmatpush1.msra.mxu0 0.0
    %2689 = vmatprep.mubr.f32.mxu0 0.0
    %2690 = vmatmul.mubr.f32.gmra.mrb[0].mxu0 %v1960
    %v2691 = vpop.f32.mrb[0].mxu0
    %v2692 = vadd.f32 %v2624, %v2691
    %v2693 = vpop.f32.mrb[0].mxu0
    %2694 = vmatprep.mubr.f32.mxu0 0.0
    %2695 = vmatmul.mubr.f32.gmra.mrb[0].mxu0 %v1963
    %v2696 = vpop.f32.mrb[0].mxu0
    %v2697 = vadd.f32 %v2624, %v2696
    %v2698 = vpop.f32.mrb[0].mxu0
    %2699 = vdwg.mxu0
    %v2700 = vld [vmem:[#allocation8 + $0x230] sm:$0xff]
    %v2701 = vld [vmem:[#allocation8 + $0x238] sm:$0xff]
    %v2702 = vld [vmem:[#allocation8 + $0x240] sm:$0xff]
    %v2703 = vld [vmem:[#allocation8 + $0x248] sm:$0xff]
    %v2704 = vld [vmem:[#allocation8 + $0x31c] sm:$0x1]
    %v2705 = vlaneseq
    %v2706 = vshrl.u32 %v2705, 7
    %v2707 = vsub.s32 0, %v2706
    %v2708 = vrot.slane %v2704, %v2707
    %2709 = vmatprep.subr.mxu0 0.0
    %2710 = vmatpush1.msra.mxu0 %v2700
    %2711 = vmatprep.subr.mxu0 0.0
    %2712 = vmatpush1.msra.mxu0 %v2701
    %2713 = vmatprep.subr.mxu0 0.0
    %2714 = vmatpush1.msra.mxu0 %v2702
    %2715 = vmatprep.subr.mxu0 0.0
    %2716 = vmatpush1.msra.mxu0 %v2703
    %2717 = vmatprep.subr.mxu0 0.0
    %2718 = vmatpush1.msra.mxu0 0.0
    %2719 = vmatprep.subr.mxu0 0.0
    %2720 = vmatpush1.msra.mxu0 0.0
    %2721 = vmatprep.subr.mxu0 0.0
    %2722 = vmatpush1.msra.mxu0 0.0
    %2723 = vmatprep.subr.mxu0 0.0
    %2724 = vmatpush1.msra.mxu0 0.0
    %2725 = vmatprep.subr.mxu0 0.0
    %2726 = vmatpush1.msra.mxu0 0.0
    %2727 = vmatprep.subr.mxu0 0.0
    %2728 = vmatpush1.msra.mxu0 0.0
    %2729 = vmatprep.subr.mxu0 0.0
    %2730 = vmatpush1.msra.mxu0 0.0
    %2731 = vmatprep.subr.mxu0 0.0
    %2732 = vmatpush1.msra.mxu0 0.0
    %2733 = vmatprep.subr.mxu0 0.0
    %2734 = vmatpush1.msra.mxu0 0.0
    %2735 = vmatprep.subr.mxu0 0.0
    %2736 = vmatpush1.msra.mxu0 0.0
    %2737 = vmatprep.subr.mxu0 0.0
    %2738 = vmatpush1.msra.mxu0 0.0
    %2739 = vmatprep.subr.mxu0 0.0
    %2740 = vmatpush1.msra.mxu0 0.0
    %2741 = vmatprep.subr.mxu0 0.0
    %2742 = vmatpush1.msra.mxu0 0.0
    %2743 = vmatprep.subr.mxu0 0.0
    %2744 = vmatpush1.msra.mxu0 0.0
    %2745 = vmatprep.subr.mxu0 0.0
    %2746 = vmatpush1.msra.mxu0 0.0
    %2747 = vmatprep.subr.mxu0 0.0
    %2748 = vmatpush1.msra.mxu0 0.0
    %2749 = vmatprep.subr.mxu0 0.0
    %2750 = vmatpush1.msra.mxu0 0.0
    %2751 = vmatprep.subr.mxu0 0.0
    %2752 = vmatpush1.msra.mxu0 0.0
    %2753 = vmatprep.subr.mxu0 0.0
    %2754 = vmatpush1.msra.mxu0 0.0
    %2755 = vmatprep.subr.mxu0 0.0
    %2756 = vmatpush1.msra.mxu0 0.0
    %2757 = vmatprep.subr.mxu0 0.0
    %2758 = vmatpush1.msra.mxu0 0.0
    %2759 = vmatprep.subr.mxu0 0.0
    %2760 = vmatpush1.msra.mxu0 0.0
    %2761 = vmatprep.subr.mxu0 0.0
    %2762 = vmatpush1.msra.mxu0 0.0
    %2763 = vmatprep.subr.mxu0 0.0
    %2764 = vmatpush1.msra.mxu0 0.0
    %2765 = vmatprep.subr.mxu0 0.0
    %2766 = vmatpush1.msra.mxu0 0.0
    %2767 = vmatprep.subr.mxu0 0.0
    %2768 = vmatpush1.msra.mxu0 0.0
    %2769 = vmatprep.subr.mxu0 0.0
    %2770 = vmatpush1.msra.mxu0 0.0
    %2771 = vmatprep.subr.mxu0 0.0
    %2772 = vmatpush1.msra.mxu0 0.0
    %2773 = vmatprep.mubr.f32.mxu0 0.0
    %2774 = vmatmul.mubr.f32.gmra.mrb[0].mxu0 %v1960
    %v2775 = vpop.f32.mrb[0].mxu0
    %v2776 = vadd.f32 %v2708, %v2775
    %v2777 = vpop.f32.mrb[0].mxu0
    %2778 = vmatprep.mubr.f32.mxu0 0.0
    %2779 = vmatmul.mubr.f32.gmra.mrb[0].mxu0 %v1963
    %v2780 = vpop.f32.mrb[0].mxu0
    %v2781 = vadd.f32 %v2708, %v2780
    %v2782 = vpop.f32.mrb[0].mxu0
    %2783 = vdwg.mxu0
    %v2785 = vsel %vm658, %v2608, 0
    %v2788 = vsel %vm658, %v2692, 0
    %2790 = vmatprep.subr.mxu0 0.0
    %2791 = vmatpush1.xpose.msra.mxu0 %v2788
    %2792 = vmatprep.subr.mxu0 0.0
    %2793 = vmatpush1.xpose.msra.mxu0 0.0
    %2794 = vmatprep.subr.mxu0 0.0
    %2795 = vmatpush1.xpose.msra.mxu0 0.0
    %2796 = vmatprep.subr.mxu0 0.0
    %2797 = vmatpush1.xpose.msra.mxu0 0.0
    %2798 = vmatprep.subr.mxu0 0.0
    %2799 = vmatpush1.xpose.msra.mxu0 0.0
    %2800 = vmatprep.subr.mxu0 0.0
    %2801 = vmatpush1.xpose.msra.mxu0 0.0
    %2802 = vmatprep.subr.mxu0 0.0
    %2803 = vmatpush1.xpose.msra.mxu0 0.0
    %2804 = vmatprep.subr.mxu0 0.0
    %2805 = vmatpush1.xpose.msra.mxu0 0.0
    %2806 = vmatprep.subr.mxu0 0.0
    %2807 = vmatpush1.xpose.msra.mxu0 0.0
    %2808 = vmatprep.subr.mxu0 0.0
    %2809 = vmatpush1.xpose.msra.mxu0 0.0
    %2810 = vmatprep.subr.mxu0 0.0
    %2811 = vmatpush1.xpose.msra.mxu0 0.0
    %2812 = vmatprep.subr.mxu0 0.0
    %2813 = vmatpush1.xpose.msra.mxu0 0.0
    %2814 = vmatprep.subr.mxu0 0.0
    %2815 = vmatpush1.xpose.msra.mxu0 0.0
    %2816 = vmatprep.subr.mxu0 0.0
    %2817 = vmatpush1.xpose.msra.mxu0 0.0
    %2818 = vmatprep.subr.mxu0 0.0
    %2819 = vmatpush1.xpose.msra.mxu0 0.0
    %2820 = vmatprep.subr.mxu0 0.0
    %2821 = vmatpush1.xpose.msra.mxu0 0.0
    %2822 = vmatprep.subr.mxu0 0.0
    %2823 = vmatpush1.xpose.msra.mxu0 0.0
    %2824 = vmatprep.subr.mxu0 0.0
    %2825 = vmatpush1.xpose.msra.mxu0 0.0
    %2826 = vmatprep.subr.mxu0 0.0
    %2827 = vmatpush1.xpose.msra.mxu0 0.0
    %2828 = vmatprep.subr.mxu0 0.0
    %2829 = vmatpush1.xpose.msra.mxu0 0.0
    %2830 = vmatprep.subr.mxu0 0.0
    %2831 = vmatpush1.xpose.msra.mxu0 0.0
    %2832 = vmatprep.subr.mxu0 0.0
    %2833 = vmatpush1.xpose.msra.mxu0 0.0
    %2834 = vmatprep.subr.mxu0 0.0
    %2835 = vmatpush1.xpose.msra.mxu0 0.0
    %2836 = vmatprep.subr.mxu0 0.0
    %2837 = vmatpush1.xpose.msra.mxu0 0.0
    %2838 = vmatprep.subr.mxu0 0.0
    %2839 = vmatpush1.xpose.msra.mxu0 0.0
    %2840 = vmatprep.subr.mxu0 0.0
    %2841 = vmatpush1.xpose.msra.mxu0 0.0
    %2842 = vmatprep.subr.mxu0 0.0
    %2843 = vmatpush1.xpose.msra.mxu0 0.0
    %2844 = vmatprep.subr.mxu0 0.0
    %2845 = vmatpush1.xpose.msra.mxu0 0.0
    %2846 = vmatprep.subr.mxu0 0.0
    %2847 = vmatpush1.xpose.msra.mxu0 0.0
    %2848 = vmatprep.subr.mxu0 0.0
    %2849 = vmatpush1.xpose.msra.mxu0 0.0
    %2850 = vmatprep.subr.mxu0 0.0
    %2851 = vmatpush1.xpose.msra.mxu0 0.0
    %2852 = vmatprep.subr.mxu0 0.0
    %2853 = vmatpush1.xpose.msra.mxu0 0.0
    %2854 = vmatprep.mubr.f32.mxu0 0.0
    %2855 = vmatmul.mubr.f32.gmra.mrb[0].mxu0 %v2785
    %v2856 = vpop.f32.mrb[0].mxu0
    %v2857 = vadd.f32 0.0, %v2856
    %v2858 = vpop.f32.mrb[0].mxu0
    %2859 = vdwg.mxu0
    %v2861 = vsel %vm658, %v2613, 0
    %v2864 = vsel %vm658, %v2697, 0
    %2866 = vmatprep.subr.mxu0 0.0
    %2867 = vmatpush1.xpose.msra.mxu0 %v2864
    %2868 = vmatprep.subr.mxu0 0.0
    %2869 = vmatpush1.xpose.msra.mxu0 0.0
    %2870 = vmatprep.subr.mxu0 0.0
    %2871 = vmatpush1.xpose.msra.mxu0 0.0
    %2872 = vmatprep.subr.mxu0 0.0
    %2873 = vmatpush1.xpose.msra.mxu0 0.0
    %2874 = vmatprep.subr.mxu0 0.0
    %2875 = vmatpush1.xpose.msra.mxu0 0.0
    %2876 = vmatprep.subr.mxu0 0.0
    %2877 = vmatpush1.xpose.msra.mxu0 0.0
    %2878 = vmatprep.subr.mxu0 0.0
    %2879 = vmatpush1.xpose.msra.mxu0 0.0
    %2880 = vmatprep.subr.mxu0 0.0
    %2881 = vmatpush1.xpose.msra.mxu0 0.0
    %2882 = vmatprep.subr.mxu0 0.0
    %2883 = vmatpush1.xpose.msra.mxu0 0.0
    %2884 = vmatprep.subr.mxu0 0.0
    %2885 = vmatpush1.xpose.msra.mxu0 0.0
    %2886 = vmatprep.subr.mxu0 0.0
    %2887 = vmatpush1.xpose.msra.mxu0 0.0
    %2888 = vmatprep.subr.mxu0 0.0
    %2889 = vmatpush1.xpose.msra.mxu0 0.0
    %2890 = vmatprep.subr.mxu0 0.0
    %2891 = vmatpush1.xpose.msra.mxu0 0.0
    %2892 = vmatprep.subr.mxu0 0.0
    %2893 = vmatpush1.xpose.msra.mxu0 0.0
    %2894 = vmatprep.subr.mxu0 0.0
    %2895 = vmatpush1.xpose.msra.mxu0 0.0
    %2896 = vmatprep.subr.mxu0 0.0
    %2897 = vmatpush1.xpose.msra.mxu0 0.0
    %2898 = vmatprep.subr.mxu0 0.0
    %2899 = vmatpush1.xpose.msra.mxu0 0.0
    %2900 = vmatprep.subr.mxu0 0.0
    %2901 = vmatpush1.xpose.msra.mxu0 0.0
    %2902 = vmatprep.subr.mxu0 0.0
    %2903 = vmatpush1.xpose.msra.mxu0 0.0
    %2904 = vmatprep.subr.mxu0 0.0
    %2905 = vmatpush1.xpose.msra.mxu0 0.0
    %2906 = vmatprep.subr.mxu0 0.0
    %2907 = vmatpush1.xpose.msra.mxu0 0.0
    %2908 = vmatprep.subr.mxu0 0.0
    %2909 = vmatpush1.xpose.msra.mxu0 0.0
    %2910 = vmatprep.subr.mxu0 0.0
    %2911 = vmatpush1.xpose.msra.mxu0 0.0
    %2912 = vmatprep.subr.mxu0 0.0
    %2913 = vmatpush1.xpose.msra.mxu0 0.0
    %2914 = vmatprep.subr.mxu0 0.0
    %2915 = vmatpush1.xpose.msra.mxu0 0.0
    %2916 = vmatprep.subr.mxu0 0.0
    %2917 = vmatpush1.xpose.msra.mxu0 0.0
    %2918 = vmatprep.subr.mxu0 0.0
    %2919 = vmatpush1.xpose.msra.mxu0 0.0
    %2920 = vmatprep.subr.mxu0 0.0
    %2921 = vmatpush1.xpose.msra.mxu0 0.0
    %2922 = vmatprep.subr.mxu0 0.0
    %2923 = vmatpush1.xpose.msra.mxu0 0.0
    %2924 = vmatprep.subr.mxu0 0.0
    %2925 = vmatpush1.xpose.msra.mxu0 0.0
    %2926 = vmatprep.subr.mxu0 0.0
    %2927 = vmatpush1.xpose.msra.mxu0 0.0
    %2928 = vmatprep.subr.mxu0 0.0
    %2929 = vmatpush1.xpose.msra.mxu0 0.0
    %2930 = vmatprep.mubr.f32.mxu0 0.0
    %2931 = vmatmul.mubr.f32.gmra.mrb[0].mxu0 %v2861
    %v2932 = vpop.f32.mrb[0].mxu0
    %v2933 = vadd.f32 0.0, %v2932
    %v2934 = vpop.f32.mrb[0].mxu0
    %2935 = vdwg.mxu0
    %v2936 = vmul.f32 %v2857, 0.25
    %v2937 = vmul.f32 %v2933, 0.25
    %v2938 = vsel %vm356, %v2936, -1e+09
    %v2939 = vsel %vm357, %v2937, -1e+09
    %v2940 = vsel %vm815, %v2938, -inf
    %2941 = vmax.xlane.f32.xlu0 %v2940
    %v2942 = vpop.xlane.xlu0 %2941
    %v2943 = vsel %vm815, %v2939, -inf
    %2944 = vmax.xlane.f32.xlu0 %v2943
    %v2945 = vpop.xlane.xlu0 %2944
    %v2946 = vsub.f32 %v2938, %v2942
    %v2947 = vsub.f32 %v2939, %v2945
    %v2948 = vmul.f32 %v2946, 1.442695
    %v2949 = vpow.pop %v2948
    %v2950 = vmul.f32 %v2947, 1.442695
    %v2951 = vpow.pop %v2950
    %v2952 = vsel %vm815, %v2949, 0.0
    %2953 = vadd.xlane.f32.xlu0 %v2952
    %v2954 = vpop.xlane.xlu0 %2953
    %v2955 = vsel %vm815, %v2951, 0.0
    %2956 = vadd.xlane.f32.xlu0 %v2955
    %v2957 = vpop.xlane.xlu0 %2956
    %v2958 = vrcp.pop %v2954
    %v2959 = vrcp.pop %v2957
    %v2960 = vmul.f32 %v2949, %v2958
    %v2961 = vmul.f32 %v2951, %v2959
    %v2963 = vsel %vm815, %v2960, 0
    %2965 = vmatprep.subr.mxu0 0.0
    %2966 = vmatpush1.msra.mxu0 %v2776
    %2967 = vmatprep.subr.mxu0 0.0
    %2968 = vmatpush1.msra.mxu0 0.0
    %2969 = vmatprep.subr.mxu0 0.0
    %2970 = vmatpush1.msra.mxu0 0.0
    %2971 = vmatprep.subr.mxu0 0.0
    %2972 = vmatpush1.msra.mxu0 0.0
    %2973 = vmatprep.subr.mxu0 0.0
    %2974 = vmatpush1.msra.mxu0 0.0
    %2975 = vmatprep.subr.mxu0 0.0
    %2976 = vmatpush1.msra.mxu0 0.0
    %2977 = vmatprep.subr.mxu0 0.0
    %2978 = vmatpush1.msra.mxu0 0.0
    %2979 = vmatprep.subr.mxu0 0.0
    %2980 = vmatpush1.msra.mxu0 0.0
    %2981 = vmatprep.subr.mxu0 0.0
    %2982 = vmatpush1.msra.mxu0 0.0
    %2983 = vmatprep.subr.mxu0 0.0
    %2984 = vmatpush1.msra.mxu0 0.0
    %2985 = vmatprep.subr.mxu0 0.0
    %2986 = vmatpush1.msra.mxu0 0.0
    %2987 = vmatprep.subr.mxu0 0.0
    %2988 = vmatpush1.msra.mxu0 0.0
    %2989 = vmatprep.subr.mxu0 0.0
    %2990 = vmatpush1.msra.mxu0 0.0
    %2991 = vmatprep.subr.mxu0 0.0
    %2992 = vmatpush1.msra.mxu0 0.0
    %2993 = vmatprep.subr.mxu0 0.0
    %2994 = vmatpush1.msra.mxu0 0.0
    %2995 = vmatprep.subr.mxu0 0.0
    %2996 = vmatpush1.msra.mxu0 0.0
    %2997 = vmatprep.subr.mxu0 0.0
    %2998 = vmatpush1.msra.mxu0 0.0
    %2999 = vmatprep.subr.mxu0 0.0
    %3000 = vmatpush1.msra.mxu0 0.0
    %3001 = vmatprep.subr.mxu0 0.0
    %3002 = vmatpush1.msra.mxu0 0.0
    %3003 = vmatprep.subr.mxu0 0.0
    %3004 = vmatpush1.msra.mxu0 0.0
    %3005 = vmatprep.subr.mxu0 0.0
    %3006 = vmatpush1.msra.mxu0 0.0
    %3007 = vmatprep.subr.mxu0 0.0
    %3008 = vmatpush1.msra.mxu0 0.0
    %3009 = vmatprep.subr.mxu0 0.0
    %3010 = vmatpush1.msra.mxu0 0.0
    %3011 = vmatprep.subr.mxu0 0.0
    %3012 = vmatpush1.msra.mxu0 0.0
    %3013 = vmatprep.subr.mxu0 0.0
    %3014 = vmatpush1.msra.mxu0 0.0
    %3015 = vmatprep.subr.mxu0 0.0
    %3016 = vmatpush1.msra.mxu0 0.0
    %3017 = vmatprep.subr.mxu0 0.0
    %3018 = vmatpush1.msra.mxu0 0.0
    %3019 = vmatprep.subr.mxu0 0.0
    %3020 = vmatpush1.msra.mxu0 0.0
    %3021 = vmatprep.subr.mxu0 0.0
    %3022 = vmatpush1.msra.mxu0 0.0
    %3023 = vmatprep.subr.mxu0 0.0
    %3024 = vmatpush1.msra.mxu0 0.0
    %3025 = vmatprep.subr.mxu0 0.0
    %3026 = vmatpush1.msra.mxu0 0.0
    %3027 = vmatprep.subr.mxu0 0.0
    %3028 = vmatpush1.msra.mxu0 0.0
    %3029 = vmatprep.mubr.f32.mxu0 0.0
    %3030 = vmatmul.mubr.f32.gmra.mrb[0].mxu0 %v2963
    %v3031 = vpop.f32.mrb[0].mxu0
    %v3032 = vadd.f32 0.0, %v3031
    %v3033 = vpop.f32.mrb[0].mxu0
    %3034 = vdwg.mxu0
    %v3036 = vsel %vm815, %v2961, 0
    %3038 = vmatprep.subr.mxu0 0.0
    %3039 = vmatpush1.msra.mxu0 %v2781
    %3040 = vmatprep.subr.mxu0 0.0
    %3041 = vmatpush1.msra.mxu0 0.0
    %3042 = vmatprep.subr.mxu0 0.0
    %3043 = vmatpush1.msra.mxu0 0.0
    %3044 = vmatprep.subr.mxu0 0.0
    %3045 = vmatpush1.msra.mxu0 0.0
    %3046 = vmatprep.subr.mxu0 0.0
    %3047 = vmatpush1.msra.mxu0 0.0
    %3048 = vmatprep.subr.mxu0 0.0
    %3049 = vmatpush1.msra.mxu0 0.0
    %3050 = vmatprep.subr.mxu0 0.0
    %3051 = vmatpush1.msra.mxu0 0.0
    %3052 = vmatprep.subr.mxu0 0.0
    %3053 = vmatpush1.msra.mxu0 0.0
    %3054 = vmatprep.subr.mxu0 0.0
    %3055 = vmatpush1.msra.mxu0 0.0
    %3056 = vmatprep.subr.mxu0 0.0
    %3057 = vmatpush1.msra.mxu0 0.0
    %3058 = vmatprep.subr.mxu0 0.0
    %3059 = vmatpush1.msra.mxu0 0.0
    %3060 = vmatprep.subr.mxu0 0.0
    %3061 = vmatpush1.msra.mxu0 0.0
    %3062 = vmatprep.subr.mxu0 0.0
    %3063 = vmatpush1.msra.mxu0 0.0
    %3064 = vmatprep.subr.mxu0 0.0
    %3065 = vmatpush1.msra.mxu0 0.0
    %3066 = vmatprep.subr.mxu0 0.0
    %3067 = vmatpush1.msra.mxu0 0.0
    %3068 = vmatprep.subr.mxu0 0.0
    %3069 = vmatpush1.msra.mxu0 0.0
    %3070 = vmatprep.subr.mxu0 0.0
    %3071 = vmatpush1.msra.mxu0 0.0
    %3072 = vmatprep.subr.mxu0 0.0
    %3073 = vmatpush1.msra.mxu0 0.0
    %3074 = vmatprep.subr.mxu0 0.0
    %3075 = vmatpush1.msra.mxu0 0.0
    %3076 = vmatprep.subr.mxu0 0.0
    %3077 = vmatpush1.msra.mxu0 0.0
    %3078 = vmatprep.subr.mxu0 0.0
    %3079 = vmatpush1.msra.mxu0 0.0
    %3080 = vmatprep.subr.mxu0 0.0
    %3081 = vmatpush1.msra.mxu0 0.0
    %3082 = vmatprep.subr.mxu0 0.0
    %3083 = vmatpush1.msra.mxu0 0.0
    %3084 = vmatprep.subr.mxu0 0.0
    %3085 = vmatpush1.msra.mxu0 0.0
    %3086 = vmatprep.subr.mxu0 0.0
    %3087 = vmatpush1.msra.mxu0 0.0
    %3088 = vmatprep.subr.mxu0 0.0
    %3089 = vmatpush1.msra.mxu0 0.0
    %3090 = vmatprep.subr.mxu0 0.0
    %3091 = vmatpush1.msra.mxu0 0.0
    %3092 = vmatprep.subr.mxu0 0.0
    %3093 = vmatpush1.msra.mxu0 0.0
    %3094 = vmatprep.subr.mxu0 0.0
    %3095 = vmatpush1.msra.mxu0 0.0
    %3096 = vmatprep.subr.mxu0 0.0
    %3097 = vmatpush1.msra.mxu0 0.0
    %3098 = vmatprep.subr.mxu0 0.0
    %3099 = vmatpush1.msra.mxu0 0.0
    %3100 = vmatprep.subr.mxu0 0.0
    %3101 = vmatpush1.msra.mxu0 0.0
    %3102 = vmatprep.mubr.f32.mxu0 0.0
    %3103 = vmatmul.mubr.f32.gmra.mrb[0].mxu0 %v3036
    %v3104 = vpop.f32.mrb[0].mxu0
    %v3105 = vadd.f32 0.0, %v3104
    %v3106 = vpop.f32.mrb[0].mxu0
    %3107 = vdwg.mxu0
    %3110 = vrot.lane.b32.xlu0 %v3032, 16
    %v3111 = vpop.permute.xlu0 %3110
    %3112 = vrot.lane.b32.xlu0 %v3105, 16
    %v3113 = vpop.permute.xlu0 %3112
    %v3116 = vsel %vm658, %v2456, %v3111
    %v3117 = vsel %vm658, %v2529, %v3113
    %v3118 = vld [vmem:[#allocation8 + $0x250] sm:$0xff]
    %v3119 = vld [vmem:[#allocation8 + $0x258] sm:$0xff]
    %v3120 = vld [vmem:[#allocation8 + $0x260] sm:$0xff]
    %v3121 = vld [vmem:[#allocation8 + $0x268] sm:$0xff]
    %v3123 = vsel %vm360, %v3116, 0
    %v3126 = vsel %vm360, %v3117, 0
    %3128 = vmatprep.subr.mxu0 0.0
    %3129 = vmatpush1.msra.mxu0 %v3118
    %3130 = vmatprep.subr.mxu0 0.0
    %3131 = vmatpush1.msra.mxu0 %v3119
    %3132 = vmatprep.subr.mxu0 0.0
    %3133 = vmatpush1.msra.mxu0 %v3120
    %3134 = vmatprep.subr.mxu0 0.0
    %3135 = vmatpush1.msra.mxu0 %v3121
    %3136 = vmatprep.subr.mxu0 0.0
    %3137 = vmatpush1.msra.mxu0 0.0
    %3138 = vmatprep.subr.mxu0 0.0
    %3139 = vmatpush1.msra.mxu0 0.0
    %3140 = vmatprep.subr.mxu0 0.0
    %3141 = vmatpush1.msra.mxu0 0.0
    %3142 = vmatprep.subr.mxu0 0.0
    %3143 = vmatpush1.msra.mxu0 0.0
    %3144 = vmatprep.subr.mxu0 0.0
    %3145 = vmatpush1.msra.mxu0 0.0
    %3146 = vmatprep.subr.mxu0 0.0
    %3147 = vmatpush1.msra.mxu0 0.0
    %3148 = vmatprep.subr.mxu0 0.0
    %3149 = vmatpush1.msra.mxu0 0.0
    %3150 = vmatprep.subr.mxu0 0.0
    %3151 = vmatpush1.msra.mxu0 0.0
    %3152 = vmatprep.subr.mxu0 0.0
    %3153 = vmatpush1.msra.mxu0 0.0
    %3154 = vmatprep.subr.mxu0 0.0
    %3155 = vmatpush1.msra.mxu0 0.0
    %3156 = vmatprep.subr.mxu0 0.0
    %3157 = vmatpush1.msra.mxu0 0.0
    %3158 = vmatprep.subr.mxu0 0.0
    %3159 = vmatpush1.msra.mxu0 0.0
    %3160 = vmatprep.subr.mxu0 0.0
    %3161 = vmatpush1.msra.mxu0 0.0
    %3162 = vmatprep.subr.mxu0 0.0
    %3163 = vmatpush1.msra.mxu0 0.0
    %3164 = vmatprep.subr.mxu0 0.0
    %3165 = vmatpush1.msra.mxu0 0.0
    %3166 = vmatprep.subr.mxu0 0.0
    %3167 = vmatpush1.msra.mxu0 0.0
    %3168 = vmatprep.subr.mxu0 0.0
    %3169 = vmatpush1.msra.mxu0 0.0
    %3170 = vmatprep.subr.mxu0 0.0
    %3171 = vmatpush1.msra.mxu0 0.0
    %3172 = vmatprep.subr.mxu0 0.0
    %3173 = vmatpush1.msra.mxu0 0.0
    %3174 = vmatprep.subr.mxu0 0.0
    %3175 = vmatpush1.msra.mxu0 0.0
    %3176 = vmatprep.subr.mxu0 0.0
    %3177 = vmatpush1.msra.mxu0 0.0
    %3178 = vmatprep.subr.mxu0 0.0
    %3179 = vmatpush1.msra.mxu0 0.0
    %3180 = vmatprep.subr.mxu0 0.0
    %3181 = vmatpush1.msra.mxu0 0.0
    %3182 = vmatprep.subr.mxu0 0.0
    %3183 = vmatpush1.msra.mxu0 0.0
    %3184 = vmatprep.subr.mxu0 0.0
    %3185 = vmatpush1.msra.mxu0 0.0
    %3186 = vmatprep.subr.mxu0 0.0
    %3187 = vmatpush1.msra.mxu0 0.0
    %3188 = vmatprep.subr.mxu0 0.0
    %3189 = vmatpush1.msra.mxu0 0.0
    %3190 = vmatprep.subr.mxu0 0.0
    %3191 = vmatpush1.msra.mxu0 0.0
    %3192 = vmatprep.mubr.f32.mxu0 0.0
    %3193 = vmatmul.mubr.f32.gmra.mrb[0].mxu0 %v3123
    %v3194 = vpop.f32.mrb[0].mxu0
    %v3195 = vadd.f32 0.0, %v3194
    %v3196 = vpop.f32.mrb[0].mxu0
    %3197 = vmatprep.mubr.f32.mxu0 0.0
    %3198 = vmatmul.mubr.f32.gmra.mrb[0].mxu0 %v3126
    %v3199 = vpop.f32.mrb[0].mxu0
    %v3200 = vadd.f32 0.0, %v3199
    %v3201 = vpop.f32.mrb[0].mxu0
    %3202 = vdwg.mxu0
    %v3203 = vadd.f32 %v1908, %v3195
    %v3204 = vadd.f32 %v1909, %v3200
    %v3205 = vld [vmem:[#allocation8 + $0x314] sm:$0x1]
    %v3206 = vlaneseq
    %v3207 = vshrl.u32 %v3206, 7
    %v3208 = vsub.s32 0, %v3207
    %v3209 = vrot.slane %v3205, %v3208
    %v3210 = vadd.f32 %v3203, %v3209
    %v3211 = vadd.f32 %v3204, %v3209
    %v3212 = vld [vmem:[#allocation8 + $0x312] sm:$0x1]
    %v3213 = vld [vmem:[#allocation8 + $0x313] sm:$0x1]
    %v3214 = vsel %vm360, %v3210, 0.0
    %3215 = vadd.xlane.f32.xlu0 %v3214
    %v3216 = vpop.xlane.xlu0 %3215
    %v3217 = vsel %vm360, %v3211, 0.0
    %3218 = vadd.xlane.f32.xlu0 %v3217
    %v3219 = vpop.xlane.xlu0 %3218
    %v3220 = vmul.f32 %v3216, %v367
    %v3221 = vmul.f32 %v3219, %v367
    %v3222 = vsub.f32 %v3210, %v3220
    %v3223 = vsub.f32 %v3211, %v3221
    %v3224 = vmul.f32 %v3222, %v3222
    %v3225 = vmul.f32 %v3223, %v3223
    %v3226 = vsel %vm360, %v3224, 0.0
    %3227 = vadd.xlane.f32.xlu0 %v3226
    %v3228 = vpop.xlane.xlu0 %3227
    %v3229 = vsel %vm360, %v3225, 0.0
    %3230 = vadd.xlane.f32.xlu0 %v3229
    %v3231 = vpop.xlane.xlu0 %3230
    %v3232 = vmul.f32 %v3228, %v367
    %v3233 = vmul.f32 %v3231, %v367
    %v3234 = vadd.f32 %v3232, 1e-05
    %v3235 = vadd.f32 %v3233, 1e-05
    %v3236 = vrsqrt.pop %v3234
    %v3237 = vrsqrt.pop %v3235
    %v3238 = vmul.f32 %v3222, %v3236
    %v3239 = vmul.f32 %v3223, %v3237
    %v3240 = vlaneseq
    %v3241 = vshrl.u32 %v3240, 7
    %v3242 = vsub.s32 0, %v3241
    %v3243 = vrot.slane %v3212, %v3242
    %v3244 = vmul.f32 %v3238, %v3243
    %v3245 = vmul.f32 %v3239, %v3243
    %v3246 = vlaneseq
    %v3247 = vshrl.u32 %v3246, 7
    %v3248 = vsub.s32 0, %v3247
    %v3249 = vrot.slane %v3213, %v3248
    %v3250 = vadd.f32 %v3244, %v3249
    %v3251 = vadd.f32 %v3245, %v3249
    %v3252 = vld [vmem:[#allocation8 + $0x270] sm:$0xff]
    %v3253 = vld [vmem:[#allocation8 + $0x278] sm:$0xff]
    %v3254 = vld [vmem:[#allocation8 + $0x280] sm:$0xff]
    %v3255 = vld [vmem:[#allocation8 + $0x288] sm:$0xff]
    %v3256 = vld [vmem:[#allocation8 + $0x290] sm:$0xff]
    %v3257 = vld [vmem:[#allocation8 + $0x298] sm:$0xff]
    %v3258 = vld [vmem:[#allocation8 + $0x2a0] sm:$0xff]
    %v3259 = vld [vmem:[#allocation8 + $0x2a8] sm:$0xff]
    %v3260 = vld [vmem:[#allocation8 + $0x2b0] sm:$0xff]
    %v3261 = vld [vmem:[#allocation8 + $0x2b8] sm:$0xff]
    %v3262 = vld [vmem:[#allocation8 + $0x2c0] sm:$0xff]
    %v3263 = vld [vmem:[#allocation8 + $0x2c8] sm:$0xff]
    %v3264 = vld [vmem:[#allocation8 + $0x2d0] sm:$0xff]
    %v3265 = vld [vmem:[#allocation8 + $0x2d8] sm:$0xff]
    %v3266 = vld [vmem:[#allocation8 + $0x2e0] sm:$0xff]
    %v3267 = vld [vmem:[#allocation8 + $0x2e8] sm:$0xff]
    %v3268 = vld [vmem:[#allocation8 + $0x2f0] sm:$0xff]
    %v3269 = vld [vmem:[#allocation8 + $0x2f8] sm:$0xff]
    %v3270 = vld [vmem:[#allocation8 + $0x300] sm:$0xff]
    %v3271 = vld [vmem:[#allocation8 + $0x308] sm:$0xff]
    %v3272 = vld [vmem:[#allocation8 + $0x316] sm:$0x1]
    %v3273 = vlaneseq
    %v3274 = vshrl.u32 %v3273, 7
    %v3275 = vsub.s32 0, %v3274
    %v3276 = vrot.slane %v3272, %v3275
    %v3278 = vsel %vm360, %v3250, 0
    %v3281 = vsel %vm360, %v3251, 0
    %3283 = vmatprep.subr.mxu0 0.0
    %3284 = vmatpush1.msra.mxu0 %v3252
    %3285 = vmatprep.subr.mxu0 0.0
    %3286 = vmatpush1.msra.mxu0 %v3253
    %3287 = vmatprep.subr.mxu0 0.0
    %3288 = vmatpush1.msra.mxu0 %v3254
    %3289 = vmatprep.subr.mxu0 0.0
    %3290 = vmatpush1.msra.mxu0 %v3255
    %3291 = vmatprep.subr.mxu0 0.0
    %3292 = vmatpush1.msra.mxu0 0.0
    %3293 = vmatprep.subr.mxu0 0.0
    %3294 = vmatpush1.msra.mxu0 0.0
    %3295 = vmatprep.subr.mxu0 0.0
    %3296 = vmatpush1.msra.mxu0 0.0
    %3297 = vmatprep.subr.mxu0 0.0
    %3298 = vmatpush1.msra.mxu0 0.0
    %3299 = vmatprep.subr.mxu0 0.0
    %3300 = vmatpush1.msra.mxu0 0.0
    %3301 = vmatprep.subr.mxu0 0.0
    %3302 = vmatpush1.msra.mxu0 0.0
    %3303 = vmatprep.subr.mxu0 0.0
    %3304 = vmatpush1.msra.mxu0 0.0
    %3305 = vmatprep.subr.mxu0 0.0
    %3306 = vmatpush1.msra.mxu0 0.0
    %3307 = vmatprep.subr.mxu0 0.0
    %3308 = vmatpush1.msra.mxu0 0.0
    %3309 = vmatprep.subr.mxu0 0.0
    %3310 = vmatpush1.msra.mxu0 0.0
    %3311 = vmatprep.subr.mxu0 0.0
    %3312 = vmatpush1.msra.mxu0 0.0
    %3313 = vmatprep.subr.mxu0 0.0
    %3314 = vmatpush1.msra.mxu0 0.0
    %3315 = vmatprep.subr.mxu0 0.0
    %3316 = vmatpush1.msra.mxu0 0.0
    %3317 = vmatprep.subr.mxu0 0.0
    %3318 = vmatpush1.msra.mxu0 0.0
    %3319 = vmatprep.subr.mxu0 0.0
    %3320 = vmatpush1.msra.mxu0 0.0
    %3321 = vmatprep.subr.mxu0 0.0
    %3322 = vmatpush1.msra.mxu0 0.0
    %3323 = vmatprep.subr.mxu0 0.0
    %3324 = vmatpush1.msra.mxu0 0.0
    %3325 = vmatprep.subr.mxu0 0.0
    %3326 = vmatpush1.msra.mxu0 0.0
    %3327 = vmatprep.subr.mxu0 0.0
    %3328 = vmatpush1.msra.mxu0 0.0
    %3329 = vmatprep.subr.mxu0 0.0
    %3330 = vmatpush1.msra.mxu0 0.0
    %3331 = vmatprep.subr.mxu0 0.0
    %3332 = vmatpush1.msra.mxu0 0.0
    %3333 = vmatprep.subr.mxu0 0.0
    %3334 = vmatpush1.msra.mxu0 0.0
    %3335 = vmatprep.subr.mxu0 0.0
    %3336 = vmatpush1.msra.mxu0 0.0
    %3337 = vmatprep.subr.mxu0 0.0
    %3338 = vmatpush1.msra.mxu0 0.0
    %3339 = vmatprep.subr.mxu0 0.0
    %3340 = vmatpush1.msra.mxu0 0.0
    %3341 = vmatprep.subr.mxu0 0.0
    %3342 = vmatpush1.msra.mxu0 0.0
    %3343 = vmatprep.subr.mxu0 0.0
    %3344 = vmatpush1.msra.mxu0 0.0
    %3345 = vmatprep.subr.mxu0 0.0
    %3346 = vmatpush1.msra.mxu0 0.0
    %3347 = vmatprep.mubr.f32.mxu0 0.0
    %3348 = vmatmul.mubr.f32.gmra.mrb[0].mxu0 %v3278
    %v3349 = vpop.f32.mrb[0].mxu0
    %v3350 = vadd.f32 %v3276, %v3349
    %v3351 = vpop.f32.mrb[0].mxu0
    %3352 = vmatprep.mubr.f32.mxu0 0.0
    %3353 = vmatmul.mubr.f32.gmra.mrb[0].mxu0 %v3281
    %v3354 = vpop.f32.mrb[0].mxu0
    %v3355 = vadd.f32 %v3276, %v3354
    %v3356 = vpop.f32.mrb[0].mxu0
    %3357 = vdwg.mxu0
    %v3358 = vmul.f32 %v3350, %v3350
    %v3359 = vmul.f32 %v3355, %v3355
    %v3360 = vmul.f32 %v3350, %v3358
    %v3361 = vmul.f32 %v3355, %v3359
    %v3362 = vmul.f32 %v3360, 0.044715
    %v3363 = vmul.f32 %v3361, 0.044715
    %v3364 = vadd.f32 %v3350, %v3362
    %v3365 = vadd.f32 %v3355, %v3363
    %v3366 = vmul.f32 %v3364, 0.7978846
    %v3367 = vmul.f32 %v3365, 0.7978846
    %v3368 = vtanh.pop %v3366
    %v3369 = vtanh.pop %v3367
    %v3370 = vadd.f32 %v3368, 1.0
    %v3371 = vadd.f32 %v3369, 1.0
    %v3372 = vmul.f32 %v3370, 0.5
    %v3373 = vmul.f32 %v3371, 0.5
    %v3374 = vmul.f32 %v3350, %v3372
    %v3375 = vmul.f32 %v3355, %v3373
    %v3376 = vld [vmem:[#allocation8 + $0x315] sm:$0x1]
    %v3377 = vlaneseq
    %v3378 = vshrl.u32 %v3377, 7
    %v3379 = vsub.s32 0, %v3378
    %v3380 = vrot.slane %v3376, %v3379
    %3381 = vmatprep.subr.mxu0 0.0
    %3382 = vmatpush1.msra.mxu0 %v3256
    %3383 = vmatprep.subr.mxu0 0.0
    %3384 = vmatpush1.msra.mxu0 %v3257
    %3385 = vmatprep.subr.mxu0 0.0
    %3386 = vmatpush1.msra.mxu0 %v3258
    %3387 = vmatprep.subr.mxu0 0.0
    %3388 = vmatpush1.msra.mxu0 %v3259
    %3389 = vmatprep.subr.mxu0 0.0
    %3390 = vmatpush1.msra.mxu0 %v3260
    %3391 = vmatprep.subr.mxu0 0.0
    %3392 = vmatpush1.msra.mxu0 %v3261
    %3393 = vmatprep.subr.mxu0 0.0
    %3394 = vmatpush1.msra.mxu0 %v3262
    %3395 = vmatprep.subr.mxu0 0.0
    %3396 = vmatpush1.msra.mxu0 %v3263
    %3397 = vmatprep.subr.mxu0 0.0
    %3398 = vmatpush1.msra.mxu0 %v3264
    %3399 = vmatprep.subr.mxu0 0.0
    %3400 = vmatpush1.msra.mxu0 %v3265
    %3401 = vmatprep.subr.mxu0 0.0
    %3402 = vmatpush1.msra.mxu0 %v3266
    %3403 = vmatprep.subr.mxu0 0.0
    %3404 = vmatpush1.msra.mxu0 %v3267
    %3405 = vmatprep.subr.mxu0 0.0
    %3406 = vmatpush1.msra.mxu0 %v3268
    %3407 = vmatprep.subr.mxu0 0.0
    %3408 = vmatpush1.msra.mxu0 %v3269
    %3409 = vmatprep.subr.mxu0 0.0
    %3410 = vmatpush1.msra.mxu0 %v3270
    %3411 = vmatprep.subr.mxu0 0.0
    %3412 = vmatpush1.msra.mxu0 %v3271
    %3413 = vmatprep.subr.mxu0 0.0
    %3414 = vmatpush1.msra.mxu0 0.0
    %3415 = vmatprep.subr.mxu0 0.0
    %3416 = vmatpush1.msra.mxu0 0.0
    %3417 = vmatprep.subr.mxu0 0.0
    %3418 = vmatpush1.msra.mxu0 0.0
    %3419 = vmatprep.subr.mxu0 0.0
    %3420 = vmatpush1.msra.mxu0 0.0
    %3421 = vmatprep.subr.mxu0 0.0
    %3422 = vmatpush1.msra.mxu0 0.0
    %3423 = vmatprep.subr.mxu0 0.0
    %3424 = vmatpush1.msra.mxu0 0.0
    %3425 = vmatprep.subr.mxu0 0.0
    %3426 = vmatpush1.msra.mxu0 0.0
    %3427 = vmatprep.subr.mxu0 0.0
    %3428 = vmatpush1.msra.mxu0 0.0
    %3429 = vmatprep.subr.mxu0 0.0
    %3430 = vmatpush1.msra.mxu0 0.0
    %3431 = vmatprep.subr.mxu0 0.0
    %3432 = vmatpush1.msra.mxu0 0.0
    %3433 = vmatprep.subr.mxu0 0.0
    %3434 = vmatpush1.msra.mxu0 0.0
    %3435 = vmatprep.subr.mxu0 0.0
    %3436 = vmatpush1.msra.mxu0 0.0
    %3437 = vmatprep.subr.mxu0 0.0
    %3438 = vmatpush1.msra.mxu0 0.0
    %3439 = vmatprep.subr.mxu0 0.0
    %3440 = vmatpush1.msra.mxu0 0.0
    %3441 = vmatprep.subr.mxu0 0.0
    %3442 = vmatpush1.msra.mxu0 0.0
    %3443 = vmatprep.subr.mxu0 0.0
    %3444 = vmatpush1.msra.mxu0 0.0
    %3445 = vmatprep.mubr.f32.mxu0 0.0
    %3446 = vmatmul.mubr.f32.gmra.mrb[0].mxu0 %v3374
    %v3447 = vpop.f32.mrb[0].mxu0
    %v3448 = vadd.f32 %v3380, %v3447
    %v3449 = vpop.f32.mrb[0].mxu0
    %3450 = vmatprep.mubr.f32.mxu0 0.0
    %3451 = vmatmul.mubr.f32.gmra.mrb[0].mxu0 %v3375
    %v3452 = vpop.f32.mrb[0].mxu0
    %v3453 = vadd.f32 %v3380, %v3452
    %v3454 = vpop.f32.mrb[0].mxu0
    %3455 = vdwg.mxu0
    %v3456 = vadd.f32 %v3210, %v3448
    %v3457 = vadd.f32 %v3211, %v3453
    %3458 = vst.msk [vmem:[#allocation2] sm:$0xff] %vm360, %v3456
    %3459 = vst.msk [vmem:[#allocation2 + $0x8] sm:$0xff] %vm360, %v3457
    %s3460 = sld [smem:[#allocation4]]
    %s3461 = scalar_lea.vmem [#allocation2], %s3460
    %v3462 = vld [vmem:[%s3461] sm:$0x1]
    %vm3463 = vcmask 253952
    %3464 = vst.msk [vmem:[#allocation3] sm:$0x1] %vm3463, %v3462
    %s3465 = sld [smem:[#allocation4 + $0x1]]
    %s3466 = scalar_lea.vmem [#allocation2], %s3465
    %v3467 = vld [vmem:[%s3466] sm:$0x1]
    %3468 = vst.msk [vmem:[#allocation3 + $0x1] sm:$0x1] %vm3463, %v3467
    %v3469 = vld [vmem:[#allocation3] sm:$0x3]
    %v3470 = vld [vmem:[#allocation8 + $0x340] sm:$0x1]
    %v3471 = vld [vmem:[#allocation8 + $0x341] sm:$0x1]
    %vm3472 = vcmask 254976
    %v3473 = vsel %vm3472, %v3469, 0.0
    %3474 = vadd.xlane.f32.xlu0 %v3473
    %v3475 = vpop.xlane.xlu0 %3474
    %v3476 = vmul.f32 %v3475, %v367
    %v3477 = vsub.f32 %v3469, %v3476
    %v3478 = vmul.f32 %v3477, %v3477
    %v3479 = vsel %vm3472, %v3478, 0.0
    %3480 = vadd.xlane.f32.xlu0 %v3479
    %v3481 = vpop.xlane.xlu0 %3480
    %v3482 = vmul.f32 %v3481, %v367
    %v3483 = vadd.f32 %v3482, 1e-05
    %v3484 = vrsqrt.pop %v3483
    %v3485 = vmul.f32 %v3477, %v3484
    %v3486 = vlaneseq
    %v3487 = vshrl.u32 %v3486, 7
    %v3488 = vsub.s32 0, %v3487
    %v3489 = vrot.slane %v3470, %v3488
    %v3490 = vmul.f32 %v3485, %v3489
    %v3491 = vlaneseq
    %v3492 = vshrl.u32 %v3491, 7
    %v3493 = vsub.s32 0, %v3492
    %v3494 = vrot.slane %v3471, %v3493
    %v3495 = vadd.f32 %v3490, %v3494
    %v3496 = vld [vmem:[#allocation8 + $0x320] sm:$0xff]
    %v3497 = vld [vmem:[#allocation8 + $0x328] sm:$0xff]
    %v3498 = vld [vmem:[#allocation8 + $0x330] sm:$0xff]
    %v3499 = vld [vmem:[#allocation8 + $0x338] sm:$0xff]
    %v3501 = vsel %vm360, %v3495, 0
    %3503 = vmatprep.subr.mxu0 0.0
    %3504 = vmatpush1.msra.mxu0 %v3496
    %3505 = vmatprep.subr.mxu0 0.0
    %3506 = vmatpush1.msra.mxu0 %v3497
    %3507 = vmatprep.subr.mxu0 0.0
    %3508 = vmatpush1.msra.mxu0 %v3498
    %3509 = vmatprep.subr.mxu0 0.0
    %3510 = vmatpush1.msra.mxu0 %v3499
    %3511 = vmatprep.subr.mxu0 0.0
    %3512 = vmatpush1.msra.mxu0 0.0
    %3513 = vmatprep.subr.mxu0 0.0
    %3514 = vmatpush1.msra.mxu0 0.0
    %3515 = vmatprep.subr.mxu0 0.0
    %3516 = vmatpush1.msra.mxu0 0.0
    %3517 = vmatprep.subr.mxu0 0.0
    %3518 = vmatpush1.msra.mxu0 0.0
    %3519 = vmatprep.subr.mxu0 0.0
    %3520 = vmatpush1.msra.mxu0 0.0
    %3521 = vmatprep.subr.mxu0 0.0
    %3522 = vmatpush1.msra.mxu0 0.0
    %3523 = vmatprep.subr.mxu0 0.0
    %3524 = vmatpush1.msra.mxu0 0.0
    %3525 = vmatprep.subr.mxu0 0.0
    %3526 = vmatpush1.msra.mxu0 0.0
    %3527 = vmatprep.subr.mxu0 0.0
    %3528 = vmatpush1.msra.mxu0 0.0
    %3529 = vmatprep.subr.mxu0 0.0
    %3530 = vmatpush1.msra.mxu0 0.0
    %3531 = vmatprep.subr.mxu0 0.0
    %3532 = vmatpush1.msra.mxu0 0.0
    %3533 = vmatprep.subr.mxu0 0.0
    %3534 = vmatpush1.msra.mxu0 0.0
    %3535 = vmatprep.subr.mxu0 0.0
    %3536 = vmatpush1.msra.mxu0 0.0
    %3537 = vmatprep.subr.mxu0 0.0
    %3538 = vmatpush1.msra.mxu0 0.0
    %3539 = vmatprep.subr.mxu0 0.0
    %3540 = vmatpush1.msra.mxu0 0.0
    %3541 = vmatprep.subr.mxu0 0.0
    %3542 = vmatpush1.msra.mxu0 0.0
    %3543 = vmatprep.subr.mxu0 0.0
    %3544 = vmatpush1.msra.mxu0 0.0
    %3545 = vmatprep.subr.mxu0 0.0
    %3546 = vmatpush1.msra.mxu0 0.0
    %3547 = vmatprep.subr.mxu0 0.0
    %3548 = vmatpush1.msra.mxu0 0.0
    %3549 = vmatprep.subr.mxu0 0.0
    %3550 = vmatpush1.msra.mxu0 0.0
    %3551 = vmatprep.subr.mxu0 0.0
    %3552 = vmatpush1.msra.mxu0 0.0
    %3553 = vmatprep.subr.mxu0 0.0
    %3554 = vmatpush1.msra.mxu0 0.0
    %3555 = vmatprep.subr.mxu0 0.0
    %3556 = vmatpush1.msra.mxu0 0.0
    %3557 = vmatprep.subr.mxu0 0.0
    %3558 = vmatpush1.msra.mxu0 0.0
    %3559 = vmatprep.subr.mxu0 0.0
    %3560 = vmatpush1.msra.mxu0 0.0
    %3561 = vmatprep.subr.mxu0 0.0
    %3562 = vmatpush1.msra.mxu0 0.0
    %3563 = vmatprep.subr.mxu0 0.0
    %3564 = vmatpush1.msra.mxu0 0.0
    %3565 = vmatprep.subr.mxu0 0.0
    %3566 = vmatpush1.msra.mxu0 0.0
    %3567 = vmatprep.mubr.f32.mxu0 0.0
    %3568 = vmatmul.mubr.f32.gmra.mrb[0].mxu0 %v3501
    %v3569 = vpop.f32.mrb[0].mxu0
    %v3570 = vadd.f32 0.0, %v3569
    %v3571 = vpop.f32.mrb[0].mxu0
    %3572 = vdwg.mxu0
    %vm3573 = vcmask 517120
    %3574 = vst.msk [vmem:[#allocation9] sm:$0x3] %vm3573, %v3570
    // Predicated region
    $region26: #{decoder_retrieval_forward.1} parent=1 // pred_check
      _
    $region27: #{decoder_retrieval_forward.1} parent=1 // pred_check_branch
      %3576 = sbr.rel (0) target = $region29
    $region28: #{decoder_retrieval_forward.1} parent=1 // pred_region
      %s3578 = ssub.s32 32, 32
      %3579 = vsyncadd [#allocation6], %s3578
      %s3581 = sshll.u32 [#allocation9], 4
      %s3582 = int_to_ptr.vmem [resolvable:$true] %s3581
      %3584 = dma.vmem_to_hbm [thread:$0]  %s3582, 32, %s4, [#allocation6]
    $region29: #{decoder_retrieval_forward.1} parent=1 // pred_fallthru
      _
    // Predicated region
    $region30: #{decoder_retrieval_forward.1} parent=1 // pred_check
      _
    $region31: #{decoder_retrieval_forward.1} parent=1 // pred_check_branch
      %3586 = sbr.rel (0) target = $region33
    $region32: #{decoder_retrieval_forward.1} parent=1 // pred_region
      %3587 = dma.done [#allocation6], 32
    $region33: #{decoder_retrieval_forward.1} parent=1 // pred_fallthru
      _
    %3588 = vsyncpa [#allocation5], 1
    %3589 = vsyncpa [#allocation6], 1
    %3590 = vsyncpa [#allocation7], 1

</llo_original>
